<compile_context>
chip_gen: v7x
topology: tpu7x:2x2x1
jax: 0.10.0
libtpu: 0.0.40
codegen_flags: <defaults>
</compile_context>

<pallas_src>
import numpy as np
import jax
import jax.numpy as jnp
from jax.experimental import pallas as pl
from jax.experimental.pallas import tpu as pltpu

H = 32                                    # every embedding Linear outputs 32
TRAFFIC_KEYS = ['x_neighbor', 'x_light', 'x_sign', 'x_crosswalk', 'x_ego']
TRAFFIC_DIMS = {'x_neighbor': 4, 'x_light': 1, 'x_sign': 2, 'x_crosswalk': 1, 'x_ego': 1}
K = len(TRAFFIC_KEYS)
N_MAX = 8                                 # padded object slots per traffic type

# Disjoint feature-lane offsets: each type's raw features occupy their own lanes of
# the fused per-object vector, so the fused embedding weight is block-structured.
FEAT_OFF = {}
_off = 0
for _k in TRAFFIC_KEYS:
    FEAT_OFF[_k] = _off
    _off += TRAFFIC_DIMS[_k]
D_SUM = _off                              # 9 total raw feature lanes
D_PAD = 16                                # padded fused per-object feature width
KN = K * N_MAX                            # fused object rows per time step (40)
KH = K * H                                # fused traffic embedding width (160)
OUT_W = 256                               # lane-dense output slab: 192 feats + 1 score + pad


def _relation_kernel(x_ped_ref, tx_ref, idm_ref, w_emb_ref, b_emb_ref,
                     w_ped_ref, b_ped_ref, w1p_ref, w1t_ref, b1_ref,
                     w2_ref, b2_ref, w3_ref, b3_ref, out_ref):
    """One time-tile of the forward pass.

    x_ped_ref : (Tt, B, 4)            bf16  pedestrian boxes (time-major)
    tx_ref    : (Tt, K*N_MAX, D_PAD)  bf16  fused traffic object features (disjoint lanes)
    idm_ref   : (Tt, B, K*N_MAX)      bf16  object -> batch map, validity folded in
    w_emb_ref : (D_PAD, K*H) bf16, b_emb_ref (K*N_MAX, K*H) f32  fused embedding params
    w_ped/b_ped, w1p/w1t/b1, w2/b2, w3/b3 : ped embedding + classifier params
    out_ref   : (Tt, B, 256) f32   [0:32]=ped, [32:192]=traffic agg, [192]=score
    """
    bf16, f32 = jnp.bfloat16, jnp.float32
    Tt, B, _ = x_ped_ref.shape

    def bcast(w):  # broadcast a resident 2-D weight over the time batch (leading dim)
        return jnp.broadcast_to(w, (Tt,) + w.shape)

    # ---- fused traffic embedding: all K Linear(d_k, 32) in one batched matmul.
    #      Cross-type blocks are exactly 0 by weight/bias structure (no mask needed).
    emb = jnp.einsum('tmd,tdh->tmh', tx_ref[...], bcast(w_emb_ref[...]),
                     preferred_element_type=f32)
    emb = jnp.maximum(emb + b_emb_ref[...], 0.0)                         # (Tt, KN, KH)

    # ---- object -> batch aggregation: (B, K*N) @ (K*N, K*H), batched over t.
    #      Validity and row padding are 0-weights in idm, so they drop out here.
    agg = jnp.einsum('tbm,tmc->tbc', idm_ref[...], emb.astype(bf16),
                     preferred_element_type=f32)                         # (Tt, B, KH)

    # ---- target pedestrian box embedding ----
    ped = jnp.einsum('tbd,tdh->tbh', x_ped_ref[...], bcast(w_ped_ref[...]),
                     preferred_element_type=f32)
    ped = jnp.maximum(ped + b_ped_ref[...], 0.0)                         # (Tt, B, 32)

    # ---- classifier (Dropout = identity in eval); h1 as partial sums, no concat ----
    h1 = (jnp.einsum('tbh,thd->tbd', ped.astype(bf16), bcast(w1p_ref[...]),
                     preferred_element_type=f32)
          + jnp.einsum('tbc,tcd->tbd', agg.astype(bf16), bcast(w1t_ref[...]),
                       preferred_element_type=f32)
          + b1_ref[...])
    h1 = jnp.maximum(h1, 0.0)
    h2 = jnp.einsum('tbh,thd->tbd', h1.astype(bf16), bcast(w2_ref[...]),
                    preferred_element_type=f32) + b2_ref[...]
    h2 = jnp.maximum(h2, 0.0)
    # final 32 -> 1 projection on the VPU (avoid a 1-lane MXU pass)
    score = jnp.sum(h2 * w3_ref[...], axis=-1, keepdims=True) + b3_ref[...]

    # lane-dense output slab; every lane written (score replicated into the pad lanes)
    out_ref[:, :, 0:H] = ped
    out_ref[:, :, H:H + KH] = agg
    out_ref[:, :, H + KH:] = jnp.broadcast_to(score, (Tt, B, OUT_W - H - KH))


def relation_forward(x_ped, packed, params, t_tile=None):
    """x_ped: (B, T, 4) f32.  packed: dense/padded traffic tensors (pack_dense).
    Returns (score (B, T, 1), all_traffic_features (B, T, 32*(K+1)))."""
    B, T, _ = x_ped.shape
    if t_tile is None:
        t_tile = T                         # toy size: one tile; pick 64-128 at scale
    assert T % t_tile == 0
    bf16, f32 = jnp.bfloat16, jnp.float32

    w1 = params['w1']
    args = (
        jnp.transpose(x_ped, (1, 0, 2)).astype(bf16),   # (T, B, 4) time-major
        packed['tx'].astype(bf16),                      # (T, KN, D_PAD)
        packed['idm'].astype(bf16),                     # (T, B, KN)
        packed['w_emb'].astype(bf16),                   # (D_PAD, KH)
        packed['b_emb'].astype(f32),                    # (KN, KH)
        params['w_ped'].astype(bf16), params['b_ped'].astype(f32),
        w1[:H, :].astype(bf16), w1[H:, :].astype(bf16), params['b1'].astype(f32),
        params['w2'].astype(bf16), params['b2'].astype(f32),
        params['w3'].reshape(1, H).astype(f32), params['b3'].reshape(1, 1).astype(f32),
    )

    def row_spec(shape):     # time-tiled 3-D arrays
        return pl.BlockSpec((t_tile,) + tuple(shape[1:]), lambda i: (i, 0, 0))

    def rep_spec(shape):     # grid-invariant tensors (weights), kept resident
        nd = len(shape)
        return pl.BlockSpec(tuple(shape), lambda i, _nd=nd: (0,) * _nd)

    in_specs = [row_spec(args[0].shape), row_spec(args[1].shape), row_spec(args[2].shape)] \
               + [rep_spec(a.shape) for a in args[3:]]

    out = pl.pallas_call(
        _relation_kernel,
        out_shape=jax.ShapeDtypeStruct((T, B, OUT_W), jnp.float32),
        grid_spec=pltpu.PrefetchScalarGridSpec(
            num_scalar_prefetch=0,
            grid=(T // t_tile,),
            in_specs=in_specs,
            out_specs=pl.BlockSpec((t_tile, B, OUT_W), lambda i: (i, 0, 0))),
        compiler_params=pltpu.CompilerParams(
            dimension_semantics=("parallel",),
            vmem_limit_bytes=32 * 1024 * 1024),
    )(*args)

    feats = jnp.transpose(out[:, :, :H + KH], (1, 0, 2))               # (B, T, 192)
    score = jnp.transpose(out[:, :, H + KH:H + KH + 1], (1, 0, 2))     # (B, T, 1)
    return score, feats


# ----------------------------- host-side glue -----------------------------

def _init_linear(key, din, dout):
    kw, kb = jax.random.split(key)
    bound = 1.0 / float(np.sqrt(din))
    w = jax.random.uniform(kw, (din, dout), jnp.float32, -bound, bound)
    b = jax.random.uniform(kb, (1, dout), jnp.float32, -bound, bound)
    return w, b


def make_params(key):
    keys = jax.random.split(key, 4 + len(TRAFFIC_KEYS))
    params = {}
    params['w_ped'], params['b_ped'] = _init_linear(keys[0], 4, H)
    params['traffic'] = {}
    for i, tk in enumerate(TRAFFIC_KEYS):
        params['traffic'][tk] = _init_linear(keys[1 + i], TRAFFIC_DIMS[tk], H)
    cls_in = H * (len(TRAFFIC_KEYS) + 1)
    params['w1'], params['b1'] = _init_linear(keys[-3], cls_in, H)
    params['w2'], params['b2'] = _init_linear(keys[-2], H, H)
    params['w3'], params['b3'] = _init_linear(keys[-1], H, 1)
    return params


def make_inputs(key, B, T):
    """Ragged traffic inputs matching the PyTorch data format (lists per batch elem)."""
    counts = {'x_neighbor': [2, 1], 'x_light': [1, 0], 'x_sign': [0, 2], 'x_crosswalk': [1, 1]}
    key, kped, kego = jax.random.split(key, 3)
    x_ped = jax.random.normal(kped, (B, T, 4), jnp.float32)
    x_traffics = {}
    for tk in TRAFFIC_KEYS:
        if tk == 'x_ego':
            # ego is a batch-level Tensor input in the original pipeline
            x_traffics['x_ego'] = jax.random.normal(kego, (B, T, TRAFFIC_DIMS['x_ego']), jnp.float32)
            continue
        d = TRAFFIC_DIMS[tk]
        feats_list, cls_list = [], []
        for c in counts[tk]:
            key, k1, k2 = jax.random.split(key, 3)
            feats_list.append(jax.random.normal(k1, (c, T, d), jnp.float32))
            cls_list.append(jnp.where(jax.random.uniform(k2, (c, T)) < 0.3, -1.0, 1.0))
        x_traffics[tk] = feats_list
        x_traffics['cls_' + tk.split('_')[-1]] = cls_list
    return x_ped, x_traffics


def pack_dense(x_traffics, params, B, T):
    """Pack ragged per-batch lists into the dense per-time-step object table consumed
    by the kernel (numpy glue, runs once on host).  Each traffic type gets disjoint
    feature lanes + a per-row bias table (cross-type contributions exactly zero);
    cls!=-1 validity and batch ownership are folded into the small idm map."""
    tx = np.zeros((T, KN, D_PAD), np.float32)
    idm = np.zeros((T, B, KN), np.float32)
    w_emb = np.zeros((D_PAD, KH), np.float32)
    b_emb = np.zeros((KN, KH), np.float32)

    for ki, tk in enumerate(TRAFFIC_KEYS):
        d = TRAFFIC_DIMS[tk]
        off = FEAT_OFF[tk]
        w, b = params['traffic'][tk]
        w_emb[off:off + d, ki * H:(ki + 1) * H] = np.asarray(w)
        b_emb[ki * N_MAX:(ki + 1) * N_MAX, ki * H:(ki + 1) * H] = np.asarray(b).reshape(1, -1)
        traffic = x_traffics[tk]
        row0 = ki * N_MAX
        if isinstance(traffic, list):
            feats = [np.asarray(v).reshape(-1, T, d) for v in traffic]
            cls = [np.asarray(v).reshape(-1, T) for v in
                   x_traffics['cls_' + tk.split('_')[-1]]]
            counts = [f.shape[0] for f in feats]
            N = int(sum(counts))
            assert N <= N_MAX, "total objects per type exceeds N_MAX; increase N_MAX"
            if N > 0:
                cat = np.concatenate(feats, axis=0)                           # (N, T, d)
                valid = (np.concatenate(cls, axis=0) != -1).astype(np.float32)  # (N, T)
                tx[:, row0:row0 + N, off:off + d] = np.transpose(cat, (1, 0, 2))
                col = 0
                for bi, c in enumerate(counts):
                    # ownership * per-time validity, folded into the aggregation map
                    idm[:, bi, row0 + col:row0 + col + c] = valid[col:col + c, :].T
                    col += c
        else:   # tensor path (x_ego): one always-valid "object" per batch element
            assert B <= N_MAX, "batch size exceeds N_MAX; increase N_MAX"
            cat = np.asarray(traffic)                                         # (B, T, d)
            tx[:, row0:row0 + B, off:off + d] = np.transpose(cat, (1, 0, 2))
            idm[:, np.arange(B), row0 + np.arange(B)] = 1.0

    return {'tx': jnp.asarray(tx), 'idm': jnp.asarray(idm),
            'w_emb': jnp.asarray(w_emb), 'b_emb': jnp.asarray(b_emb)}


# ----------------------------- pure-JAX reference -----------------------------

def reference_forward(x_ped, x_traffics, params):
    """Pure-JAX reference following the PyTorch module structure.  Matmul
    operands are cast to bf16 (f32 accumulation) to mirror the kernel."""
    bf16, f32 = jnp.bfloat16, jnp.float32
    bdot = lambda a, b: jnp.dot(a.astype(bf16), b.astype(bf16), preferred_element_type=f32)
    relu = lambda z: jnp.maximum(z, 0.0)
    B, T, _ = x_ped.shape

    ped = relu(bdot(x_ped.reshape(B * T, 4), params['w_ped']) + params['b_ped'])
    feats = [ped.reshape(B, T, H)]
    for tk in TRAFFIC_KEYS:
        w, b = params['traffic'][tk]
        traffic = x_traffics[tk]
        if isinstance(traffic, list):
            d = TRAFFIC_DIMS[tk]
            cat = jnp.concatenate([v.reshape(-1, T, d) for v in traffic], axis=0)
            N = cat.shape[0]
            if N == 0:
                feats.append(jnp.zeros((B, T, H), f32))
                continue
            emb = relu(bdot(cat.reshape(N * T, d), w) + b).reshape(N, T, H)
            cls = x_traffics['cls_' + tk.split('_')[-1]]
            m = (jnp.concatenate([v.reshape(-1, T) for v in cls], axis=0) != -1).astype(f32)
            feat = emb * m[..., None]
            counts = [v.shape[0] for v in traffic]
            idm = np.zeros((B, N), np.float32)
            col = 0
            for bi, c in enumerate(counts):
                idm[bi, col:col + c] = 1.0
                col += c
            feat = bdot(jnp.asarray(idm), feat.reshape(N, T * H)).reshape(B, T, H)
            feats.append(feat)
        else:
            emb = relu(bdot(traffic.reshape(B * T, -1), w) + b)
            # kernel routes ego through the bf16 aggregation; mirror that rounding
            feats.append(emb.astype(bf16).astype(f32).reshape(B, T, H))

    all_feats = jnp.concatenate(feats, axis=-1)                 # (B, T, 192)
    flat = all_feats.reshape(B * T, -1)
    h1 = relu(bdot(flat, params['w1']) + params['b1'])
    h2 = relu(bdot(h1, params['w2']) + params['b2'])
    score = (jnp.sum(h2 * params['w3'].reshape(1, H), axis=-1, keepdims=True)
             + params['b3'].reshape(1, 1)).reshape(B, T, 1)
    return score, all_feats


if __name__ == "__main__":
    B, T = 2, 8
    key = jax.random.PRNGKey(0)
    kp, kx = jax.random.split(key)
    params = make_params(kp)
    x_ped, x_traffics = make_inputs(kx, B, T)

    packed = pack_dense(x_traffics, params, B, T)
    score, feats = relation_forward(x_ped, packed, params)
    jax.block_until_ready((score, feats))

    ref_score, ref_feats = reference_forward(x_ped, x_traffics, params)
    # matmul operands are bf16 on both sides; tolerance sized for bf16 rounding
    np.testing.assert_allclose(np.asarray(feats), np.asarray(ref_feats), rtol=1e-2, atol=1e-2)
    np.testing.assert_allclose(np.asarray(score), np.asarray(ref_score), rtol=1e-2, atol=1e-2)

    # TODO(synk): attention branch (TRAFFIC_ATTENTION != 'none') not implemented;
    # AdditiveAttention is not defined in the provided source module.
    print("KERNEL_OK")
</pallas_src>

<mosaic_0001>
module attributes {stable_mosaic.version = 11 : i64} {
  func.func @_relation_kernel(%arg0: i32, %arg1: memref<8x2x4xbf16, #tpu.memory_space<vmem>>, %arg2: memref<8x40x16xbf16, #tpu.memory_space<vmem>>, %arg3: memref<8x2x40xbf16, #tpu.memory_space<vmem>>, %arg4: memref<16x160xbf16, #tpu.memory_space<vmem>>, %arg5: memref<40x160xf32, #tpu.memory_space<vmem>>, %arg6: memref<4x32xbf16, #tpu.memory_space<vmem>>, %arg7: memref<1x32xf32, #tpu.memory_space<vmem>>, %arg8: memref<32x32xbf16, #tpu.memory_space<vmem>>, %arg9: memref<160x32xbf16, #tpu.memory_space<vmem>>, %arg10: memref<1x32xf32, #tpu.memory_space<vmem>>, %arg11: memref<32x32xbf16, #tpu.memory_space<vmem>>, %arg12: memref<1x32xf32, #tpu.memory_space<vmem>>, %arg13: memref<1x32xf32, #tpu.memory_space<vmem>>, %arg14: memref<1x1xf32, #tpu.memory_space<vmem>>, %arg15: memref<8x2x256xf32, #tpu.memory_space<vmem>>) attributes {dimension_semantics = [#tpu.dimension_semantics<parallel>], iteration_bounds = array<i64: 1>, scalar_prefetch = 0 : i64, scratch_operands = 0 : i64, tpu.core_type = #tpu.core_type<tc>, window_params = [{transform_indices = @transform_0, window_bounds = array<i64: 8, 2, 4>}, {transform_indices = @transform_1, window_bounds = array<i64: 8, 40, 16>}, {transform_indices = @transform_2, window_bounds = array<i64: 8, 2, 40>}, {pipeline_mode = #tpu.pipeline_mode<synchronous>, transform_indices = @transform_3, window_bounds = array<i64: 16, 160>}, {pipeline_mode = #tpu.pipeline_mode<synchronous>, transform_indices = @transform_4, window_bounds = array<i64: 40, 160>}, {pipeline_mode = #tpu.pipeline_mode<synchronous>, transform_indices = @transform_5, window_bounds = array<i64: 4, 32>}, {pipeline_mode = #tpu.pipeline_mode<synchronous>, transform_indices = @transform_6, window_bounds = array<i64: 1, 32>}, {pipeline_mode = #tpu.pipeline_mode<synchronous>, transform_indices = @transform_7, window_bounds = array<i64: 32, 32>}, {pipeline_mode = #tpu.pipeline_mode<synchronous>, transform_indices = @transform_8, window_bounds = array<i64: 160, 32>}, {pipeline_mode = #tpu.pipeline_mode<synchronous>, transform_indices = @transform_9, window_bounds = array<i64: 1, 32>}, {pipeline_mode = #tpu.pipeline_mode<synchronous>, transform_indices = @transform_10, window_bounds = array<i64: 32, 32>}, {pipeline_mode = #tpu.pipeline_mode<synchronous>, transform_indices = @transform_11, window_bounds = array<i64: 1, 32>}, {pipeline_mode = #tpu.pipeline_mode<synchronous>, transform_indices = @transform_12, window_bounds = array<i64: 1, 32>}, {pipeline_mode = #tpu.pipeline_mode<synchronous>, transform_indices = @transform_13, window_bounds = array<i64: 1, 1>}, {transform_indices = @transform_14, window_bounds = array<i64: 8, 2, 256>}]} {
    %c0 = arith.constant 0 : index
    %c0_0 = arith.constant 0 : index
    %c0_1 = arith.constant 0 : index
    %0 = vector.load %arg2[%c0, %c0_0, %c0_1] : memref<8x40x16xbf16, #tpu.memory_space<vmem>>, vector<8x40x16xbf16>
    %c0_2 = arith.constant 0 : index
    %c0_3 = arith.constant 0 : index
    %1 = vector.load %arg4[%c0_2, %c0_3] : memref<16x160xbf16, #tpu.memory_space<vmem>>, vector<16x160xbf16>
    %2 = vector.shape_cast %1 : vector<16x160xbf16> to vector<1x16x160xbf16>
    %3 = vector.broadcast %2 : vector<1x16x160xbf16> to vector<8x16x160xbf16>
    "tpu.trace_start"() <{level = 10 : i32, message = "tmd,tdh->tmh"}> : () -> ()
    %cst = arith.constant dense<0.000000e+00> : vector<8x40x160xf32>
    %4 = tpu.matmul %0, %3, %cst {dimension_numbers = #tpu.dot_dimension_numbers<[2], [1], [1], [2], [0, 0, 0, 1, 1, 2], [0], [0]>} : vector<8x40x16xbf16>, vector<8x16x160xbf16>, vector<8x40x160xf32> -> vector<8x40x160xf32>
    "tpu.trace_stop"() : () -> ()
    %c0_4 = arith.constant 0 : index
    %c0_5 = arith.constant 0 : index
    %5 = vector.load %arg5[%c0_4, %c0_5] : memref<40x160xf32, #tpu.memory_space<vmem>>, vector<40x160xf32>
    %6 = vector.shape_cast %5 : vector<40x160xf32> to vector<1x40x160xf32>
    %7 = vector.broadcast %6 : vector<1x40x160xf32> to vector<8x40x160xf32>
    %8 = arith.addf %4, %7 : vector<8x40x160xf32>
    %cst_6 = arith.constant 0.000000e+00 : f32
    %9 = vector.broadcast %cst_6 : f32 to vector<8x40x160xf32>
    %10 = arith.maximumf %8, %9 : vector<8x40x160xf32>
    %c0_7 = arith.constant 0 : index
    %c0_8 = arith.constant 0 : index
    %c0_9 = arith.constant 0 : index
    %11 = vector.load %arg3[%c0_7, %c0_8, %c0_9] : memref<8x2x40xbf16, #tpu.memory_space<vmem>>, vector<8x2x40xbf16>
    %12 = arith.truncf %10 : vector<8x40x160xf32> to vector<8x40x160xbf16>
    "tpu.trace_start"() <{level = 10 : i32, message = "tbm,tmc->tbc"}> : () -> ()
    %cst_10 = arith.constant dense<0.000000e+00> : vector<8x2x160xf32>
    %13 = tpu.matmul %11, %12, %cst_10 {dimension_numbers = #tpu.dot_dimension_numbers<[2], [1], [1], [2], [0, 0, 0, 1, 1, 2], [0], [0]>} : vector<8x2x40xbf16>, vector<8x40x160xbf16>, vector<8x2x160xf32> -> vector<8x2x160xf32>
    "tpu.trace_stop"() : () -> ()
    %c0_11 = arith.constant 0 : index
    %c0_12 = arith.constant 0 : index
    %c0_13 = arith.constant 0 : index
    %14 = vector.load %arg1[%c0_11, %c0_12, %c0_13] : memref<8x2x4xbf16, #tpu.memory_space<vmem>>, vector<8x2x4xbf16>
    %c0_14 = arith.constant 0 : index
    %c0_15 = arith.constant 0 : index
    %15 = vector.load %arg6[%c0_14, %c0_15] : memref<4x32xbf16, #tpu.memory_space<vmem>>, vector<4x32xbf16>
    %16 = vector.shape_cast %15 : vector<4x32xbf16> to vector<1x4x32xbf16>
    %17 = vector.broadcast %16 : vector<1x4x32xbf16> to vector<8x4x32xbf16>
    "tpu.trace_start"() <{level = 10 : i32, message = "tbd,tdh->tbh"}> : () -> ()
    %cst_16 = arith.constant dense<0.000000e+00> : vector<8x2x32xf32>
    %18 = tpu.matmul %14, %17, %cst_16 {dimension_numbers = #tpu.dot_dimension_numbers<[2], [1], [1], [2], [0, 0, 0, 1, 1, 2], [0], [0]>} : vector<8x2x4xbf16>, vector<8x4x32xbf16>, vector<8x2x32xf32> -> vector<8x2x32xf32>
    "tpu.trace_stop"() : () -> ()
    %c0_17 = arith.constant 0 : index
    %c0_18 = arith.constant 0 : index
    %19 = vector.load %arg7[%c0_17, %c0_18] : memref<1x32xf32, #tpu.memory_space<vmem>>, vector<1x32xf32>
    %20 = vector.shape_cast %19 : vector<1x32xf32> to vector<1x1x32xf32>
    %21 = vector.broadcast %20 : vector<1x1x32xf32> to vector<8x2x32xf32>
    %22 = arith.addf %18, %21 : vector<8x2x32xf32>
    %cst_19 = arith.constant 0.000000e+00 : f32
    %23 = vector.broadcast %cst_19 : f32 to vector<8x2x32xf32>
    %24 = arith.maximumf %22, %23 : vector<8x2x32xf32>
    %25 = arith.truncf %24 : vector<8x2x32xf32> to vector<8x2x32xbf16>
    %c0_20 = arith.constant 0 : index
    %c0_21 = arith.constant 0 : index
    %26 = vector.load %arg8[%c0_20, %c0_21] : memref<32x32xbf16, #tpu.memory_space<vmem>>, vector<32x32xbf16>
    %27 = vector.shape_cast %26 : vector<32x32xbf16> to vector<1x32x32xbf16>
    %28 = vector.broadcast %27 : vector<1x32x32xbf16> to vector<8x32x32xbf16>
    "tpu.trace_start"() <{level = 10 : i32, message = "tbh,thd->tbd"}> : () -> ()
    %cst_22 = arith.constant dense<0.000000e+00> : vector<8x2x32xf32>
    %29 = tpu.matmul %25, %28, %cst_22 {dimension_numbers = #tpu.dot_dimension_numbers<[2], [1], [1], [2], [0, 0, 0, 1, 1, 2], [0], [0]>} : vector<8x2x32xbf16>, vector<8x32x32xbf16>, vector<8x2x32xf32> -> vector<8x2x32xf32>
    "tpu.trace_stop"() : () -> ()
    %30 = arith.truncf %13 : vector<8x2x160xf32> to vector<8x2x160xbf16>
    %c0_23 = arith.constant 0 : index
    %c0_24 = arith.constant 0 : index
    %31 = vector.load %arg9[%c0_23, %c0_24] : memref<160x32xbf16, #tpu.memory_space<vmem>>, vector<160x32xbf16>
    %32 = vector.shape_cast %31 : vector<160x32xbf16> to vector<1x160x32xbf16>
    %33 = vector.broadcast %32 : vector<1x160x32xbf16> to vector<8x160x32xbf16>
    "tpu.trace_start"() <{level = 10 : i32, message = "tbc,tcd->tbd"}> : () -> ()
    %cst_25 = arith.constant dense<0.000000e+00> : vector<8x2x32xf32>
    %34 = tpu.matmul %30, %33, %cst_25 {dimension_numbers = #tpu.dot_dimension_numbers<[2], [1], [1], [2], [0, 0, 0, 1, 1, 2], [0], [0]>} : vector<8x2x160xbf16>, vector<8x160x32xbf16>, vector<8x2x32xf32> -> vector<8x2x32xf32>
    "tpu.trace_stop"() : () -> ()
    %35 = arith.addf %29, %34 : vector<8x2x32xf32>
    %c0_26 = arith.constant 0 : index
    %c0_27 = arith.constant 0 : index
    %36 = vector.load %arg10[%c0_26, %c0_27] : memref<1x32xf32, #tpu.memory_space<vmem>>, vector<1x32xf32>
    %37 = vector.shape_cast %36 : vector<1x32xf32> to vector<1x1x32xf32>
    %38 = vector.broadcast %37 : vector<1x1x32xf32> to vector<8x2x32xf32>
    %39 = arith.addf %35, %38 : vector<8x2x32xf32>
    %cst_28 = arith.constant 0.000000e+00 : f32
    %40 = vector.broadcast %cst_28 : f32 to vector<8x2x32xf32>
    %41 = arith.maximumf %39, %40 : vector<8x2x32xf32>
    %42 = arith.truncf %41 : vector<8x2x32xf32> to vector<8x2x32xbf16>
    %c0_29 = arith.constant 0 : index
    %c0_30 = arith.constant 0 : index
    %43 = vector.load %arg11[%c0_29, %c0_30] : memref<32x32xbf16, #tpu.memory_space<vmem>>, vector<32x32xbf16>
    %44 = vector.shape_cast %43 : vector<32x32xbf16> to vector<1x32x32xbf16>
    %45 = vector.broadcast %44 : vector<1x32x32xbf16> to vector<8x32x32xbf16>
    "tpu.trace_start"() <{level = 10 : i32, message = "tbh,thd->tbd"}> : () -> ()
    %cst_31 = arith.constant dense<0.000000e+00> : vector<8x2x32xf32>
    %46 = tpu.matmul %42, %45, %cst_31 {dimension_numbers = #tpu.dot_dimension_numbers<[2], [1], [1], [2], [0, 0, 0, 1, 1, 2], [0], [0]>} : vector<8x2x32xbf16>, vector<8x32x32xbf16>, vector<8x2x32xf32> -> vector<8x2x32xf32>
    "tpu.trace_stop"() : () -> ()
    %c0_32 = arith.constant 0 : index
    %c0_33 = arith.constant 0 : index
    %47 = vector.load %arg12[%c0_32, %c0_33] : memref<1x32xf32, #tpu.memory_space<vmem>>, vector<1x32xf32>
    %48 = vector.shape_cast %47 : vector<1x32xf32> to vector<1x1x32xf32>
    %49 = vector.broadcast %48 : vector<1x1x32xf32> to vector<8x2x32xf32>
    %50 = arith.addf %46, %49 : vector<8x2x32xf32>
    %cst_34 = arith.constant 0.000000e+00 : f32
    %51 = vector.broadcast %cst_34 : f32 to vector<8x2x32xf32>
    %52 = arith.maximumf %50, %51 : vector<8x2x32xf32>
    %c0_35 = arith.constant 0 : index
    %c0_36 = arith.constant 0 : index
    %53 = vector.load %arg13[%c0_35, %c0_36] : memref<1x32xf32, #tpu.memory_space<vmem>>, vector<1x32xf32>
    %54 = vector.shape_cast %53 : vector<1x32xf32> to vector<1x1x32xf32>
    %55 = vector.broadcast %54 : vector<1x1x32xf32> to vector<8x2x32xf32>
    %56 = arith.mulf %52, %55 : vector<8x2x32xf32>
    %cst_37 = arith.constant dense<0.000000e+00> : vector<8x2xf32>
    %57 = vector.multi_reduction <add>, %56, %cst_37 [2] : vector<8x2x32xf32> to vector<8x2xf32>
    %58 = vector.shape_cast %57 : vector<8x2xf32> to vector<8x2x1xf32>
    %c0_38 = arith.constant 0 : index
    %c0_39 = arith.constant 0 : index
    %59 = vector.load %arg14[%c0_38, %c0_39] : memref<1x1xf32, #tpu.memory_space<vmem>>, vector<1x1xf32>
    %60 = vector.shape_cast %59 : vector<1x1xf32> to vector<1x1x1xf32>
    %61 = vector.broadcast %60 : vector<1x1x1xf32> to vector<8x2x1xf32>
    %62 = arith.addf %58, %61 : vector<8x2x1xf32>
    %c0_40 = arith.constant 0 : index
    %c0_41 = arith.constant 0 : index
    %c0_42 = arith.constant 0 : index
    %63 = vector.load %arg15[%c0_40, %c0_41, %c0_42] : memref<8x2x256xf32, #tpu.memory_space<vmem>>, vector<8x2x32xf32>
    tpu.vector_store %arg15[%c0_40, %c0_41, %c0_42], %24 {strides = array<i32>} : memref<8x2x256xf32, #tpu.memory_space<vmem>>, vector<8x2x32xf32>,
    %c0_43 = arith.constant 0 : index
    %c0_44 = arith.constant 0 : index
    %c32 = arith.constant 32 : index
    %64 = vector.load %arg15[%c0_43, %c0_44, %c32] : memref<8x2x256xf32, #tpu.memory_space<vmem>>, vector<8x2x160xf32>
    tpu.vector_store %arg15[%c0_43, %c0_44, %c32], %13 {strides = array<i32>} : memref<8x2x256xf32, #tpu.memory_space<vmem>>, vector<8x2x160xf32>,
    %65 = vector.shape_cast %62 : vector<8x2x1xf32> to vector<8x2x1xf32>
    %66 = vector.broadcast %65 : vector<8x2x1xf32> to vector<8x2x64xf32>
    %c0_45 = arith.constant 0 : index
    %c0_46 = arith.constant 0 : index
    %c192 = arith.constant 192 : index
    %67 = vector.load %arg15[%c0_45, %c0_46, %c192] : memref<8x2x256xf32, #tpu.memory_space<vmem>>, vector<8x2x64xf32>
    tpu.vector_store %arg15[%c0_45, %c0_46, %c192], %66 {strides = array<i32>} : memref<8x2x256xf32, #tpu.memory_space<vmem>>, vector<8x2x64xf32>,
    return
  }
  func.func @transform_0(%arg0: i32) -> (i32, i32, i32) {
    %c0_i32 = arith.constant 0 : i32
    %c0_i32_0 = arith.constant 0 : i32
    %c0_i32_1 = arith.constant 0 : i32
    return %arg0, %c0_i32, %c0_i32_0 : i32, i32, i32
  }
  func.func @transform_1(%arg0: i32) -> (i32, i32, i32) {
    %c0_i32 = arith.constant 0 : i32
    %c0_i32_0 = arith.constant 0 : i32
    %c0_i32_1 = arith.constant 0 : i32
    return %arg0, %c0_i32, %c0_i32_0 : i32, i32, i32
  }
  func.func @transform_2(%arg0: i32) -> (i32, i32, i32) {
    %c0_i32 = arith.constant 0 : i32
    %c0_i32_0 = arith.constant 0 : i32
    %c0_i32_1 = arith.constant 0 : i32
    return %arg0, %c0_i32, %c0_i32_0 : i32, i32, i32
  }
  func.func @transform_3(%arg0: i32) -> (i32, i32) {
    %c0_i32 = arith.constant 0 : i32
    %c0_i32_0 = arith.constant 0 : i32
    %c0_i32_1 = arith.constant 0 : i32
    return %c0_i32, %c0_i32_0 : i32, i32
  }
  func.func @transform_4(%arg0: i32) -> (i32, i32) {
    %c0_i32 = arith.constant 0 : i32
    %c0_i32_0 = arith.constant 0 : i32
    %c0_i32_1 = arith.constant 0 : i32
    return %c0_i32, %c0_i32_0 : i32, i32
  }
  func.func @transform_5(%arg0: i32) -> (i32, i32) {
    %c0_i32 = arith.constant 0 : i32
    %c0_i32_0 = arith.constant 0 : i32
    %c0_i32_1 = arith.constant 0 : i32
    return %c0_i32, %c0_i32_0 : i32, i32
  }
  func.func @transform_6(%arg0: i32) -> (i32, i32) {
    %c0_i32 = arith.constant 0 : i32
    %c0_i32_0 = arith.constant 0 : i32
    %c0_i32_1 = arith.constant 0 : i32
    return %c0_i32, %c0_i32_0 : i32, i32
  }
  func.func @transform_7(%arg0: i32) -> (i32, i32) {
    %c0_i32 = arith.constant 0 : i32
    %c0_i32_0 = arith.constant 0 : i32
    %c0_i32_1 = arith.constant 0 : i32
    return %c0_i32, %c0_i32_0 : i32, i32
  }
  func.func @transform_8(%arg0: i32) -> (i32, i32) {
    %c0_i32 = arith.constant 0 : i32
    %c0_i32_0 = arith.constant 0 : i32
    %c0_i32_1 = arith.constant 0 : i32
    return %c0_i32, %c0_i32_0 : i32, i32
  }
  func.func @transform_9(%arg0: i32) -> (i32, i32) {
    %c0_i32 = arith.constant 0 : i32
    %c0_i32_0 = arith.constant 0 : i32
    %c0_i32_1 = arith.constant 0 : i32
    return %c0_i32, %c0_i32_0 : i32, i32
  }
  func.func @transform_10(%arg0: i32) -> (i32, i32) {
    %c0_i32 = arith.constant 0 : i32
    %c0_i32_0 = arith.constant 0 : i32
    %c0_i32_1 = arith.constant 0 : i32
    return %c0_i32, %c0_i32_0 : i32, i32
  }
  func.func @transform_11(%arg0: i32) -> (i32, i32) {
    %c0_i32 = arith.constant 0 : i32
    %c0_i32_0 = arith.constant 0 : i32
    %c0_i32_1 = arith.constant 0 : i32
    return %c0_i32, %c0_i32_0 : i32, i32
  }
  func.func @transform_12(%arg0: i32) -> (i32, i32) {
    %c0_i32 = arith.constant 0 : i32
    %c0_i32_0 = arith.constant 0 : i32
    %c0_i32_1 = arith.constant 0 : i32
    return %c0_i32, %c0_i32_0 : i32, i32
  }
  func.func @transform_13(%arg0: i32) -> (i32, i32) {
    %c0_i32 = arith.constant 0 : i32
    %c0_i32_0 = arith.constant 0 : i32
    %c0_i32_1 = arith.constant 0 : i32
    return %c0_i32, %c0_i32_0 : i32, i32
  }
  func.func @transform_14(%arg0: i32) -> (i32, i32, i32) {
    %c0_i32 = arith.constant 0 : i32
    %c0_i32_0 = arith.constant 0 : i32
    %c0_i32_1 = arith.constant 0 : i32
    return %arg0, %c0_i32, %c0_i32_0 : i32, i32, i32
  }
}

</mosaic_0001>

<llo_original>
// kernel: tpu_custom_call.1
$region0: #{tpu_custom_call.1}
  #allocation0 [shape = 'u32[]', space=smem, size = 0x4, offset = 0x4, fixed_abs, tag = 'smem constant byte address 0x4 - core index']
  #allocation1 [shape = 'u32[144,128]{1,0:T(1,128)}', space=vmem, size = 0x12000, scoped, tag = 'internal scratch']
  #allocation2 [shape = 'f32[1,1]{1,0:T(1,128)S(1)}', space=vmem, size = 0x200, scoped, tag = 'scoped memory for tpu_custom_call.1']
  %s0 = inlined_call_operand.vmem [shape: bf16[8,2,4], index: 0, kind: input, shape index: {}]
  %s1 = inlined_call_operand.vmem [shape: bf16[8,40,16], index: 1, kind: input, shape index: {}]
  %s2 = inlined_call_operand.vmem [shape: bf16[8,2,40], index: 2, kind: input, shape index: {}]
  %s3 = inlined_call_operand.vmem [shape: bf16[16,160], index: 3, kind: input, shape index: {}]
  %s4 = inlined_call_operand.vmem [shape: f32[40,160], index: 4, kind: input, shape index: {}]
  %s5 = inlined_call_operand.vmem [shape: bf16[4,32], index: 5, kind: input, shape index: {}]
  %s6 = inlined_call_operand.vmem [shape: f32[1,32], index: 6, kind: input, shape index: {}]
  %s7 = inlined_call_operand.vmem [shape: bf16[32,32], index: 7, kind: input, shape index: {}]
  %s8 = inlined_call_operand.vmem [shape: bf16[160,32], index: 8, kind: input, shape index: {}]
  %s9 = inlined_call_operand.vmem [shape: f32[1,32], index: 9, kind: input, shape index: {}]
  %s10 = inlined_call_operand.vmem [shape: bf16[32,32], index: 10, kind: input, shape index: {}]
  %s11 = inlined_call_operand.vmem [shape: f32[1,32], index: 11, kind: input, shape index: {}]
  %s12 = inlined_call_operand.vmem [shape: f32[1,32], index: 12, kind: input, shape index: {}]
  %s13 = inlined_call_operand.<no memory space> [shape: f32[1,1], index: 13, kind: input, shape index: {}]
  %s14 = inlined_call_operand.hbm [shape: f32[8,2,256], index: 14, kind: output, shape index: {}]
  %s15 = sld [smem:[#allocation0]]
  $region66: #{tpu_custom_call.1} parent=0
    _
  %s17 = ssub.s32 1, %s15
  %s18 = scalar_select 0, %s17, %s15
  %v19 = vstv %s13
  %20 = vst [vmem:[#allocation2] sm:$0x1] %v19
  $region1: #{tpu_custom_call.1} parent=0
    #allocation3 [shape = 'u8[16384]{0}', space=vmem, size = 0x4000, scoped, tag = 'output window, operand 0, single buffered']
    #allocation4 [shape = 's32[1]{0}', space=sflag, size = 0x4, scoped, tag = 'scoped memory for tpu_custom_call.1']
    %21 = vsyncpa [#allocation4], 0
    // Predicated region
    $region2: #{tpu_custom_call.1} parent=1 // pred_check
      _
    $region3: #{tpu_custom_call.1} parent=1 // pred_check_branch
      %23 = sbr.rel (0) target = $region5
    $region4: #{tpu_custom_call.1} parent=1 // pred_region
      _
    $region5: #{tpu_custom_call.1} parent=1 // pred_fallthru
      _
    // Predicated region
    $region6: #{tpu_custom_call.1} parent=1 // pred_check
      _
    $region7: #{tpu_custom_call.1} parent=1 // pred_check_branch
      %25 = sbr.rel (0) target = $region9
    $region8: #{tpu_custom_call.1} parent=1 // pred_region
      _
    $region9: #{tpu_custom_call.1} parent=1 // pred_fallthru
      _
    // Predicated region
    $region10: #{tpu_custom_call.1} parent=1 // pred_check
      _
    $region11: #{tpu_custom_call.1} parent=1 // pred_check_branch
      %27 = sbr.rel (0) target = $region13
    $region12: #{tpu_custom_call.1} parent=1 // pred_region
      _
    $region13: #{tpu_custom_call.1} parent=1 // pred_fallthru
      _
    // Predicated region
    $region14: #{tpu_custom_call.1} parent=1 // pred_check
      _
    $region15: #{tpu_custom_call.1} parent=1 // pred_check_branch
      %29 = sbr.rel (0) target = $region17
    $region16: #{tpu_custom_call.1} parent=1 // pred_region
      _
    $region17: #{tpu_custom_call.1} parent=1 // pred_fallthru
      _
    // Predicated region
    $region18: #{tpu_custom_call.1} parent=1 // pred_check
      _
    $region19: #{tpu_custom_call.1} parent=1 // pred_check_branch
      %31 = sbr.rel (0) target = $region21
    $region20: #{tpu_custom_call.1} parent=1 // pred_region
      _
    $region21: #{tpu_custom_call.1} parent=1 // pred_fallthru
      _
    // Predicated region
    $region22: #{tpu_custom_call.1} parent=1 // pred_check
      _
    $region23: #{tpu_custom_call.1} parent=1 // pred_check_branch
      %33 = sbr.rel (0) target = $region25
    $region24: #{tpu_custom_call.1} parent=1 // pred_region
      _
    $region25: #{tpu_custom_call.1} parent=1 // pred_fallthru
      _
    // Predicated region
    $region26: #{tpu_custom_call.1} parent=1 // pred_check
      _
    $region27: #{tpu_custom_call.1} parent=1 // pred_check_branch
      %35 = sbr.rel (0) target = $region29
    $region28: #{tpu_custom_call.1} parent=1 // pred_region
      _
    $region29: #{tpu_custom_call.1} parent=1 // pred_fallthru
      _
    // Predicated region
    $region30: #{tpu_custom_call.1} parent=1 // pred_check
      _
    $region31: #{tpu_custom_call.1} parent=1 // pred_check_branch
      %37 = sbr.rel (0) target = $region33
    $region32: #{tpu_custom_call.1} parent=1 // pred_region
      _
    $region33: #{tpu_custom_call.1} parent=1 // pred_fallthru
      _
    // Predicated region
    $region34: #{tpu_custom_call.1} parent=1 // pred_check
      _
    $region35: #{tpu_custom_call.1} parent=1 // pred_check_branch
      %39 = sbr.rel (0) target = $region37
    $region36: #{tpu_custom_call.1} parent=1 // pred_region
      _
    $region37: #{tpu_custom_call.1} parent=1 // pred_fallthru
      _
    // Predicated region
    $region38: #{tpu_custom_call.1} parent=1 // pred_check
      _
    $region39: #{tpu_custom_call.1} parent=1 // pred_check_branch
      %41 = sbr.rel (0) target = $region41
    $region40: #{tpu_custom_call.1} parent=1 // pred_region
      _
    $region41: #{tpu_custom_call.1} parent=1 // pred_fallthru
      _
    // Predicated region
    $region42: #{tpu_custom_call.1} parent=1 // pred_check
      _
    $region43: #{tpu_custom_call.1} parent=1 // pred_check_branch
      %43 = sbr.rel (0) target = $region45
    $region44: #{tpu_custom_call.1} parent=1 // pred_region
      _
    $region45: #{tpu_custom_call.1} parent=1 // pred_fallthru
      _
    // Predicated region
    $region46: #{tpu_custom_call.1} parent=1 // pred_check
      _
    $region47: #{tpu_custom_call.1} parent=1 // pred_check_branch
      %45 = sbr.rel (0) target = $region49
    $region48: #{tpu_custom_call.1} parent=1 // pred_region
      _
    $region49: #{tpu_custom_call.1} parent=1 // pred_fallthru
      _
    // Predicated region
    $region50: #{tpu_custom_call.1} parent=1 // pred_check
      _
    $region51: #{tpu_custom_call.1} parent=1 // pred_check_branch
      %47 = sbr.rel (0) target = $region53
    $region52: #{tpu_custom_call.1} parent=1 // pred_region
      _
    $region53: #{tpu_custom_call.1} parent=1 // pred_fallthru
      _
    // Predicated region
    $region54: #{tpu_custom_call.1} parent=1 // pred_check
      _
    $region55: #{tpu_custom_call.1} parent=1 // pred_check_branch
      %49 = sbr.rel (0) target = $region57
    $region56: #{tpu_custom_call.1} parent=1 // pred_region
      _
    $region57: #{tpu_custom_call.1} parent=1 // pred_fallthru
      _
    %v51 = vld [vmem:[%s1] sm:$0xf]
    %v52 = vld [vmem:[%s1 + $0x4] sm:$0xf]
    %v53 = vld [vmem:[%s1 + $0x8] sm:$0xf]
    %v54 = vld [vmem:[%s1 + $0xc] sm:$0xf]
    %v55 = vld [vmem:[%s1 + $0x10] sm:$0xf]
    %v56 = vld [vmem:[%s1 + $0x14] sm:$0xf]
    %v57 = vld [vmem:[%s1 + $0x18] sm:$0xf]
    %v58 = vld [vmem:[%s1 + $0x1c] sm:$0xf]
    %v59 = vld [vmem:[%s1 + $0x20] sm:$0xf]
    %v60 = vld [vmem:[%s1 + $0x24] sm:$0xf]
    %v61 = vld [vmem:[%s1 + $0x28] sm:$0xf]
    %v62 = vld [vmem:[%s1 + $0x2c] sm:$0xf]
    %v63 = vld [vmem:[%s1 + $0x30] sm:$0xf]
    %v64 = vld [vmem:[%s1 + $0x34] sm:$0xf]
    %v65 = vld [vmem:[%s1 + $0x38] sm:$0xf]
    %v66 = vld [vmem:[%s1 + $0x3c] sm:$0xf]
    %v67 = vld [vmem:[%s1 + $0x40] sm:$0xf]
    %v68 = vld [vmem:[%s1 + $0x44] sm:$0xf]
    %v69 = vld [vmem:[%s1 + $0x48] sm:$0xf]
    %v70 = vld [vmem:[%s1 + $0x4c] sm:$0xf]
    %v71 = vld [vmem:[%s1 + $0x50] sm:$0xf]
    %v72 = vld [vmem:[%s1 + $0x54] sm:$0xf]
    %v73 = vld [vmem:[%s1 + $0x58] sm:$0xf]
    %v74 = vld [vmem:[%s1 + $0x5c] sm:$0xf]
    %v75 = vld [vmem:[%s1 + $0x60] sm:$0xf]
    %v76 = vld [vmem:[%s1 + $0x64] sm:$0xf]
    %v77 = vld [vmem:[%s1 + $0x68] sm:$0xf]
    %v78 = vld [vmem:[%s1 + $0x6c] sm:$0xf]
    %v79 = vld [vmem:[%s1 + $0x70] sm:$0xf]
    %v80 = vld [vmem:[%s1 + $0x74] sm:$0xf]
    %v81 = vld [vmem:[%s1 + $0x78] sm:$0xf]
    %v82 = vld [vmem:[%s1 + $0x7c] sm:$0xf]
    %v83 = vld [vmem:[%s1 + $0x80] sm:$0xf]
    %v84 = vld [vmem:[%s1 + $0x84] sm:$0xf]
    %v85 = vld [vmem:[%s1 + $0x88] sm:$0xf]
    %v86 = vld [vmem:[%s1 + $0x8c] sm:$0xf]
    %v87 = vld [vmem:[%s1 + $0x90] sm:$0xf]
    %v88 = vld [vmem:[%s1 + $0x94] sm:$0xf]
    %v89 = vld [vmem:[%s1 + $0x98] sm:$0xf]
    %v90 = vld [vmem:[%s1 + $0x9c] sm:$0xf]
    %v91 = vld [vmem:[%s3] sm:$0xff]
    %v92 = vld [vmem:[%s3 + $0x8] sm:$0xff]
    %v93 = vld [vmem:[%s4] sm:$0xff]
    %v94 = vld [vmem:[%s4 + $0x8] sm:$0xff]
    %v95 = vld [vmem:[%s4 + $0x10] sm:$0xff]
    %v96 = vld [vmem:[%s4 + $0x18] sm:$0xff]
    %v97 = vld [vmem:[%s4 + $0x20] sm:$0xff]
    %v98 = vld [vmem:[%s4 + $0x28] sm:$0xff]
    %v99 = vld [vmem:[%s4 + $0x30] sm:$0xff]
    %v100 = vld [vmem:[%s4 + $0x38] sm:$0xff]
    %v101 = vld [vmem:[%s4 + $0x40] sm:$0xff]
    %v102 = vld [vmem:[%s4 + $0x48] sm:$0xff]
    %v108 = vunpack.c.l.b16 %v51
    %v109 = vunpack.c.l.b16 %v52
    %v110 = vunpack.c.l.b16 %v53
    %v111 = vunpack.c.l.b16 %v54
    %v112 = vunpack.c.l.b16 %v55
    %v113 = vpack.c.b16 %v109, %v108
    %v114 = vpack.c.b16 %v111, %v110
    %v115 = vpack.c.b16 %v112, %v112
    %v118 = vunpack.c.l.b16 %v91
    %v119 = vunpack.c.h.b16 %v91
    %v120 = vunpack.c.l.b16 %v92
    %v121 = vunpack.c.h.b16 %v92
    %v122 = vpack.c.b16 %v120, %v118
    %v123 = vpack.c.b16 %v121, %v119
    %vm126 = vcmask 130048
    %v128 = vsel %vm126, %v113, 0
    %v131 = vsel %vm126, %v114, 0
    %v134 = vsel %vm126, %v115, 0
    %136 = vmatprep.subr.bf16.mxu0 %v123
    %137 = vmatpush1.bf16.msra.mxu0 %v122
    %138 = vmatprep.subr.bf16.mxu0 0
    %139 = vmatpush1.bf16.msra.mxu0 0
    %140 = vmatprep.subr.bf16.mxu0 0
    %141 = vmatpush1.bf16.msra.mxu0 0
    %142 = vmatprep.subr.bf16.mxu0 0
    %143 = vmatpush1.bf16.msra.mxu0 0
    %144 = vmatprep.subr.bf16.mxu0 0
    %145 = vmatpush1.bf16.msra.mxu0 0
    %146 = vmatprep.subr.bf16.mxu0 0
    %147 = vmatpush1.bf16.msra.mxu0 0
    %148 = vmatprep.subr.bf16.mxu0 0
    %149 = vmatpush1.bf16.msra.mxu0 0
    %150 = vmatprep.subr.bf16.mxu0 0
    %151 = vmatpush1.bf16.msra.mxu0 0
    %152 = vmatprep.subr.bf16.mxu0 0
    %153 = vmatpush1.bf16.msra.mxu0 0
    %154 = vmatprep.subr.bf16.mxu0 0
    %155 = vmatpush1.bf16.msra.mxu0 0
    %156 = vmatprep.subr.bf16.mxu0 0
    %157 = vmatpush1.bf16.msra.mxu0 0
    %158 = vmatprep.subr.bf16.mxu0 0
    %159 = vmatpush1.bf16.msra.mxu0 0
    %160 = vmatprep.subr.bf16.mxu0 0
    %161 = vmatpush1.bf16.msra.mxu0 0
    %162 = vmatprep.subr.bf16.mxu0 0
    %163 = vmatpush1.bf16.msra.mxu0 0
    %164 = vmatprep.subr.bf16.mxu0 0
    %165 = vmatpush1.bf16.msra.mxu0 0
    %166 = vmatprep.subr.bf16.mxu0 0
    %167 = vmatpush1.bf16.msra.mxu0 0
    %168 = vmatprep.mubr.bf16.mxu0 0
    %169 = vmatmul.mubr.bf16.gmra.mrb[0].mxu0 %v128
    %v170 = vpop.f32.mrb[0].mxu0
    %v171 = vadd.f32 %v93, %v170
    %v172 = vpop.f32.mrb[0].mxu0
    %v173 = vadd.f32 %v94, %v172
    %v174 = vpop.f32.mrb[0].mxu0
    %v175 = vadd.f32 %v95, %v174
    %v176 = vpop.f32.mrb[0].mxu0
    %v177 = vadd.f32 %v96, %v176
    %178 = vmatprep.mubr.bf16.mxu0 0
    %179 = vmatmul.mubr.bf16.gmra.mrb[0].mxu0 %v131
    %v180 = vpop.f32.mrb[0].mxu0
    %v181 = vadd.f32 %v97, %v180
    %v182 = vpop.f32.mrb[0].mxu0
    %v183 = vadd.f32 %v98, %v182
    %v184 = vpop.f32.mrb[0].mxu0
    %v185 = vadd.f32 %v99, %v184
    %v186 = vpop.f32.mrb[0].mxu0
    %v187 = vadd.f32 %v100, %v186
    %188 = vmatprep.mubr.bf16.mxu0 0
    %189 = vmatmul.mubr.bf16.gmra.mrb[0].mxu0 %v134
    %v190 = vpop.f32.mrb[0].mxu0
    %v191 = vadd.f32 %v101, %v190
    %v192 = vpop.f32.mrb[0].mxu0
    %v193 = vadd.f32 %v102, %v192
    %v194 = vpop.f32.mrb[0].mxu0
    %v195 = vpop.f32.mrb[0].mxu0
    %196 = vdwg.mxu0
    %v202 = vunpack.c.l.b16 %v56
    %v203 = vunpack.c.l.b16 %v57
    %v204 = vunpack.c.l.b16 %v58
    %v205 = vunpack.c.l.b16 %v59
    %v206 = vunpack.c.l.b16 %v60
    %v207 = vpack.c.b16 %v203, %v202
    %v208 = vpack.c.b16 %v205, %v204
    %v209 = vpack.c.b16 %v206, %v206
    %v211 = vsel %vm126, %v207, 0
    %v214 = vsel %vm126, %v208, 0
    %v217 = vsel %vm126, %v209, 0
    %219 = vmatprep.subr.bf16.mxu0 %v123
    %220 = vmatpush1.bf16.msra.mxu0 %v122
    %221 = vmatprep.subr.bf16.mxu0 0
    %222 = vmatpush1.bf16.msra.mxu0 0
    %223 = vmatprep.subr.bf16.mxu0 0
    %224 = vmatpush1.bf16.msra.mxu0 0
    %225 = vmatprep.subr.bf16.mxu0 0
    %226 = vmatpush1.bf16.msra.mxu0 0
    %227 = vmatprep.subr.bf16.mxu0 0
    %228 = vmatpush1.bf16.msra.mxu0 0
    %229 = vmatprep.subr.bf16.mxu0 0
    %230 = vmatpush1.bf16.msra.mxu0 0
    %231 = vmatprep.subr.bf16.mxu0 0
    %232 = vmatpush1.bf16.msra.mxu0 0
    %233 = vmatprep.subr.bf16.mxu0 0
    %234 = vmatpush1.bf16.msra.mxu0 0
    %235 = vmatprep.subr.bf16.mxu0 0
    %236 = vmatpush1.bf16.msra.mxu0 0
    %237 = vmatprep.subr.bf16.mxu0 0
    %238 = vmatpush1.bf16.msra.mxu0 0
    %239 = vmatprep.subr.bf16.mxu0 0
    %240 = vmatpush1.bf16.msra.mxu0 0
    %241 = vmatprep.subr.bf16.mxu0 0
    %242 = vmatpush1.bf16.msra.mxu0 0
    %243 = vmatprep.subr.bf16.mxu0 0
    %244 = vmatpush1.bf16.msra.mxu0 0
    %245 = vmatprep.subr.bf16.mxu0 0
    %246 = vmatpush1.bf16.msra.mxu0 0
    %247 = vmatprep.subr.bf16.mxu0 0
    %248 = vmatpush1.bf16.msra.mxu0 0
    %249 = vmatprep.subr.bf16.mxu0 0
    %250 = vmatpush1.bf16.msra.mxu0 0
    %251 = vmatprep.mubr.bf16.mxu0 0
    %252 = vmatmul.mubr.bf16.gmra.mrb[0].mxu0 %v211
    %v253 = vpop.f32.mrb[0].mxu0
    %v254 = vadd.f32 %v93, %v253
    %v255 = vpop.f32.mrb[0].mxu0
    %v256 = vadd.f32 %v94, %v255
    %v257 = vpop.f32.mrb[0].mxu0
    %v258 = vadd.f32 %v95, %v257
    %v259 = vpop.f32.mrb[0].mxu0
    %v260 = vadd.f32 %v96, %v259
    %261 = vmatprep.mubr.bf16.mxu0 0
    %262 = vmatmul.mubr.bf16.gmra.mrb[0].mxu0 %v214
    %v263 = vpop.f32.mrb[0].mxu0
    %v264 = vadd.f32 %v97, %v263
    %v265 = vpop.f32.mrb[0].mxu0
    %v266 = vadd.f32 %v98, %v265
    %v267 = vpop.f32.mrb[0].mxu0
    %v268 = vadd.f32 %v99, %v267
    %v269 = vpop.f32.mrb[0].mxu0
    %v270 = vadd.f32 %v100, %v269
    %271 = vmatprep.mubr.bf16.mxu0 0
    %272 = vmatmul.mubr.bf16.gmra.mrb[0].mxu0 %v217
    %v273 = vpop.f32.mrb[0].mxu0
    %v274 = vadd.f32 %v101, %v273
    %v275 = vpop.f32.mrb[0].mxu0
    %v276 = vadd.f32 %v102, %v275
    %v277 = vpop.f32.mrb[0].mxu0
    %v278 = vpop.f32.mrb[0].mxu0
    %279 = vdwg.mxu0
    %v285 = vunpack.c.l.b16 %v61
    %v286 = vunpack.c.l.b16 %v62
    %v287 = vunpack.c.l.b16 %v63
    %v288 = vunpack.c.l.b16 %v64
    %v289 = vunpack.c.l.b16 %v65
    %v290 = vpack.c.b16 %v286, %v285
    %v291 = vpack.c.b16 %v288, %v287
    %v292 = vpack.c.b16 %v289, %v289
    %v294 = vsel %vm126, %v290, 0
    %v297 = vsel %vm126, %v291, 0
    %v300 = vsel %vm126, %v292, 0
    %302 = vmatprep.subr.bf16.mxu0 %v123
    %303 = vmatpush1.bf16.msra.mxu0 %v122
    %304 = vmatprep.subr.bf16.mxu0 0
    %305 = vmatpush1.bf16.msra.mxu0 0
    %306 = vmatprep.subr.bf16.mxu0 0
    %307 = vmatpush1.bf16.msra.mxu0 0
    %308 = vmatprep.subr.bf16.mxu0 0
    %309 = vmatpush1.bf16.msra.mxu0 0
    %310 = vmatprep.subr.bf16.mxu0 0
    %311 = vmatpush1.bf16.msra.mxu0 0
    %312 = vmatprep.subr.bf16.mxu0 0
    %313 = vmatpush1.bf16.msra.mxu0 0
    %314 = vmatprep.subr.bf16.mxu0 0
    %315 = vmatpush1.bf16.msra.mxu0 0
    %316 = vmatprep.subr.bf16.mxu0 0
    %317 = vmatpush1.bf16.msra.mxu0 0
    %318 = vmatprep.subr.bf16.mxu0 0
    %319 = vmatpush1.bf16.msra.mxu0 0
    %320 = vmatprep.subr.bf16.mxu0 0
    %321 = vmatpush1.bf16.msra.mxu0 0
    %322 = vmatprep.subr.bf16.mxu0 0
    %323 = vmatpush1.bf16.msra.mxu0 0
    %324 = vmatprep.subr.bf16.mxu0 0
    %325 = vmatpush1.bf16.msra.mxu0 0
    %326 = vmatprep.subr.bf16.mxu0 0
    %327 = vmatpush1.bf16.msra.mxu0 0
    %328 = vmatprep.subr.bf16.mxu0 0
    %329 = vmatpush1.bf16.msra.mxu0 0
    %330 = vmatprep.subr.bf16.mxu0 0
    %331 = vmatpush1.bf16.msra.mxu0 0
    %332 = vmatprep.subr.bf16.mxu0 0
    %333 = vmatpush1.bf16.msra.mxu0 0
    %334 = vmatprep.mubr.bf16.mxu0 0
    %335 = vmatmul.mubr.bf16.gmra.mrb[0].mxu0 %v294
    %v336 = vpop.f32.mrb[0].mxu0
    %v337 = vadd.f32 %v93, %v336
    %v338 = vpop.f32.mrb[0].mxu0
    %v339 = vadd.f32 %v94, %v338
    %v340 = vpop.f32.mrb[0].mxu0
    %v341 = vadd.f32 %v95, %v340
    %v342 = vpop.f32.mrb[0].mxu0
    %v343 = vadd.f32 %v96, %v342
    %344 = vmatprep.mubr.bf16.mxu0 0
    %345 = vmatmul.mubr.bf16.gmra.mrb[0].mxu0 %v297
    %v346 = vpop.f32.mrb[0].mxu0
    %v347 = vadd.f32 %v97, %v346
    %v348 = vpop.f32.mrb[0].mxu0
    %v349 = vadd.f32 %v98, %v348
    %v350 = vpop.f32.mrb[0].mxu0
    %v351 = vadd.f32 %v99, %v350
    %v352 = vpop.f32.mrb[0].mxu0
    %v353 = vadd.f32 %v100, %v352
    %354 = vmatprep.mubr.bf16.mxu0 0
    %355 = vmatmul.mubr.bf16.gmra.mrb[0].mxu0 %v300
    %v356 = vpop.f32.mrb[0].mxu0
    %v357 = vadd.f32 %v101, %v356
    %v358 = vpop.f32.mrb[0].mxu0
    %v359 = vadd.f32 %v102, %v358
    %v360 = vpop.f32.mrb[0].mxu0
    %v361 = vpop.f32.mrb[0].mxu0
    %362 = vdwg.mxu0
    %v368 = vunpack.c.l.b16 %v66
    %v369 = vunpack.c.l.b16 %v67
    %v370 = vunpack.c.l.b16 %v68
    %v371 = vunpack.c.l.b16 %v69
    %v372 = vunpack.c.l.b16 %v70
    %v373 = vpack.c.b16 %v369, %v368
    %v374 = vpack.c.b16 %v371, %v370
    %v375 = vpack.c.b16 %v372, %v372
    %v377 = vsel %vm126, %v373, 0
    %v380 = vsel %vm126, %v374, 0
    %v383 = vsel %vm126, %v375, 0
    %385 = vmatprep.subr.bf16.mxu0 %v123
    %386 = vmatpush1.bf16.msra.mxu0 %v122
    %387 = vmatprep.subr.bf16.mxu0 0
    %388 = vmatpush1.bf16.msra.mxu0 0
    %389 = vmatprep.subr.bf16.mxu0 0
    %390 = vmatpush1.bf16.msra.mxu0 0
    %391 = vmatprep.subr.bf16.mxu0 0
    %392 = vmatpush1.bf16.msra.mxu0 0
    %393 = vmatprep.subr.bf16.mxu0 0
    %394 = vmatpush1.bf16.msra.mxu0 0
    %395 = vmatprep.subr.bf16.mxu0 0
    %396 = vmatpush1.bf16.msra.mxu0 0
    %397 = vmatprep.subr.bf16.mxu0 0
    %398 = vmatpush1.bf16.msra.mxu0 0
    %399 = vmatprep.subr.bf16.mxu0 0
    %400 = vmatpush1.bf16.msra.mxu0 0
    %401 = vmatprep.subr.bf16.mxu0 0
    %402 = vmatpush1.bf16.msra.mxu0 0
    %403 = vmatprep.subr.bf16.mxu0 0
    %404 = vmatpush1.bf16.msra.mxu0 0
    %405 = vmatprep.subr.bf16.mxu0 0
    %406 = vmatpush1.bf16.msra.mxu0 0
    %407 = vmatprep.subr.bf16.mxu0 0
    %408 = vmatpush1.bf16.msra.mxu0 0
    %409 = vmatprep.subr.bf16.mxu0 0
    %410 = vmatpush1.bf16.msra.mxu0 0
    %411 = vmatprep.subr.bf16.mxu0 0
    %412 = vmatpush1.bf16.msra.mxu0 0
    %413 = vmatprep.subr.bf16.mxu0 0
    %414 = vmatpush1.bf16.msra.mxu0 0
    %415 = vmatprep.subr.bf16.mxu0 0
    %416 = vmatpush1.bf16.msra.mxu0 0
    %417 = vmatprep.mubr.bf16.mxu0 0
    %418 = vmatmul.mubr.bf16.gmra.mrb[0].mxu0 %v377
    %v419 = vpop.f32.mrb[0].mxu0
    %v420 = vadd.f32 %v93, %v419
    %v421 = vpop.f32.mrb[0].mxu0
    %v422 = vadd.f32 %v94, %v421
    %v423 = vpop.f32.mrb[0].mxu0
    %v424 = vadd.f32 %v95, %v423
    %v425 = vpop.f32.mrb[0].mxu0
    %v426 = vadd.f32 %v96, %v425
    %427 = vmatprep.mubr.bf16.mxu0 0
    %428 = vmatmul.mubr.bf16.gmra.mrb[0].mxu0 %v380
    %v429 = vpop.f32.mrb[0].mxu0
    %v430 = vadd.f32 %v97, %v429
    %v431 = vpop.f32.mrb[0].mxu0
    %v432 = vadd.f32 %v98, %v431
    %v433 = vpop.f32.mrb[0].mxu0
    %v434 = vadd.f32 %v99, %v433
    %v435 = vpop.f32.mrb[0].mxu0
    %v436 = vadd.f32 %v100, %v435
    %437 = vmatprep.mubr.bf16.mxu0 0
    %438 = vmatmul.mubr.bf16.gmra.mrb[0].mxu0 %v383
    %v439 = vpop.f32.mrb[0].mxu0
    %v440 = vadd.f32 %v101, %v439
    %v441 = vpop.f32.mrb[0].mxu0
    %v442 = vadd.f32 %v102, %v441
    %v443 = vpop.f32.mrb[0].mxu0
    %v444 = vpop.f32.mrb[0].mxu0
    %445 = vdwg.mxu0
    %v451 = vunpack.c.l.b16 %v71
    %v452 = vunpack.c.l.b16 %v72
    %v453 = vunpack.c.l.b16 %v73
    %v454 = vunpack.c.l.b16 %v74
    %v455 = vunpack.c.l.b16 %v75
    %v456 = vpack.c.b16 %v452, %v451
    %v457 = vpack.c.b16 %v454, %v453
    %v458 = vpack.c.b16 %v455, %v455
    %v460 = vsel %vm126, %v456, 0
    %v463 = vsel %vm126, %v457, 0
    %v466 = vsel %vm126, %v458, 0
    %468 = vmatprep.subr.bf16.mxu0 %v123
    %469 = vmatpush1.bf16.msra.mxu0 %v122
    %470 = vmatprep.subr.bf16.mxu0 0
    %471 = vmatpush1.bf16.msra.mxu0 0
    %472 = vmatprep.subr.bf16.mxu0 0
    %473 = vmatpush1.bf16.msra.mxu0 0
    %474 = vmatprep.subr.bf16.mxu0 0
    %475 = vmatpush1.bf16.msra.mxu0 0
    %476 = vmatprep.subr.bf16.mxu0 0
    %477 = vmatpush1.bf16.msra.mxu0 0
    %478 = vmatprep.subr.bf16.mxu0 0
    %479 = vmatpush1.bf16.msra.mxu0 0
    %480 = vmatprep.subr.bf16.mxu0 0
    %481 = vmatpush1.bf16.msra.mxu0 0
    %482 = vmatprep.subr.bf16.mxu0 0
    %483 = vmatpush1.bf16.msra.mxu0 0
    %484 = vmatprep.subr.bf16.mxu0 0
    %485 = vmatpush1.bf16.msra.mxu0 0
    %486 = vmatprep.subr.bf16.mxu0 0
    %487 = vmatpush1.bf16.msra.mxu0 0
    %488 = vmatprep.subr.bf16.mxu0 0
    %489 = vmatpush1.bf16.msra.mxu0 0
    %490 = vmatprep.subr.bf16.mxu0 0
    %491 = vmatpush1.bf16.msra.mxu0 0
    %492 = vmatprep.subr.bf16.mxu0 0
    %493 = vmatpush1.bf16.msra.mxu0 0
    %494 = vmatprep.subr.bf16.mxu0 0
    %495 = vmatpush1.bf16.msra.mxu0 0
    %496 = vmatprep.subr.bf16.mxu0 0
    %497 = vmatpush1.bf16.msra.mxu0 0
    %498 = vmatprep.subr.bf16.mxu0 0
    %499 = vmatpush1.bf16.msra.mxu0 0
    %500 = vmatprep.mubr.bf16.mxu0 0
    %501 = vmatmul.mubr.bf16.gmra.mrb[0].mxu0 %v460
    %v502 = vpop.f32.mrb[0].mxu0
    %v503 = vadd.f32 %v93, %v502
    %v504 = vpop.f32.mrb[0].mxu0
    %v505 = vadd.f32 %v94, %v504
    %v506 = vpop.f32.mrb[0].mxu0
    %v507 = vadd.f32 %v95, %v506
    %v508 = vpop.f32.mrb[0].mxu0
    %v509 = vadd.f32 %v96, %v508
    %510 = vmatprep.mubr.bf16.mxu0 0
    %511 = vmatmul.mubr.bf16.gmra.mrb[0].mxu0 %v463
    %v512 = vpop.f32.mrb[0].mxu0
    %v513 = vadd.f32 %v97, %v512
    %v514 = vpop.f32.mrb[0].mxu0
    %v515 = vadd.f32 %v98, %v514
    %v516 = vpop.f32.mrb[0].mxu0
    %v517 = vadd.f32 %v99, %v516
    %v518 = vpop.f32.mrb[0].mxu0
    %v519 = vadd.f32 %v100, %v518
    %520 = vmatprep.mubr.bf16.mxu0 0
    %521 = vmatmul.mubr.bf16.gmra.mrb[0].mxu0 %v466
    %v522 = vpop.f32.mrb[0].mxu0
    %v523 = vadd.f32 %v101, %v522
    %v524 = vpop.f32.mrb[0].mxu0
    %v525 = vadd.f32 %v102, %v524
    %v526 = vpop.f32.mrb[0].mxu0
    %v527 = vpop.f32.mrb[0].mxu0
    %528 = vdwg.mxu0
    %v534 = vunpack.c.l.b16 %v76
    %v535 = vunpack.c.l.b16 %v77
    %v536 = vunpack.c.l.b16 %v78
    %v537 = vunpack.c.l.b16 %v79
    %v538 = vunpack.c.l.b16 %v80
    %v539 = vpack.c.b16 %v535, %v534
    %v540 = vpack.c.b16 %v537, %v536
    %v541 = vpack.c.b16 %v538, %v538
    %v543 = vsel %vm126, %v539, 0
    %v546 = vsel %vm126, %v540, 0
    %v549 = vsel %vm126, %v541, 0
    %551 = vmatprep.subr.bf16.mxu0 %v123
    %552 = vmatpush1.bf16.msra.mxu0 %v122
    %553 = vmatprep.subr.bf16.mxu0 0
    %554 = vmatpush1.bf16.msra.mxu0 0
    %555 = vmatprep.subr.bf16.mxu0 0
    %556 = vmatpush1.bf16.msra.mxu0 0
    %557 = vmatprep.subr.bf16.mxu0 0
    %558 = vmatpush1.bf16.msra.mxu0 0
    %559 = vmatprep.subr.bf16.mxu0 0
    %560 = vmatpush1.bf16.msra.mxu0 0
    %561 = vmatprep.subr.bf16.mxu0 0
    %562 = vmatpush1.bf16.msra.mxu0 0
    %563 = vmatprep.subr.bf16.mxu0 0
    %564 = vmatpush1.bf16.msra.mxu0 0
    %565 = vmatprep.subr.bf16.mxu0 0
    %566 = vmatpush1.bf16.msra.mxu0 0
    %567 = vmatprep.subr.bf16.mxu0 0
    %568 = vmatpush1.bf16.msra.mxu0 0
    %569 = vmatprep.subr.bf16.mxu0 0
    %570 = vmatpush1.bf16.msra.mxu0 0
    %571 = vmatprep.subr.bf16.mxu0 0
    %572 = vmatpush1.bf16.msra.mxu0 0
    %573 = vmatprep.subr.bf16.mxu0 0
    %574 = vmatpush1.bf16.msra.mxu0 0
    %575 = vmatprep.subr.bf16.mxu0 0
    %576 = vmatpush1.bf16.msra.mxu0 0
    %577 = vmatprep.subr.bf16.mxu0 0
    %578 = vmatpush1.bf16.msra.mxu0 0
    %579 = vmatprep.subr.bf16.mxu0 0
    %580 = vmatpush1.bf16.msra.mxu0 0
    %581 = vmatprep.subr.bf16.mxu0 0
    %582 = vmatpush1.bf16.msra.mxu0 0
    %583 = vmatprep.mubr.bf16.mxu0 0
    %584 = vmatmul.mubr.bf16.gmra.mrb[0].mxu0 %v543
    %v585 = vpop.f32.mrb[0].mxu0
    %v586 = vadd.f32 %v93, %v585
    %v587 = vpop.f32.mrb[0].mxu0
    %v588 = vadd.f32 %v94, %v587
    %v589 = vpop.f32.mrb[0].mxu0
    %v590 = vadd.f32 %v95, %v589
    %v591 = vpop.f32.mrb[0].mxu0
    %v592 = vadd.f32 %v96, %v591
    %593 = vmatprep.mubr.bf16.mxu0 0
    %594 = vmatmul.mubr.bf16.gmra.mrb[0].mxu0 %v546
    %v595 = vpop.f32.mrb[0].mxu0
    %v596 = vadd.f32 %v97, %v595
    %v597 = vpop.f32.mrb[0].mxu0
    %v598 = vadd.f32 %v98, %v597
    %v599 = vpop.f32.mrb[0].mxu0
    %v600 = vadd.f32 %v99, %v599
    %v601 = vpop.f32.mrb[0].mxu0
    %v602 = vadd.f32 %v100, %v601
    %603 = vmatprep.mubr.bf16.mxu0 0
    %604 = vmatmul.mubr.bf16.gmra.mrb[0].mxu0 %v549
    %v605 = vpop.f32.mrb[0].mxu0
    %v606 = vadd.f32 %v101, %v605
    %v607 = vpop.f32.mrb[0].mxu0
    %v608 = vadd.f32 %v102, %v607
    %v609 = vpop.f32.mrb[0].mxu0
    %v610 = vpop.f32.mrb[0].mxu0
    %611 = vdwg.mxu0
    %v617 = vunpack.c.l.b16 %v81
    %v618 = vunpack.c.l.b16 %v82
    %v619 = vunpack.c.l.b16 %v83
    %v620 = vunpack.c.l.b16 %v84
    %v621 = vunpack.c.l.b16 %v85
    %v622 = vpack.c.b16 %v618, %v617
    %v623 = vpack.c.b16 %v620, %v619
    %v624 = vpack.c.b16 %v621, %v621
    %v626 = vsel %vm126, %v622, 0
    %v629 = vsel %vm126, %v623, 0
    %v632 = vsel %vm126, %v624, 0
    %634 = vmatprep.subr.bf16.mxu0 %v123
    %635 = vmatpush1.bf16.msra.mxu0 %v122
    %636 = vmatprep.subr.bf16.mxu0 0
    %637 = vmatpush1.bf16.msra.mxu0 0
    %638 = vmatprep.subr.bf16.mxu0 0
    %639 = vmatpush1.bf16.msra.mxu0 0
    %640 = vmatprep.subr.bf16.mxu0 0
    %641 = vmatpush1.bf16.msra.mxu0 0
    %642 = vmatprep.subr.bf16.mxu0 0
    %643 = vmatpush1.bf16.msra.mxu0 0
    %644 = vmatprep.subr.bf16.mxu0 0
    %645 = vmatpush1.bf16.msra.mxu0 0
    %646 = vmatprep.subr.bf16.mxu0 0
    %647 = vmatpush1.bf16.msra.mxu0 0
    %648 = vmatprep.subr.bf16.mxu0 0
    %649 = vmatpush1.bf16.msra.mxu0 0
    %650 = vmatprep.subr.bf16.mxu0 0
    %651 = vmatpush1.bf16.msra.mxu0 0
    %652 = vmatprep.subr.bf16.mxu0 0
    %653 = vmatpush1.bf16.msra.mxu0 0
    %654 = vmatprep.subr.bf16.mxu0 0
    %655 = vmatpush1.bf16.msra.mxu0 0
    %656 = vmatprep.subr.bf16.mxu0 0
    %657 = vmatpush1.bf16.msra.mxu0 0
    %658 = vmatprep.subr.bf16.mxu0 0
    %659 = vmatpush1.bf16.msra.mxu0 0
    %660 = vmatprep.subr.bf16.mxu0 0
    %661 = vmatpush1.bf16.msra.mxu0 0
    %662 = vmatprep.subr.bf16.mxu0 0
    %663 = vmatpush1.bf16.msra.mxu0 0
    %664 = vmatprep.subr.bf16.mxu0 0
    %665 = vmatpush1.bf16.msra.mxu0 0
    %666 = vmatprep.mubr.bf16.mxu0 0
    %667 = vmatmul.mubr.bf16.gmra.mrb[0].mxu0 %v626
    %v668 = vpop.f32.mrb[0].mxu0
    %v669 = vadd.f32 %v93, %v668
    %v670 = vpop.f32.mrb[0].mxu0
    %v671 = vadd.f32 %v94, %v670
    %v672 = vpop.f32.mrb[0].mxu0
    %v673 = vadd.f32 %v95, %v672
    %v674 = vpop.f32.mrb[0].mxu0
    %v675 = vadd.f32 %v96, %v674
    %676 = vmatprep.mubr.bf16.mxu0 0
    %677 = vmatmul.mubr.bf16.gmra.mrb[0].mxu0 %v629
    %v678 = vpop.f32.mrb[0].mxu0
    %v679 = vadd.f32 %v97, %v678
    %v680 = vpop.f32.mrb[0].mxu0
    %v681 = vadd.f32 %v98, %v680
    %v682 = vpop.f32.mrb[0].mxu0
    %v683 = vadd.f32 %v99, %v682
    %v684 = vpop.f32.mrb[0].mxu0
    %v685 = vadd.f32 %v100, %v684
    %686 = vmatprep.mubr.bf16.mxu0 0
    %687 = vmatmul.mubr.bf16.gmra.mrb[0].mxu0 %v632
    %v688 = vpop.f32.mrb[0].mxu0
    %v689 = vadd.f32 %v101, %v688
    %v690 = vpop.f32.mrb[0].mxu0
    %v691 = vadd.f32 %v102, %v690
    %v692 = vpop.f32.mrb[0].mxu0
    %v693 = vpop.f32.mrb[0].mxu0
    %694 = vdwg.mxu0
    %v700 = vunpack.c.l.b16 %v86
    %v701 = vunpack.c.l.b16 %v87
    %v702 = vunpack.c.l.b16 %v88
    %v703 = vunpack.c.l.b16 %v89
    %v704 = vunpack.c.l.b16 %v90
    %v705 = vpack.c.b16 %v701, %v700
    %v706 = vpack.c.b16 %v703, %v702
    %v707 = vpack.c.b16 %v704, %v704
    %v709 = vsel %vm126, %v705, 0
    %v712 = vsel %vm126, %v706, 0
    %v715 = vsel %vm126, %v707, 0
    %717 = vmatprep.subr.bf16.mxu0 %v123
    %718 = vmatpush1.bf16.msra.mxu0 %v122
    %719 = vmatprep.subr.bf16.mxu0 0
    %720 = vmatpush1.bf16.msra.mxu0 0
    %721 = vmatprep.subr.bf16.mxu0 0
    %722 = vmatpush1.bf16.msra.mxu0 0
    %723 = vmatprep.subr.bf16.mxu0 0
    %724 = vmatpush1.bf16.msra.mxu0 0
    %725 = vmatprep.subr.bf16.mxu0 0
    %726 = vmatpush1.bf16.msra.mxu0 0
    %727 = vmatprep.subr.bf16.mxu0 0
    %728 = vmatpush1.bf16.msra.mxu0 0
    %729 = vmatprep.subr.bf16.mxu0 0
    %730 = vmatpush1.bf16.msra.mxu0 0
    %731 = vmatprep.subr.bf16.mxu0 0
    %732 = vmatpush1.bf16.msra.mxu0 0
    %733 = vmatprep.subr.bf16.mxu0 0
    %734 = vmatpush1.bf16.msra.mxu0 0
    %735 = vmatprep.subr.bf16.mxu0 0
    %736 = vmatpush1.bf16.msra.mxu0 0
    %737 = vmatprep.subr.bf16.mxu0 0
    %738 = vmatpush1.bf16.msra.mxu0 0
    %739 = vmatprep.subr.bf16.mxu0 0
    %740 = vmatpush1.bf16.msra.mxu0 0
    %741 = vmatprep.subr.bf16.mxu0 0
    %742 = vmatpush1.bf16.msra.mxu0 0
    %743 = vmatprep.subr.bf16.mxu0 0
    %744 = vmatpush1.bf16.msra.mxu0 0
    %745 = vmatprep.subr.bf16.mxu0 0
    %746 = vmatpush1.bf16.msra.mxu0 0
    %747 = vmatprep.subr.bf16.mxu0 0
    %748 = vmatpush1.bf16.msra.mxu0 0
    %749 = vmatprep.mubr.bf16.mxu0 0
    %750 = vmatmul.mubr.bf16.gmra.mrb[0].mxu0 %v709
    %v751 = vpop.f32.mrb[0].mxu0
    %v752 = vadd.f32 %v93, %v751
    %v753 = vpop.f32.mrb[0].mxu0
    %v754 = vadd.f32 %v94, %v753
    %v755 = vpop.f32.mrb[0].mxu0
    %v756 = vadd.f32 %v95, %v755
    %v757 = vpop.f32.mrb[0].mxu0
    %v758 = vadd.f32 %v96, %v757
    %759 = vmatprep.mubr.bf16.mxu0 0
    %760 = vmatmul.mubr.bf16.gmra.mrb[0].mxu0 %v712
    %v761 = vpop.f32.mrb[0].mxu0
    %v762 = vadd.f32 %v97, %v761
    %v763 = vpop.f32.mrb[0].mxu0
    %v764 = vadd.f32 %v98, %v763
    %v765 = vpop.f32.mrb[0].mxu0
    %v766 = vadd.f32 %v99, %v765
    %v767 = vpop.f32.mrb[0].mxu0
    %v768 = vadd.f32 %v100, %v767
    %769 = vmatprep.mubr.bf16.mxu0 0
    %770 = vmatmul.mubr.bf16.gmra.mrb[0].mxu0 %v715
    %v771 = vpop.f32.mrb[0].mxu0
    %v772 = vadd.f32 %v101, %v771
    %v773 = vpop.f32.mrb[0].mxu0
    %v774 = vadd.f32 %v102, %v773
    %v775 = vpop.f32.mrb[0].mxu0
    %v776 = vpop.f32.mrb[0].mxu0
    %777 = vdwg.mxu0
    %v778 = vmax.f32 %v171, 0.0
    %v779 = vmax.f32 %v173, 0.0
    %v780 = vmax.f32 %v175, 0.0
    %v781 = vmax.f32 %v177, 0.0
    %v782 = vmax.f32 %v181, 0.0
    %v783 = vmax.f32 %v183, 0.0
    %v784 = vmax.f32 %v185, 0.0
    %v785 = vmax.f32 %v187, 0.0
    %v786 = vmax.f32 %v191, 0.0
    %v787 = vmax.f32 %v193, 0.0
    %v788 = vmax.f32 %v254, 0.0
    %v789 = vmax.f32 %v256, 0.0
    %v790 = vmax.f32 %v258, 0.0
    %v791 = vmax.f32 %v260, 0.0
    %v792 = vmax.f32 %v264, 0.0
    %v793 = vmax.f32 %v266, 0.0
    %v794 = vmax.f32 %v268, 0.0
    %v795 = vmax.f32 %v270, 0.0
    %v796 = vmax.f32 %v274, 0.0
    %v797 = vmax.f32 %v276, 0.0
    %v798 = vmax.f32 %v337, 0.0
    %v799 = vmax.f32 %v339, 0.0
    %v800 = vmax.f32 %v341, 0.0
    %v801 = vmax.f32 %v343, 0.0
    %v802 = vmax.f32 %v347, 0.0
    %v803 = vmax.f32 %v349, 0.0
    %v804 = vmax.f32 %v351, 0.0
    %v805 = vmax.f32 %v353, 0.0
    %v806 = vmax.f32 %v357, 0.0
    %v807 = vmax.f32 %v359, 0.0
    %v808 = vmax.f32 %v420, 0.0
    %v809 = vmax.f32 %v422, 0.0
    %v810 = vmax.f32 %v424, 0.0
    %v811 = vmax.f32 %v426, 0.0
    %v812 = vmax.f32 %v430, 0.0
    %v813 = vmax.f32 %v432, 0.0
    %v814 = vmax.f32 %v434, 0.0
    %v815 = vmax.f32 %v436, 0.0
    %v816 = vmax.f32 %v440, 0.0
    %v817 = vmax.f32 %v442, 0.0
    %v818 = vmax.f32 %v503, 0.0
    %v819 = vmax.f32 %v505, 0.0
    %v820 = vmax.f32 %v507, 0.0
    %v821 = vmax.f32 %v509, 0.0
    %v822 = vmax.f32 %v513, 0.0
    %v823 = vmax.f32 %v515, 0.0
    %v824 = vmax.f32 %v517, 0.0
    %v825 = vmax.f32 %v519, 0.0
    %v826 = vmax.f32 %v523, 0.0
    %v827 = vmax.f32 %v525, 0.0
    %v828 = vmax.f32 %v586, 0.0
    %v829 = vmax.f32 %v588, 0.0
    %v830 = vmax.f32 %v590, 0.0
    %v831 = vmax.f32 %v592, 0.0
    %v832 = vmax.f32 %v596, 0.0
    %v833 = vmax.f32 %v598, 0.0
    %v834 = vmax.f32 %v600, 0.0
    %v835 = vmax.f32 %v602, 0.0
    %v836 = vmax.f32 %v606, 0.0
    %v837 = vmax.f32 %v608, 0.0
    %v838 = vmax.f32 %v669, 0.0
    %v839 = vmax.f32 %v671, 0.0
    %v840 = vmax.f32 %v673, 0.0
    %v841 = vmax.f32 %v675, 0.0
    %v842 = vmax.f32 %v679, 0.0
    %v843 = vmax.f32 %v681, 0.0
    %v844 = vmax.f32 %v683, 0.0
    %v845 = vmax.f32 %v685, 0.0
    %v846 = vmax.f32 %v689, 0.0
    %v847 = vmax.f32 %v691, 0.0
    %v848 = vmax.f32 %v752, 0.0
    %v849 = vmax.f32 %v754, 0.0
    %v850 = vmax.f32 %v756, 0.0
    %v851 = vmax.f32 %v758, 0.0
    %v852 = vmax.f32 %v762, 0.0
    %v853 = vmax.f32 %v764, 0.0
    %v854 = vmax.f32 %v766, 0.0
    %v855 = vmax.f32 %v768, 0.0
    %v856 = vmax.f32 %v772, 0.0
    %v857 = vmax.f32 %v774, 0.0
    %v858 = vld [vmem:[%s2] sm:$0x1]
    %v859 = vld [vmem:[%s2 + $0x1] sm:$0x1]
    %v860 = vld [vmem:[%s2 + $0x2] sm:$0x1]
    %v861 = vld [vmem:[%s2 + $0x3] sm:$0x1]
    %v862 = vld [vmem:[%s2 + $0x4] sm:$0x1]
    %v863 = vld [vmem:[%s2 + $0x5] sm:$0x1]
    %v864 = vld [vmem:[%s2 + $0x6] sm:$0x1]
    %v865 = vld [vmem:[%s2 + $0x7] sm:$0x1]
    %v866 = vpack.c.bf16 %v780, %v778
    %v867 = vpack.c.bf16 %v781, %v779
    %v868 = vpack.c.bf16 %v784, %v782
    %v869 = vpack.c.bf16 %v785, %v783
    %v870 = vpack.c.bf16 %v786, %v786
    %v871 = vpack.c.bf16 %v787, %v787
    %v872 = vpack.c.bf16 %v790, %v788
    %v873 = vpack.c.bf16 %v791, %v789
    %v874 = vpack.c.bf16 %v794, %v792
    %v875 = vpack.c.bf16 %v795, %v793
    %v876 = vpack.c.bf16 %v796, %v796
    %v877 = vpack.c.bf16 %v797, %v797
    %v878 = vpack.c.bf16 %v800, %v798
    %v879 = vpack.c.bf16 %v801, %v799
    %v880 = vpack.c.bf16 %v804, %v802
    %v881 = vpack.c.bf16 %v805, %v803
    %v882 = vpack.c.bf16 %v806, %v806
    %v883 = vpack.c.bf16 %v807, %v807
    %v884 = vpack.c.bf16 %v810, %v808
    %v885 = vpack.c.bf16 %v811, %v809
    %v886 = vpack.c.bf16 %v814, %v812
    %v887 = vpack.c.bf16 %v815, %v813
    %v888 = vpack.c.bf16 %v816, %v816
    %v889 = vpack.c.bf16 %v817, %v817
    %v890 = vpack.c.bf16 %v820, %v818
    %v891 = vpack.c.bf16 %v821, %v819
    %v892 = vpack.c.bf16 %v824, %v822
    %v893 = vpack.c.bf16 %v825, %v823
    %v894 = vpack.c.bf16 %v826, %v826
    %v895 = vpack.c.bf16 %v827, %v827
    %v896 = vpack.c.bf16 %v830, %v828
    %v897 = vpack.c.bf16 %v831, %v829
    %v898 = vpack.c.bf16 %v834, %v832
    %v899 = vpack.c.bf16 %v835, %v833
    %v900 = vpack.c.bf16 %v836, %v836
    %v901 = vpack.c.bf16 %v837, %v837
    %v902 = vpack.c.bf16 %v840, %v838
    %v903 = vpack.c.bf16 %v841, %v839
    %v904 = vpack.c.bf16 %v844, %v842
    %v905 = vpack.c.bf16 %v845, %v843
    %v906 = vpack.c.bf16 %v846, %v846
    %v907 = vpack.c.bf16 %v847, %v847
    %v908 = vpack.c.bf16 %v850, %v848
    %v909 = vpack.c.bf16 %v851, %v849
    %v910 = vpack.c.bf16 %v854, %v852
    %v911 = vpack.c.bf16 %v855, %v853
    %v912 = vpack.c.bf16 %v856, %v856
    %v913 = vpack.c.bf16 %v857, %v857
    %vm914 = vcmask 326656
    %v916 = vsel %vm914, %v858, 0
    %vm918 = vcmask 1043456
    %v920 = vsel %vm918, %v870, 0
    %v923 = vsel %vm918, %v871, 0
    %925 = vmatprep.subr.bf16.mxu0 %v867
    %926 = vmatpush1.bf16.msra.mxu0 %v866
    %927 = vmatprep.subr.bf16.mxu0 %v869
    %928 = vmatpush1.bf16.msra.mxu0 %v868
    %929 = vmatprep.subr.bf16.mxu0 %v923
    %930 = vmatpush1.bf16.msra.mxu0 %v920
    %931 = vmatprep.subr.bf16.mxu0 0
    %932 = vmatpush1.bf16.msra.mxu0 0
    %933 = vmatprep.subr.bf16.mxu0 0
    %934 = vmatpush1.bf16.msra.mxu0 0
    %935 = vmatprep.subr.bf16.mxu0 0
    %936 = vmatpush1.bf16.msra.mxu0 0
    %937 = vmatprep.subr.bf16.mxu0 0
    %938 = vmatpush1.bf16.msra.mxu0 0
    %939 = vmatprep.subr.bf16.mxu0 0
    %940 = vmatpush1.bf16.msra.mxu0 0
    %941 = vmatprep.subr.bf16.mxu0 0
    %942 = vmatpush1.bf16.msra.mxu0 0
    %943 = vmatprep.subr.bf16.mxu0 0
    %944 = vmatpush1.bf16.msra.mxu0 0
    %945 = vmatprep.subr.bf16.mxu0 0
    %946 = vmatpush1.bf16.msra.mxu0 0
    %947 = vmatprep.subr.bf16.mxu0 0
    %948 = vmatpush1.bf16.msra.mxu0 0
    %949 = vmatprep.subr.bf16.mxu0 0
    %950 = vmatpush1.bf16.msra.mxu0 0
    %951 = vmatprep.subr.bf16.mxu0 0
    %952 = vmatpush1.bf16.msra.mxu0 0
    %953 = vmatprep.subr.bf16.mxu0 0
    %954 = vmatpush1.bf16.msra.mxu0 0
    %955 = vmatprep.subr.bf16.mxu0 0
    %956 = vmatpush1.bf16.msra.mxu0 0
    %957 = vmatprep.mubr.bf16.mxu0 0
    %958 = vmatmul.mubr.bf16.gmra.mrb[0].mxu0 %v916
    %v959 = vpop.f32.mrb[0].mxu0
    %v960 = vadd.f32 0.0, %v959
    %v961 = vpop.f32.mrb[0].mxu0
    %v962 = vadd.f32 0.0, %v961
    %v963 = vpop.f32.mrb[0].mxu0
    %v964 = vpop.f32.mrb[0].mxu0
    %965 = vdwg.mxu0
    %v967 = vsel %vm914, %v859, 0
    %v970 = vsel %vm918, %v876, 0
    %v973 = vsel %vm918, %v877, 0
    %975 = vmatprep.subr.bf16.mxu0 %v873
    %976 = vmatpush1.bf16.msra.mxu0 %v872
    %977 = vmatprep.subr.bf16.mxu0 %v875
    %978 = vmatpush1.bf16.msra.mxu0 %v874
    %979 = vmatprep.subr.bf16.mxu0 %v973
    %980 = vmatpush1.bf16.msra.mxu0 %v970
    %981 = vmatprep.subr.bf16.mxu0 0
    %982 = vmatpush1.bf16.msra.mxu0 0
    %983 = vmatprep.subr.bf16.mxu0 0
    %984 = vmatpush1.bf16.msra.mxu0 0
    %985 = vmatprep.subr.bf16.mxu0 0
    %986 = vmatpush1.bf16.msra.mxu0 0
    %987 = vmatprep.subr.bf16.mxu0 0
    %988 = vmatpush1.bf16.msra.mxu0 0
    %989 = vmatprep.subr.bf16.mxu0 0
    %990 = vmatpush1.bf16.msra.mxu0 0
    %991 = vmatprep.subr.bf16.mxu0 0
    %992 = vmatpush1.bf16.msra.mxu0 0
    %993 = vmatprep.subr.bf16.mxu0 0
    %994 = vmatpush1.bf16.msra.mxu0 0
    %995 = vmatprep.subr.bf16.mxu0 0
    %996 = vmatpush1.bf16.msra.mxu0 0
    %997 = vmatprep.subr.bf16.mxu0 0
    %998 = vmatpush1.bf16.msra.mxu0 0
    %999 = vmatprep.subr.bf16.mxu0 0
    %1000 = vmatpush1.bf16.msra.mxu0 0
    %1001 = vmatprep.subr.bf16.mxu0 0
    %1002 = vmatpush1.bf16.msra.mxu0 0
    %1003 = vmatprep.subr.bf16.mxu0 0
    %1004 = vmatpush1.bf16.msra.mxu0 0
    %1005 = vmatprep.subr.bf16.mxu0 0
    %1006 = vmatpush1.bf16.msra.mxu0 0
    %1007 = vmatprep.mubr.bf16.mxu0 0
    %1008 = vmatmul.mubr.bf16.gmra.mrb[0].mxu0 %v967
    %v1009 = vpop.f32.mrb[0].mxu0
    %v1010 = vadd.f32 0.0, %v1009
    %v1011 = vpop.f32.mrb[0].mxu0
    %v1012 = vadd.f32 0.0, %v1011
    %v1013 = vpop.f32.mrb[0].mxu0
    %v1014 = vpop.f32.mrb[0].mxu0
    %1015 = vdwg.mxu0
    %v1017 = vsel %vm914, %v860, 0
    %v1020 = vsel %vm918, %v882, 0
    %v1023 = vsel %vm918, %v883, 0
    %1025 = vmatprep.subr.bf16.mxu0 %v879
    %1026 = vmatpush1.bf16.msra.mxu0 %v878
    %1027 = vmatprep.subr.bf16.mxu0 %v881
    %1028 = vmatpush1.bf16.msra.mxu0 %v880
    %1029 = vmatprep.subr.bf16.mxu0 %v1023
    %1030 = vmatpush1.bf16.msra.mxu0 %v1020
    %1031 = vmatprep.subr.bf16.mxu0 0
    %1032 = vmatpush1.bf16.msra.mxu0 0
    %1033 = vmatprep.subr.bf16.mxu0 0
    %1034 = vmatpush1.bf16.msra.mxu0 0
    %1035 = vmatprep.subr.bf16.mxu0 0
    %1036 = vmatpush1.bf16.msra.mxu0 0
    %1037 = vmatprep.subr.bf16.mxu0 0
    %1038 = vmatpush1.bf16.msra.mxu0 0
    %1039 = vmatprep.subr.bf16.mxu0 0
    %1040 = vmatpush1.bf16.msra.mxu0 0
    %1041 = vmatprep.subr.bf16.mxu0 0
    %1042 = vmatpush1.bf16.msra.mxu0 0
    %1043 = vmatprep.subr.bf16.mxu0 0
    %1044 = vmatpush1.bf16.msra.mxu0 0
    %1045 = vmatprep.subr.bf16.mxu0 0
    %1046 = vmatpush1.bf16.msra.mxu0 0
    %1047 = vmatprep.subr.bf16.mxu0 0
    %1048 = vmatpush1.bf16.msra.mxu0 0
    %1049 = vmatprep.subr.bf16.mxu0 0
    %1050 = vmatpush1.bf16.msra.mxu0 0
    %1051 = vmatprep.subr.bf16.mxu0 0
    %1052 = vmatpush1.bf16.msra.mxu0 0
    %1053 = vmatprep.subr.bf16.mxu0 0
    %1054 = vmatpush1.bf16.msra.mxu0 0
    %1055 = vmatprep.subr.bf16.mxu0 0
    %1056 = vmatpush1.bf16.msra.mxu0 0
    %1057 = vmatprep.mubr.bf16.mxu0 0
    %1058 = vmatmul.mubr.bf16.gmra.mrb[0].mxu0 %v1017
    %v1059 = vpop.f32.mrb[0].mxu0
    %v1060 = vadd.f32 0.0, %v1059
    %v1061 = vpop.f32.mrb[0].mxu0
    %v1062 = vadd.f32 0.0, %v1061
    %v1063 = vpop.f32.mrb[0].mxu0
    %v1064 = vpop.f32.mrb[0].mxu0
    %1065 = vdwg.mxu0
    %v1067 = vsel %vm914, %v861, 0
    %v1070 = vsel %vm918, %v888, 0
    %v1073 = vsel %vm918, %v889, 0
    %1075 = vmatprep.subr.bf16.mxu0 %v885
    %1076 = vmatpush1.bf16.msra.mxu0 %v884
    %1077 = vmatprep.subr.bf16.mxu0 %v887
    %1078 = vmatpush1.bf16.msra.mxu0 %v886
    %1079 = vmatprep.subr.bf16.mxu0 %v1073
    %1080 = vmatpush1.bf16.msra.mxu0 %v1070
    %1081 = vmatprep.subr.bf16.mxu0 0
    %1082 = vmatpush1.bf16.msra.mxu0 0
    %1083 = vmatprep.subr.bf16.mxu0 0
    %1084 = vmatpush1.bf16.msra.mxu0 0
    %1085 = vmatprep.subr.bf16.mxu0 0
    %1086 = vmatpush1.bf16.msra.mxu0 0
    %1087 = vmatprep.subr.bf16.mxu0 0
    %1088 = vmatpush1.bf16.msra.mxu0 0
    %1089 = vmatprep.subr.bf16.mxu0 0
    %1090 = vmatpush1.bf16.msra.mxu0 0
    %1091 = vmatprep.subr.bf16.mxu0 0
    %1092 = vmatpush1.bf16.msra.mxu0 0
    %1093 = vmatprep.subr.bf16.mxu0 0
    %1094 = vmatpush1.bf16.msra.mxu0 0
    %1095 = vmatprep.subr.bf16.mxu0 0
    %1096 = vmatpush1.bf16.msra.mxu0 0
    %1097 = vmatprep.subr.bf16.mxu0 0
    %1098 = vmatpush1.bf16.msra.mxu0 0
    %1099 = vmatprep.subr.bf16.mxu0 0
    %1100 = vmatpush1.bf16.msra.mxu0 0
    %1101 = vmatprep.subr.bf16.mxu0 0
    %1102 = vmatpush1.bf16.msra.mxu0 0
    %1103 = vmatprep.subr.bf16.mxu0 0
    %1104 = vmatpush1.bf16.msra.mxu0 0
    %1105 = vmatprep.subr.bf16.mxu0 0
    %1106 = vmatpush1.bf16.msra.mxu0 0
    %1107 = vmatprep.mubr.bf16.mxu0 0
    %1108 = vmatmul.mubr.bf16.gmra.mrb[0].mxu0 %v1067
    %v1109 = vpop.f32.mrb[0].mxu0
    %v1110 = vadd.f32 0.0, %v1109
    %v1111 = vpop.f32.mrb[0].mxu0
    %v1112 = vadd.f32 0.0, %v1111
    %v1113 = vpop.f32.mrb[0].mxu0
    %v1114 = vpop.f32.mrb[0].mxu0
    %1115 = vdwg.mxu0
    %v1117 = vsel %vm914, %v862, 0
    %v1120 = vsel %vm918, %v894, 0
    %v1123 = vsel %vm918, %v895, 0
    %1125 = vmatprep.subr.bf16.mxu0 %v891
    %1126 = vmatpush1.bf16.msra.mxu0 %v890
    %1127 = vmatprep.subr.bf16.mxu0 %v893
    %1128 = vmatpush1.bf16.msra.mxu0 %v892
    %1129 = vmatprep.subr.bf16.mxu0 %v1123
    %1130 = vmatpush1.bf16.msra.mxu0 %v1120
    %1131 = vmatprep.subr.bf16.mxu0 0
    %1132 = vmatpush1.bf16.msra.mxu0 0
    %1133 = vmatprep.subr.bf16.mxu0 0
    %1134 = vmatpush1.bf16.msra.mxu0 0
    %1135 = vmatprep.subr.bf16.mxu0 0
    %1136 = vmatpush1.bf16.msra.mxu0 0
    %1137 = vmatprep.subr.bf16.mxu0 0
    %1138 = vmatpush1.bf16.msra.mxu0 0
    %1139 = vmatprep.subr.bf16.mxu0 0
    %1140 = vmatpush1.bf16.msra.mxu0 0
    %1141 = vmatprep.subr.bf16.mxu0 0
    %1142 = vmatpush1.bf16.msra.mxu0 0
    %1143 = vmatprep.subr.bf16.mxu0 0
    %1144 = vmatpush1.bf16.msra.mxu0 0
    %1145 = vmatprep.subr.bf16.mxu0 0
    %1146 = vmatpush1.bf16.msra.mxu0 0
    %1147 = vmatprep.subr.bf16.mxu0 0
    %1148 = vmatpush1.bf16.msra.mxu0 0
    %1149 = vmatprep.subr.bf16.mxu0 0
    %1150 = vmatpush1.bf16.msra.mxu0 0
    %1151 = vmatprep.subr.bf16.mxu0 0
    %1152 = vmatpush1.bf16.msra.mxu0 0
    %1153 = vmatprep.subr.bf16.mxu0 0
    %1154 = vmatpush1.bf16.msra.mxu0 0
    %1155 = vmatprep.subr.bf16.mxu0 0
    %1156 = vmatpush1.bf16.msra.mxu0 0
    %1157 = vmatprep.mubr.bf16.mxu0 0
    %1158 = vmatmul.mubr.bf16.gmra.mrb[0].mxu0 %v1117
    %v1159 = vpop.f32.mrb[0].mxu0
    %v1160 = vadd.f32 0.0, %v1159
    %v1161 = vpop.f32.mrb[0].mxu0
    %v1162 = vadd.f32 0.0, %v1161
    %v1163 = vpop.f32.mrb[0].mxu0
    %v1164 = vpop.f32.mrb[0].mxu0
    %1165 = vdwg.mxu0
    %v1167 = vsel %vm914, %v863, 0
    %v1170 = vsel %vm918, %v900, 0
    %v1173 = vsel %vm918, %v901, 0
    %1175 = vmatprep.subr.bf16.mxu0 %v897
    %1176 = vmatpush1.bf16.msra.mxu0 %v896
    %1177 = vmatprep.subr.bf16.mxu0 %v899
    %1178 = vmatpush1.bf16.msra.mxu0 %v898
    %1179 = vmatprep.subr.bf16.mxu0 %v1173
    %1180 = vmatpush1.bf16.msra.mxu0 %v1170
    %1181 = vmatprep.subr.bf16.mxu0 0
    %1182 = vmatpush1.bf16.msra.mxu0 0
    %1183 = vmatprep.subr.bf16.mxu0 0
    %1184 = vmatpush1.bf16.msra.mxu0 0
    %1185 = vmatprep.subr.bf16.mxu0 0
    %1186 = vmatpush1.bf16.msra.mxu0 0
    %1187 = vmatprep.subr.bf16.mxu0 0
    %1188 = vmatpush1.bf16.msra.mxu0 0
    %1189 = vmatprep.subr.bf16.mxu0 0
    %1190 = vmatpush1.bf16.msra.mxu0 0
    %1191 = vmatprep.subr.bf16.mxu0 0
    %1192 = vmatpush1.bf16.msra.mxu0 0
    %1193 = vmatprep.subr.bf16.mxu0 0
    %1194 = vmatpush1.bf16.msra.mxu0 0
    %1195 = vmatprep.subr.bf16.mxu0 0
    %1196 = vmatpush1.bf16.msra.mxu0 0
    %1197 = vmatprep.subr.bf16.mxu0 0
    %1198 = vmatpush1.bf16.msra.mxu0 0
    %1199 = vmatprep.subr.bf16.mxu0 0
    %1200 = vmatpush1.bf16.msra.mxu0 0
    %1201 = vmatprep.subr.bf16.mxu0 0
    %1202 = vmatpush1.bf16.msra.mxu0 0
    %1203 = vmatprep.subr.bf16.mxu0 0
    %1204 = vmatpush1.bf16.msra.mxu0 0
    %1205 = vmatprep.subr.bf16.mxu0 0
    %1206 = vmatpush1.bf16.msra.mxu0 0
    %1207 = vmatprep.mubr.bf16.mxu0 0
    %1208 = vmatmul.mubr.bf16.gmra.mrb[0].mxu0 %v1167
    %v1209 = vpop.f32.mrb[0].mxu0
    %v1210 = vadd.f32 0.0, %v1209
    %v1211 = vpop.f32.mrb[0].mxu0
    %v1212 = vadd.f32 0.0, %v1211
    %v1213 = vpop.f32.mrb[0].mxu0
    %v1214 = vpop.f32.mrb[0].mxu0
    %1215 = vdwg.mxu0
    %v1217 = vsel %vm914, %v864, 0
    %v1220 = vsel %vm918, %v906, 0
    %v1223 = vsel %vm918, %v907, 0
    %1225 = vmatprep.subr.bf16.mxu0 %v903
    %1226 = vmatpush1.bf16.msra.mxu0 %v902
    %1227 = vmatprep.subr.bf16.mxu0 %v905
    %1228 = vmatpush1.bf16.msra.mxu0 %v904
    %1229 = vmatprep.subr.bf16.mxu0 %v1223
    %1230 = vmatpush1.bf16.msra.mxu0 %v1220
    %1231 = vmatprep.subr.bf16.mxu0 0
    %1232 = vmatpush1.bf16.msra.mxu0 0
    %1233 = vmatprep.subr.bf16.mxu0 0
    %1234 = vmatpush1.bf16.msra.mxu0 0
    %1235 = vmatprep.subr.bf16.mxu0 0
    %1236 = vmatpush1.bf16.msra.mxu0 0
    %1237 = vmatprep.subr.bf16.mxu0 0
    %1238 = vmatpush1.bf16.msra.mxu0 0
    %1239 = vmatprep.subr.bf16.mxu0 0
    %1240 = vmatpush1.bf16.msra.mxu0 0
    %1241 = vmatprep.subr.bf16.mxu0 0
    %1242 = vmatpush1.bf16.msra.mxu0 0
    %1243 = vmatprep.subr.bf16.mxu0 0
    %1244 = vmatpush1.bf16.msra.mxu0 0
    %1245 = vmatprep.subr.bf16.mxu0 0
    %1246 = vmatpush1.bf16.msra.mxu0 0
    %1247 = vmatprep.subr.bf16.mxu0 0
    %1248 = vmatpush1.bf16.msra.mxu0 0
    %1249 = vmatprep.subr.bf16.mxu0 0
    %1250 = vmatpush1.bf16.msra.mxu0 0
    %1251 = vmatprep.subr.bf16.mxu0 0
    %1252 = vmatpush1.bf16.msra.mxu0 0
    %1253 = vmatprep.subr.bf16.mxu0 0
    %1254 = vmatpush1.bf16.msra.mxu0 0
    %1255 = vmatprep.subr.bf16.mxu0 0
    %1256 = vmatpush1.bf16.msra.mxu0 0
    %1257 = vmatprep.mubr.bf16.mxu0 0
    %1258 = vmatmul.mubr.bf16.gmra.mrb[0].mxu0 %v1217
    %v1259 = vpop.f32.mrb[0].mxu0
    %v1260 = vadd.f32 0.0, %v1259
    %v1261 = vpop.f32.mrb[0].mxu0
    %v1262 = vadd.f32 0.0, %v1261
    %v1263 = vpop.f32.mrb[0].mxu0
    %v1264 = vpop.f32.mrb[0].mxu0
    %1265 = vdwg.mxu0
    %v1267 = vsel %vm914, %v865, 0
    %v1270 = vsel %vm918, %v912, 0
    %v1273 = vsel %vm918, %v913, 0
    %1275 = vmatprep.subr.bf16.mxu0 %v909
    %1276 = vmatpush1.bf16.msra.mxu0 %v908
    %1277 = vmatprep.subr.bf16.mxu0 %v911
    %1278 = vmatpush1.bf16.msra.mxu0 %v910
    %1279 = vmatprep.subr.bf16.mxu0 %v1273
    %1280 = vmatpush1.bf16.msra.mxu0 %v1270
    %1281 = vmatprep.subr.bf16.mxu0 0
    %1282 = vmatpush1.bf16.msra.mxu0 0
    %1283 = vmatprep.subr.bf16.mxu0 0
    %1284 = vmatpush1.bf16.msra.mxu0 0
    %1285 = vmatprep.subr.bf16.mxu0 0
    %1286 = vmatpush1.bf16.msra.mxu0 0
    %1287 = vmatprep.subr.bf16.mxu0 0
    %1288 = vmatpush1.bf16.msra.mxu0 0
    %1289 = vmatprep.subr.bf16.mxu0 0
    %1290 = vmatpush1.bf16.msra.mxu0 0
    %1291 = vmatprep.subr.bf16.mxu0 0
    %1292 = vmatpush1.bf16.msra.mxu0 0
    %1293 = vmatprep.subr.bf16.mxu0 0
    %1294 = vmatpush1.bf16.msra.mxu0 0
    %1295 = vmatprep.subr.bf16.mxu0 0
    %1296 = vmatpush1.bf16.msra.mxu0 0
    %1297 = vmatprep.subr.bf16.mxu0 0
    %1298 = vmatpush1.bf16.msra.mxu0 0
    %1299 = vmatprep.subr.bf16.mxu0 0
    %1300 = vmatpush1.bf16.msra.mxu0 0
    %1301 = vmatprep.subr.bf16.mxu0 0
    %1302 = vmatpush1.bf16.msra.mxu0 0
    %1303 = vmatprep.subr.bf16.mxu0 0
    %1304 = vmatpush1.bf16.msra.mxu0 0
    %1305 = vmatprep.subr.bf16.mxu0 0
    %1306 = vmatpush1.bf16.msra.mxu0 0
    %1307 = vmatprep.mubr.bf16.mxu0 0
    %1308 = vmatmul.mubr.bf16.gmra.mrb[0].mxu0 %v1267
    %v1309 = vpop.f32.mrb[0].mxu0
    %v1310 = vadd.f32 0.0, %v1309
    %v1311 = vpop.f32.mrb[0].mxu0
    %v1312 = vadd.f32 0.0, %v1311
    %v1313 = vpop.f32.mrb[0].mxu0
    %v1314 = vpop.f32.mrb[0].mxu0
    %1315 = vdwg.mxu0
    %v1316 = vld [vmem:[%s0] sm:$0x1]
    %v1317 = vld [vmem:[%s0 + $0x1] sm:$0x1]
    %v1318 = vld [vmem:[%s0 + $0x2] sm:$0x1]
    %v1319 = vld [vmem:[%s0 + $0x3] sm:$0x1]
    %v1320 = vld [vmem:[%s0 + $0x4] sm:$0x1]
    %v1321 = vld [vmem:[%s0 + $0x5] sm:$0x1]
    %v1322 = vld [vmem:[%s0 + $0x6] sm:$0x1]
    %v1323 = vld [vmem:[%s0 + $0x7] sm:$0x1]
    %v1324 = vld [vmem:[%s5] sm:$0x3]
    %v1325 = vld [vmem:[%s6] sm:$0x1]
    %v1327 = vlaneseq
    %v1328 = vshrl.u32 %v1327, 7
    %v1329 = vsub.s32 0, %v1328
    %v1330 = vrot.slane %v1325, %v1329
    %vm1332 = vcmask 31744
    %v1334 = vsel %vm1332, %v1316, 0
    %vm1336 = vcmask 1041408
    %v1338 = vsel %vm1336, %v1324, 0
    %1340 = vmatprep.subr.bf16.mxu0 0
    %1341 = vmatpush1.bf16.msra.mxu0 %v1338
    %1342 = vmatprep.subr.bf16.mxu0 0
    %1343 = vmatpush1.bf16.msra.mxu0 0
    %1344 = vmatprep.subr.bf16.mxu0 0
    %1345 = vmatpush1.bf16.msra.mxu0 0
    %1346 = vmatprep.subr.bf16.mxu0 0
    %1347 = vmatpush1.bf16.msra.mxu0 0
    %1348 = vmatprep.subr.bf16.mxu0 0
    %1349 = vmatpush1.bf16.msra.mxu0 0
    %1350 = vmatprep.subr.bf16.mxu0 0
    %1351 = vmatpush1.bf16.msra.mxu0 0
    %1352 = vmatprep.subr.bf16.mxu0 0
    %1353 = vmatpush1.bf16.msra.mxu0 0
    %1354 = vmatprep.subr.bf16.mxu0 0
    %1355 = vmatpush1.bf16.msra.mxu0 0
    %1356 = vmatprep.subr.bf16.mxu0 0
    %1357 = vmatpush1.bf16.msra.mxu0 0
    %1358 = vmatprep.subr.bf16.mxu0 0
    %1359 = vmatpush1.bf16.msra.mxu0 0
    %1360 = vmatprep.subr.bf16.mxu0 0
    %1361 = vmatpush1.bf16.msra.mxu0 0
    %1362 = vmatprep.subr.bf16.mxu0 0
    %1363 = vmatpush1.bf16.msra.mxu0 0
    %1364 = vmatprep.subr.bf16.mxu0 0
    %1365 = vmatpush1.bf16.msra.mxu0 0
    %1366 = vmatprep.subr.bf16.mxu0 0
    %1367 = vmatpush1.bf16.msra.mxu0 0
    %1368 = vmatprep.subr.bf16.mxu0 0
    %1369 = vmatpush1.bf16.msra.mxu0 0
    %1370 = vmatprep.subr.bf16.mxu0 0
    %1371 = vmatpush1.bf16.msra.mxu0 0
    %1372 = vmatprep.mubr.bf16.mxu0 0
    %1373 = vmatmul.mubr.bf16.gmra.mrb[0].mxu0 %v1334
    %v1374 = vpop.f32.mrb[0].mxu0
    %v1375 = vadd.f32 %v1330, %v1374
    %v1376 = vpop.f32.mrb[0].mxu0
    %v1377 = vpop.f32.mrb[0].mxu0
    %v1378 = vpop.f32.mrb[0].mxu0
    %1379 = vdwg.mxu0
    %v1381 = vsel %vm1332, %v1317, 0
    %1383 = vmatprep.subr.bf16.mxu0 0
    %1384 = vmatpush1.bf16.msra.mxu0 %v1338
    %1385 = vmatprep.subr.bf16.mxu0 0
    %1386 = vmatpush1.bf16.msra.mxu0 0
    %1387 = vmatprep.subr.bf16.mxu0 0
    %1388 = vmatpush1.bf16.msra.mxu0 0
    %1389 = vmatprep.subr.bf16.mxu0 0
    %1390 = vmatpush1.bf16.msra.mxu0 0
    %1391 = vmatprep.subr.bf16.mxu0 0
    %1392 = vmatpush1.bf16.msra.mxu0 0
    %1393 = vmatprep.subr.bf16.mxu0 0
    %1394 = vmatpush1.bf16.msra.mxu0 0
    %1395 = vmatprep.subr.bf16.mxu0 0
    %1396 = vmatpush1.bf16.msra.mxu0 0
    %1397 = vmatprep.subr.bf16.mxu0 0
    %1398 = vmatpush1.bf16.msra.mxu0 0
    %1399 = vmatprep.subr.bf16.mxu0 0
    %1400 = vmatpush1.bf16.msra.mxu0 0
    %1401 = vmatprep.subr.bf16.mxu0 0
    %1402 = vmatpush1.bf16.msra.mxu0 0
    %1403 = vmatprep.subr.bf16.mxu0 0
    %1404 = vmatpush1.bf16.msra.mxu0 0
    %1405 = vmatprep.subr.bf16.mxu0 0
    %1406 = vmatpush1.bf16.msra.mxu0 0
    %1407 = vmatprep.subr.bf16.mxu0 0
    %1408 = vmatpush1.bf16.msra.mxu0 0
    %1409 = vmatprep.subr.bf16.mxu0 0
    %1410 = vmatpush1.bf16.msra.mxu0 0
    %1411 = vmatprep.subr.bf16.mxu0 0
    %1412 = vmatpush1.bf16.msra.mxu0 0
    %1413 = vmatprep.subr.bf16.mxu0 0
    %1414 = vmatpush1.bf16.msra.mxu0 0
    %1415 = vmatprep.mubr.bf16.mxu0 0
    %1416 = vmatmul.mubr.bf16.gmra.mrb[0].mxu0 %v1381
    %v1417 = vpop.f32.mrb[0].mxu0
    %v1418 = vadd.f32 %v1330, %v1417
    %v1419 = vpop.f32.mrb[0].mxu0
    %v1420 = vpop.f32.mrb[0].mxu0
    %v1421 = vpop.f32.mrb[0].mxu0
    %1422 = vdwg.mxu0
    %v1424 = vsel %vm1332, %v1318, 0
    %1426 = vmatprep.subr.bf16.mxu0 0
    %1427 = vmatpush1.bf16.msra.mxu0 %v1338
    %1428 = vmatprep.subr.bf16.mxu0 0
    %1429 = vmatpush1.bf16.msra.mxu0 0
    %1430 = vmatprep.subr.bf16.mxu0 0
    %1431 = vmatpush1.bf16.msra.mxu0 0
    %1432 = vmatprep.subr.bf16.mxu0 0
    %1433 = vmatpush1.bf16.msra.mxu0 0
    %1434 = vmatprep.subr.bf16.mxu0 0
    %1435 = vmatpush1.bf16.msra.mxu0 0
    %1436 = vmatprep.subr.bf16.mxu0 0
    %1437 = vmatpush1.bf16.msra.mxu0 0
    %1438 = vmatprep.subr.bf16.mxu0 0
    %1439 = vmatpush1.bf16.msra.mxu0 0
    %1440 = vmatprep.subr.bf16.mxu0 0
    %1441 = vmatpush1.bf16.msra.mxu0 0
    %1442 = vmatprep.subr.bf16.mxu0 0
    %1443 = vmatpush1.bf16.msra.mxu0 0
    %1444 = vmatprep.subr.bf16.mxu0 0
    %1445 = vmatpush1.bf16.msra.mxu0 0
    %1446 = vmatprep.subr.bf16.mxu0 0
    %1447 = vmatpush1.bf16.msra.mxu0 0
    %1448 = vmatprep.subr.bf16.mxu0 0
    %1449 = vmatpush1.bf16.msra.mxu0 0
    %1450 = vmatprep.subr.bf16.mxu0 0
    %1451 = vmatpush1.bf16.msra.mxu0 0
    %1452 = vmatprep.subr.bf16.mxu0 0
    %1453 = vmatpush1.bf16.msra.mxu0 0
    %1454 = vmatprep.subr.bf16.mxu0 0
    %1455 = vmatpush1.bf16.msra.mxu0 0
    %1456 = vmatprep.subr.bf16.mxu0 0
    %1457 = vmatpush1.bf16.msra.mxu0 0
    %1458 = vmatprep.mubr.bf16.mxu0 0
    %1459 = vmatmul.mubr.bf16.gmra.mrb[0].mxu0 %v1424
    %v1460 = vpop.f32.mrb[0].mxu0
    %v1461 = vadd.f32 %v1330, %v1460
    %v1462 = vpop.f32.mrb[0].mxu0
    %v1463 = vpop.f32.mrb[0].mxu0
    %v1464 = vpop.f32.mrb[0].mxu0
    %1465 = vdwg.mxu0
    %v1467 = vsel %vm1332, %v1319, 0
    %1469 = vmatprep.subr.bf16.mxu0 0
    %1470 = vmatpush1.bf16.msra.mxu0 %v1338
    %1471 = vmatprep.subr.bf16.mxu0 0
    %1472 = vmatpush1.bf16.msra.mxu0 0
    %1473 = vmatprep.subr.bf16.mxu0 0
    %1474 = vmatpush1.bf16.msra.mxu0 0
    %1475 = vmatprep.subr.bf16.mxu0 0
    %1476 = vmatpush1.bf16.msra.mxu0 0
    %1477 = vmatprep.subr.bf16.mxu0 0
    %1478 = vmatpush1.bf16.msra.mxu0 0
    %1479 = vmatprep.subr.bf16.mxu0 0
    %1480 = vmatpush1.bf16.msra.mxu0 0
    %1481 = vmatprep.subr.bf16.mxu0 0
    %1482 = vmatpush1.bf16.msra.mxu0 0
    %1483 = vmatprep.subr.bf16.mxu0 0
    %1484 = vmatpush1.bf16.msra.mxu0 0
    %1485 = vmatprep.subr.bf16.mxu0 0
    %1486 = vmatpush1.bf16.msra.mxu0 0
    %1487 = vmatprep.subr.bf16.mxu0 0
    %1488 = vmatpush1.bf16.msra.mxu0 0
    %1489 = vmatprep.subr.bf16.mxu0 0
    %1490 = vmatpush1.bf16.msra.mxu0 0
    %1491 = vmatprep.subr.bf16.mxu0 0
    %1492 = vmatpush1.bf16.msra.mxu0 0
    %1493 = vmatprep.subr.bf16.mxu0 0
    %1494 = vmatpush1.bf16.msra.mxu0 0
    %1495 = vmatprep.subr.bf16.mxu0 0
    %1496 = vmatpush1.bf16.msra.mxu0 0
    %1497 = vmatprep.subr.bf16.mxu0 0
    %1498 = vmatpush1.bf16.msra.mxu0 0
    %1499 = vmatprep.subr.bf16.mxu0 0
    %1500 = vmatpush1.bf16.msra.mxu0 0
    %1501 = vmatprep.mubr.bf16.mxu0 0
    %1502 = vmatmul.mubr.bf16.gmra.mrb[0].mxu0 %v1467
    %v1503 = vpop.f32.mrb[0].mxu0
    %v1504 = vadd.f32 %v1330, %v1503
    %v1505 = vpop.f32.mrb[0].mxu0
    %v1506 = vpop.f32.mrb[0].mxu0
    %v1507 = vpop.f32.mrb[0].mxu0
    %1508 = vdwg.mxu0
    %v1510 = vsel %vm1332, %v1320, 0
    %1512 = vmatprep.subr.bf16.mxu0 0
    %1513 = vmatpush1.bf16.msra.mxu0 %v1338
    %1514 = vmatprep.subr.bf16.mxu0 0
    %1515 = vmatpush1.bf16.msra.mxu0 0
    %1516 = vmatprep.subr.bf16.mxu0 0
    %1517 = vmatpush1.bf16.msra.mxu0 0
    %1518 = vmatprep.subr.bf16.mxu0 0
    %1519 = vmatpush1.bf16.msra.mxu0 0
    %1520 = vmatprep.subr.bf16.mxu0 0
    %1521 = vmatpush1.bf16.msra.mxu0 0
    %1522 = vmatprep.subr.bf16.mxu0 0
    %1523 = vmatpush1.bf16.msra.mxu0 0
    %1524 = vmatprep.subr.bf16.mxu0 0
    %1525 = vmatpush1.bf16.msra.mxu0 0
    %1526 = vmatprep.subr.bf16.mxu0 0
    %1527 = vmatpush1.bf16.msra.mxu0 0
    %1528 = vmatprep.subr.bf16.mxu0 0
    %1529 = vmatpush1.bf16.msra.mxu0 0
    %1530 = vmatprep.subr.bf16.mxu0 0
    %1531 = vmatpush1.bf16.msra.mxu0 0
    %1532 = vmatprep.subr.bf16.mxu0 0
    %1533 = vmatpush1.bf16.msra.mxu0 0
    %1534 = vmatprep.subr.bf16.mxu0 0
    %1535 = vmatpush1.bf16.msra.mxu0 0
    %1536 = vmatprep.subr.bf16.mxu0 0
    %1537 = vmatpush1.bf16.msra.mxu0 0
    %1538 = vmatprep.subr.bf16.mxu0 0
    %1539 = vmatpush1.bf16.msra.mxu0 0
    %1540 = vmatprep.subr.bf16.mxu0 0
    %1541 = vmatpush1.bf16.msra.mxu0 0
    %1542 = vmatprep.subr.bf16.mxu0 0
    %1543 = vmatpush1.bf16.msra.mxu0 0
    %1544 = vmatprep.mubr.bf16.mxu0 0
    %1545 = vmatmul.mubr.bf16.gmra.mrb[0].mxu0 %v1510
    %v1546 = vpop.f32.mrb[0].mxu0
    %v1547 = vadd.f32 %v1330, %v1546
    %v1548 = vpop.f32.mrb[0].mxu0
    %v1549 = vpop.f32.mrb[0].mxu0
    %v1550 = vpop.f32.mrb[0].mxu0
    %1551 = vdwg.mxu0
    %v1553 = vsel %vm1332, %v1321, 0
    %1555 = vmatprep.subr.bf16.mxu0 0
    %1556 = vmatpush1.bf16.msra.mxu0 %v1338
    %1557 = vmatprep.subr.bf16.mxu0 0
    %1558 = vmatpush1.bf16.msra.mxu0 0
    %1559 = vmatprep.subr.bf16.mxu0 0
    %1560 = vmatpush1.bf16.msra.mxu0 0
    %1561 = vmatprep.subr.bf16.mxu0 0
    %1562 = vmatpush1.bf16.msra.mxu0 0
    %1563 = vmatprep.subr.bf16.mxu0 0
    %1564 = vmatpush1.bf16.msra.mxu0 0
    %1565 = vmatprep.subr.bf16.mxu0 0
    %1566 = vmatpush1.bf16.msra.mxu0 0
    %1567 = vmatprep.subr.bf16.mxu0 0
    %1568 = vmatpush1.bf16.msra.mxu0 0
    %1569 = vmatprep.subr.bf16.mxu0 0
    %1570 = vmatpush1.bf16.msra.mxu0 0
    %1571 = vmatprep.subr.bf16.mxu0 0
    %1572 = vmatpush1.bf16.msra.mxu0 0
    %1573 = vmatprep.subr.bf16.mxu0 0
    %1574 = vmatpush1.bf16.msra.mxu0 0
    %1575 = vmatprep.subr.bf16.mxu0 0
    %1576 = vmatpush1.bf16.msra.mxu0 0
    %1577 = vmatprep.subr.bf16.mxu0 0
    %1578 = vmatpush1.bf16.msra.mxu0 0
    %1579 = vmatprep.subr.bf16.mxu0 0
    %1580 = vmatpush1.bf16.msra.mxu0 0
    %1581 = vmatprep.subr.bf16.mxu0 0
    %1582 = vmatpush1.bf16.msra.mxu0 0
    %1583 = vmatprep.subr.bf16.mxu0 0
    %1584 = vmatpush1.bf16.msra.mxu0 0
    %1585 = vmatprep.subr.bf16.mxu0 0
    %1586 = vmatpush1.bf16.msra.mxu0 0
    %1587 = vmatprep.mubr.bf16.mxu0 0
    %1588 = vmatmul.mubr.bf16.gmra.mrb[0].mxu0 %v1553
    %v1589 = vpop.f32.mrb[0].mxu0
    %v1590 = vadd.f32 %v1330, %v1589
    %v1591 = vpop.f32.mrb[0].mxu0
    %v1592 = vpop.f32.mrb[0].mxu0
    %v1593 = vpop.f32.mrb[0].mxu0
    %1594 = vdwg.mxu0
    %v1596 = vsel %vm1332, %v1322, 0
    %1598 = vmatprep.subr.bf16.mxu0 0
    %1599 = vmatpush1.bf16.msra.mxu0 %v1338
    %1600 = vmatprep.subr.bf16.mxu0 0
    %1601 = vmatpush1.bf16.msra.mxu0 0
    %1602 = vmatprep.subr.bf16.mxu0 0
    %1603 = vmatpush1.bf16.msra.mxu0 0
    %1604 = vmatprep.subr.bf16.mxu0 0
    %1605 = vmatpush1.bf16.msra.mxu0 0
    %1606 = vmatprep.subr.bf16.mxu0 0
    %1607 = vmatpush1.bf16.msra.mxu0 0
    %1608 = vmatprep.subr.bf16.mxu0 0
    %1609 = vmatpush1.bf16.msra.mxu0 0
    %1610 = vmatprep.subr.bf16.mxu0 0
    %1611 = vmatpush1.bf16.msra.mxu0 0
    %1612 = vmatprep.subr.bf16.mxu0 0
    %1613 = vmatpush1.bf16.msra.mxu0 0
    %1614 = vmatprep.subr.bf16.mxu0 0
    %1615 = vmatpush1.bf16.msra.mxu0 0
    %1616 = vmatprep.subr.bf16.mxu0 0
    %1617 = vmatpush1.bf16.msra.mxu0 0
    %1618 = vmatprep.subr.bf16.mxu0 0
    %1619 = vmatpush1.bf16.msra.mxu0 0
    %1620 = vmatprep.subr.bf16.mxu0 0
    %1621 = vmatpush1.bf16.msra.mxu0 0
    %1622 = vmatprep.subr.bf16.mxu0 0
    %1623 = vmatpush1.bf16.msra.mxu0 0
    %1624 = vmatprep.subr.bf16.mxu0 0
    %1625 = vmatpush1.bf16.msra.mxu0 0
    %1626 = vmatprep.subr.bf16.mxu0 0
    %1627 = vmatpush1.bf16.msra.mxu0 0
    %1628 = vmatprep.subr.bf16.mxu0 0
    %1629 = vmatpush1.bf16.msra.mxu0 0
    %1630 = vmatprep.mubr.bf16.mxu0 0
    %1631 = vmatmul.mubr.bf16.gmra.mrb[0].mxu0 %v1596
    %v1632 = vpop.f32.mrb[0].mxu0
    %v1633 = vadd.f32 %v1330, %v1632
    %v1634 = vpop.f32.mrb[0].mxu0
    %v1635 = vpop.f32.mrb[0].mxu0
    %v1636 = vpop.f32.mrb[0].mxu0
    %1637 = vdwg.mxu0
    %v1639 = vsel %vm1332, %v1323, 0
    %1641 = vmatprep.subr.bf16.mxu0 0
    %1642 = vmatpush1.bf16.msra.mxu0 %v1338
    %1643 = vmatprep.subr.bf16.mxu0 0
    %1644 = vmatpush1.bf16.msra.mxu0 0
    %1645 = vmatprep.subr.bf16.mxu0 0
    %1646 = vmatpush1.bf16.msra.mxu0 0
    %1647 = vmatprep.subr.bf16.mxu0 0
    %1648 = vmatpush1.bf16.msra.mxu0 0
    %1649 = vmatprep.subr.bf16.mxu0 0
    %1650 = vmatpush1.bf16.msra.mxu0 0
    %1651 = vmatprep.subr.bf16.mxu0 0
    %1652 = vmatpush1.bf16.msra.mxu0 0
    %1653 = vmatprep.subr.bf16.mxu0 0
    %1654 = vmatpush1.bf16.msra.mxu0 0
    %1655 = vmatprep.subr.bf16.mxu0 0
    %1656 = vmatpush1.bf16.msra.mxu0 0
    %1657 = vmatprep.subr.bf16.mxu0 0
    %1658 = vmatpush1.bf16.msra.mxu0 0
    %1659 = vmatprep.subr.bf16.mxu0 0
    %1660 = vmatpush1.bf16.msra.mxu0 0
    %1661 = vmatprep.subr.bf16.mxu0 0
    %1662 = vmatpush1.bf16.msra.mxu0 0
    %1663 = vmatprep.subr.bf16.mxu0 0
    %1664 = vmatpush1.bf16.msra.mxu0 0
    %1665 = vmatprep.subr.bf16.mxu0 0
    %1666 = vmatpush1.bf16.msra.mxu0 0
    %1667 = vmatprep.subr.bf16.mxu0 0
    %1668 = vmatpush1.bf16.msra.mxu0 0
    %1669 = vmatprep.subr.bf16.mxu0 0
    %1670 = vmatpush1.bf16.msra.mxu0 0
    %1671 = vmatprep.subr.bf16.mxu0 0
    %1672 = vmatpush1.bf16.msra.mxu0 0
    %1673 = vmatprep.mubr.bf16.mxu0 0
    %1674 = vmatmul.mubr.bf16.gmra.mrb[0].mxu0 %v1639
    %v1675 = vpop.f32.mrb[0].mxu0
    %v1676 = vadd.f32 %v1330, %v1675
    %v1677 = vpop.f32.mrb[0].mxu0
    %v1678 = vpop.f32.mrb[0].mxu0
    %v1679 = vpop.f32.mrb[0].mxu0
    %1680 = vdwg.mxu0
    %v1681 = vmax.f32 %v1375, 0.0
    %v1682 = vmax.f32 %v1418, 0.0
    %v1683 = vmax.f32 %v1461, 0.0
    %v1684 = vmax.f32 %v1504, 0.0
    %v1685 = vmax.f32 %v1547, 0.0
    %v1686 = vmax.f32 %v1590, 0.0
    %v1687 = vmax.f32 %v1633, 0.0
    %v1688 = vmax.f32 %v1676, 0.0
    %v1689 = vpack.c.bf16 %v1681, %v1681
    %v1690 = vpack.c.bf16 %v1682, %v1682
    %v1691 = vpack.c.bf16 %v1683, %v1683
    %v1692 = vpack.c.bf16 %v1684, %v1684
    %v1693 = vpack.c.bf16 %v1685, %v1685
    %v1694 = vpack.c.bf16 %v1686, %v1686
    %v1695 = vpack.c.bf16 %v1687, %v1687
    %v1696 = vpack.c.bf16 %v1688, %v1688
    %v1697 = vld [vmem:[%s7] sm:$0xf]
    %v1698 = vld [vmem:[%s7 + $0x4] sm:$0xf]
    %v1699 = vld [vmem:[%s7 + $0x8] sm:$0xf]
    %v1700 = vld [vmem:[%s7 + $0xc] sm:$0xf]
    %v1701 = vpack.c.bf16 %v960, %v960
    %v1702 = vpack.c.bf16 %v962, %v962
    %v1703 = vpack.c.bf16 %v1010, %v1010
    %v1704 = vpack.c.bf16 %v1012, %v1012
    %v1705 = vpack.c.bf16 %v1060, %v1060
    %v1706 = vpack.c.bf16 %v1062, %v1062
    %v1707 = vpack.c.bf16 %v1110, %v1110
    %v1708 = vpack.c.bf16 %v1112, %v1112
    %v1709 = vpack.c.bf16 %v1160, %v1160
    %v1710 = vpack.c.bf16 %v1162, %v1162
    %v1711 = vpack.c.bf16 %v1210, %v1210
    %v1712 = vpack.c.bf16 %v1212, %v1212
    %v1713 = vpack.c.bf16 %v1260, %v1260
    %v1714 = vpack.c.bf16 %v1262, %v1262
    %v1715 = vpack.c.bf16 %v1310, %v1310
    %v1716 = vpack.c.bf16 %v1312, %v1312
    %v1717 = vld [vmem:[%s8] sm:$0xf]
    %v1718 = vld [vmem:[%s8 + $0x4] sm:$0xf]
    %v1719 = vld [vmem:[%s8 + $0x8] sm:$0xf]
    %v1720 = vld [vmem:[%s8 + $0xc] sm:$0xf]
    %v1721 = vld [vmem:[%s8 + $0x10] sm:$0xf]
    %v1722 = vld [vmem:[%s8 + $0x14] sm:$0xf]
    %v1723 = vld [vmem:[%s8 + $0x18] sm:$0xf]
    %v1724 = vld [vmem:[%s8 + $0x1c] sm:$0xf]
    %v1725 = vld [vmem:[%s8 + $0x20] sm:$0xf]
    %v1726 = vld [vmem:[%s8 + $0x24] sm:$0xf]
    %v1727 = vld [vmem:[%s8 + $0x28] sm:$0xf]
    %v1728 = vld [vmem:[%s8 + $0x2c] sm:$0xf]
    %v1729 = vld [vmem:[%s8 + $0x30] sm:$0xf]
    %v1730 = vld [vmem:[%s8 + $0x34] sm:$0xf]
    %v1731 = vld [vmem:[%s8 + $0x38] sm:$0xf]
    %v1732 = vld [vmem:[%s8 + $0x3c] sm:$0xf]
    %v1733 = vld [vmem:[%s8 + $0x40] sm:$0xf]
    %v1734 = vld [vmem:[%s8 + $0x44] sm:$0xf]
    %v1735 = vld [vmem:[%s8 + $0x48] sm:$0xf]
    %v1736 = vld [vmem:[%s8 + $0x4c] sm:$0xf]
    %v1757 = vunpack.c.l.b16 %v1717
    %v1758 = vunpack.c.l.b16 %v1718
    %v1759 = vunpack.c.l.b16 %v1719
    %v1760 = vunpack.c.l.b16 %v1720
    %v1761 = vunpack.c.l.b16 %v1721
    %v1762 = vunpack.c.l.b16 %v1722
    %v1763 = vunpack.c.l.b16 %v1723
    %v1764 = vunpack.c.l.b16 %v1724
    %v1765 = vunpack.c.l.b16 %v1725
    %v1766 = vunpack.c.l.b16 %v1726
    %v1767 = vunpack.c.l.b16 %v1727
    %v1768 = vunpack.c.l.b16 %v1728
    %v1769 = vunpack.c.l.b16 %v1729
    %v1770 = vunpack.c.l.b16 %v1730
    %v1771 = vunpack.c.l.b16 %v1731
    %v1772 = vunpack.c.l.b16 %v1732
    %v1773 = vunpack.c.l.b16 %v1733
    %v1774 = vunpack.c.l.b16 %v1734
    %v1775 = vunpack.c.l.b16 %v1735
    %v1776 = vunpack.c.l.b16 %v1736
    %v1777 = vpack.c.b16 %v1758, %v1757
    %v1778 = vpack.c.b16 %v1760, %v1759
    %v1779 = vpack.c.b16 %v1762, %v1761
    %v1780 = vpack.c.b16 %v1764, %v1763
    %v1781 = vpack.c.b16 %v1766, %v1765
    %v1782 = vpack.c.b16 %v1768, %v1767
    %v1783 = vpack.c.b16 %v1770, %v1769
    %v1784 = vpack.c.b16 %v1772, %v1771
    %v1785 = vpack.c.b16 %v1774, %v1773
    %v1786 = vpack.c.b16 %v1776, %v1775
    %vm1797 = vcmask 261120
    %v1799 = vsel %vm1797, %v1702, 0
    %1801 = vmatprep.subr.bf16.mxu0 0
    %1802 = vmatpush1.bf16.msra.mxu0 %v1777
    %1803 = vmatprep.subr.bf16.mxu0 0
    %1804 = vmatpush1.bf16.msra.mxu0 %v1778
    %1805 = vmatprep.subr.bf16.mxu0 0
    %1806 = vmatpush1.bf16.msra.mxu0 %v1779
    %1807 = vmatprep.subr.bf16.mxu0 0
    %1808 = vmatpush1.bf16.msra.mxu0 %v1780
    %1809 = vmatprep.subr.bf16.mxu0 0
    %1810 = vmatpush1.bf16.msra.mxu0 %v1781
    %1811 = vmatprep.subr.bf16.mxu0 0
    %1812 = vmatpush1.bf16.msra.mxu0 %v1782
    %1813 = vmatprep.subr.bf16.mxu0 0
    %1814 = vmatpush1.bf16.msra.mxu0 %v1783
    %1815 = vmatprep.subr.bf16.mxu0 0
    %1816 = vmatpush1.bf16.msra.mxu0 %v1784
    %1817 = vmatprep.subr.bf16.mxu0 0
    %1818 = vmatpush1.bf16.msra.mxu0 %v1785
    %1819 = vmatprep.subr.bf16.mxu0 0
    %1820 = vmatpush1.bf16.msra.mxu0 %v1786
    %1821 = vmatprep.subr.bf16.mxu0 0
    %1822 = vmatpush1.bf16.msra.mxu0 0
    %1823 = vmatprep.subr.bf16.mxu0 0
    %1824 = vmatpush1.bf16.msra.mxu0 0
    %1825 = vmatprep.subr.bf16.mxu0 0
    %1826 = vmatpush1.bf16.msra.mxu0 0
    %1827 = vmatprep.subr.bf16.mxu0 0
    %1828 = vmatpush1.bf16.msra.mxu0 0
    %1829 = vmatprep.subr.bf16.mxu0 0
    %1830 = vmatpush1.bf16.msra.mxu0 0
    %1831 = vmatprep.subr.bf16.mxu0 0
    %1832 = vmatpush1.bf16.msra.mxu0 0
    %1833 = vmatprep.mubr.bf16.mxu0 %v1799
    %1834 = vmatmul.mubr.bf16.gmra.mrb[0].mxu0 %v1701
    %v1835 = vpop.f32.mrb[0].mxu0
    %v1836 = vadd.f32 0.0, %v1835
    %v1837 = vpop.f32.mrb[0].mxu0
    %v1838 = vpop.f32.mrb[0].mxu0
    %v1839 = vpop.f32.mrb[0].mxu0
    %1840 = vdwg.mxu0
    %v1842 = vsel %vm1797, %v1704, 0
    %1844 = vmatprep.subr.bf16.mxu0 0
    %1845 = vmatpush1.bf16.msra.mxu0 %v1777
    %1846 = vmatprep.subr.bf16.mxu0 0
    %1847 = vmatpush1.bf16.msra.mxu0 %v1778
    %1848 = vmatprep.subr.bf16.mxu0 0
    %1849 = vmatpush1.bf16.msra.mxu0 %v1779
    %1850 = vmatprep.subr.bf16.mxu0 0
    %1851 = vmatpush1.bf16.msra.mxu0 %v1780
    %1852 = vmatprep.subr.bf16.mxu0 0
    %1853 = vmatpush1.bf16.msra.mxu0 %v1781
    %1854 = vmatprep.subr.bf16.mxu0 0
    %1855 = vmatpush1.bf16.msra.mxu0 %v1782
    %1856 = vmatprep.subr.bf16.mxu0 0
    %1857 = vmatpush1.bf16.msra.mxu0 %v1783
    %1858 = vmatprep.subr.bf16.mxu0 0
    %1859 = vmatpush1.bf16.msra.mxu0 %v1784
    %1860 = vmatprep.subr.bf16.mxu0 0
    %1861 = vmatpush1.bf16.msra.mxu0 %v1785
    %1862 = vmatprep.subr.bf16.mxu0 0
    %1863 = vmatpush1.bf16.msra.mxu0 %v1786
    %1864 = vmatprep.subr.bf16.mxu0 0
    %1865 = vmatpush1.bf16.msra.mxu0 0
    %1866 = vmatprep.subr.bf16.mxu0 0
    %1867 = vmatpush1.bf16.msra.mxu0 0
    %1868 = vmatprep.subr.bf16.mxu0 0
    %1869 = vmatpush1.bf16.msra.mxu0 0
    %1870 = vmatprep.subr.bf16.mxu0 0
    %1871 = vmatpush1.bf16.msra.mxu0 0
    %1872 = vmatprep.subr.bf16.mxu0 0
    %1873 = vmatpush1.bf16.msra.mxu0 0
    %1874 = vmatprep.subr.bf16.mxu0 0
    %1875 = vmatpush1.bf16.msra.mxu0 0
    %1876 = vmatprep.mubr.bf16.mxu0 %v1842
    %1877 = vmatmul.mubr.bf16.gmra.mrb[0].mxu0 %v1703
    %v1878 = vpop.f32.mrb[0].mxu0
    %v1879 = vadd.f32 0.0, %v1878
    %v1880 = vpop.f32.mrb[0].mxu0
    %v1881 = vpop.f32.mrb[0].mxu0
    %v1882 = vpop.f32.mrb[0].mxu0
    %1883 = vdwg.mxu0
    %v1885 = vsel %vm1797, %v1706, 0
    %1887 = vmatprep.subr.bf16.mxu0 0
    %1888 = vmatpush1.bf16.msra.mxu0 %v1777
    %1889 = vmatprep.subr.bf16.mxu0 0
    %1890 = vmatpush1.bf16.msra.mxu0 %v1778
    %1891 = vmatprep.subr.bf16.mxu0 0
    %1892 = vmatpush1.bf16.msra.mxu0 %v1779
    %1893 = vmatprep.subr.bf16.mxu0 0
    %1894 = vmatpush1.bf16.msra.mxu0 %v1780
    %1895 = vmatprep.subr.bf16.mxu0 0
    %1896 = vmatpush1.bf16.msra.mxu0 %v1781
    %1897 = vmatprep.subr.bf16.mxu0 0
    %1898 = vmatpush1.bf16.msra.mxu0 %v1782
    %1899 = vmatprep.subr.bf16.mxu0 0
    %1900 = vmatpush1.bf16.msra.mxu0 %v1783
    %1901 = vmatprep.subr.bf16.mxu0 0
    %1902 = vmatpush1.bf16.msra.mxu0 %v1784
    %1903 = vmatprep.subr.bf16.mxu0 0
    %1904 = vmatpush1.bf16.msra.mxu0 %v1785
    %1905 = vmatprep.subr.bf16.mxu0 0
    %1906 = vmatpush1.bf16.msra.mxu0 %v1786
    %1907 = vmatprep.subr.bf16.mxu0 0
    %1908 = vmatpush1.bf16.msra.mxu0 0
    %1909 = vmatprep.subr.bf16.mxu0 0
    %1910 = vmatpush1.bf16.msra.mxu0 0
    %1911 = vmatprep.subr.bf16.mxu0 0
    %1912 = vmatpush1.bf16.msra.mxu0 0
    %1913 = vmatprep.subr.bf16.mxu0 0
    %1914 = vmatpush1.bf16.msra.mxu0 0
    %1915 = vmatprep.subr.bf16.mxu0 0
    %1916 = vmatpush1.bf16.msra.mxu0 0
    %1917 = vmatprep.subr.bf16.mxu0 0
    %1918 = vmatpush1.bf16.msra.mxu0 0
    %1919 = vmatprep.mubr.bf16.mxu0 %v1885
    %1920 = vmatmul.mubr.bf16.gmra.mrb[0].mxu0 %v1705
    %v1921 = vpop.f32.mrb[0].mxu0
    %v1922 = vadd.f32 0.0, %v1921
    %v1923 = vpop.f32.mrb[0].mxu0
    %v1924 = vpop.f32.mrb[0].mxu0
    %v1925 = vpop.f32.mrb[0].mxu0
    %1926 = vdwg.mxu0
    %v1928 = vsel %vm1797, %v1708, 0
    %1930 = vmatprep.subr.bf16.mxu0 0
    %1931 = vmatpush1.bf16.msra.mxu0 %v1777
    %1932 = vmatprep.subr.bf16.mxu0 0
    %1933 = vmatpush1.bf16.msra.mxu0 %v1778
    %1934 = vmatprep.subr.bf16.mxu0 0
    %1935 = vmatpush1.bf16.msra.mxu0 %v1779
    %1936 = vmatprep.subr.bf16.mxu0 0
    %1937 = vmatpush1.bf16.msra.mxu0 %v1780
    %1938 = vmatprep.subr.bf16.mxu0 0
    %1939 = vmatpush1.bf16.msra.mxu0 %v1781
    %1940 = vmatprep.subr.bf16.mxu0 0
    %1941 = vmatpush1.bf16.msra.mxu0 %v1782
    %1942 = vmatprep.subr.bf16.mxu0 0
    %1943 = vmatpush1.bf16.msra.mxu0 %v1783
    %1944 = vmatprep.subr.bf16.mxu0 0
    %1945 = vmatpush1.bf16.msra.mxu0 %v1784
    %1946 = vmatprep.subr.bf16.mxu0 0
    %1947 = vmatpush1.bf16.msra.mxu0 %v1785
    %1948 = vmatprep.subr.bf16.mxu0 0
    %1949 = vmatpush1.bf16.msra.mxu0 %v1786
    %1950 = vmatprep.subr.bf16.mxu0 0
    %1951 = vmatpush1.bf16.msra.mxu0 0
    %1952 = vmatprep.subr.bf16.mxu0 0
    %1953 = vmatpush1.bf16.msra.mxu0 0
    %1954 = vmatprep.subr.bf16.mxu0 0
    %1955 = vmatpush1.bf16.msra.mxu0 0
    %1956 = vmatprep.subr.bf16.mxu0 0
    %1957 = vmatpush1.bf16.msra.mxu0 0
    %1958 = vmatprep.subr.bf16.mxu0 0
    %1959 = vmatpush1.bf16.msra.mxu0 0
    %1960 = vmatprep.subr.bf16.mxu0 0
    %1961 = vmatpush1.bf16.msra.mxu0 0
    %1962 = vmatprep.mubr.bf16.mxu0 %v1928
    %1963 = vmatmul.mubr.bf16.gmra.mrb[0].mxu0 %v1707
    %v1964 = vpop.f32.mrb[0].mxu0
    %v1965 = vadd.f32 0.0, %v1964
    %v1966 = vpop.f32.mrb[0].mxu0
    %v1967 = vpop.f32.mrb[0].mxu0
    %v1968 = vpop.f32.mrb[0].mxu0
    %1969 = vdwg.mxu0
    %v1971 = vsel %vm1797, %v1710, 0
    %1973 = vmatprep.subr.bf16.mxu0 0
    %1974 = vmatpush1.bf16.msra.mxu0 %v1777
    %1975 = vmatprep.subr.bf16.mxu0 0
    %1976 = vmatpush1.bf16.msra.mxu0 %v1778
    %1977 = vmatprep.subr.bf16.mxu0 0
    %1978 = vmatpush1.bf16.msra.mxu0 %v1779
    %1979 = vmatprep.subr.bf16.mxu0 0
    %1980 = vmatpush1.bf16.msra.mxu0 %v1780
    %1981 = vmatprep.subr.bf16.mxu0 0
    %1982 = vmatpush1.bf16.msra.mxu0 %v1781
    %1983 = vmatprep.subr.bf16.mxu0 0
    %1984 = vmatpush1.bf16.msra.mxu0 %v1782
    %1985 = vmatprep.subr.bf16.mxu0 0
    %1986 = vmatpush1.bf16.msra.mxu0 %v1783
    %1987 = vmatprep.subr.bf16.mxu0 0
    %1988 = vmatpush1.bf16.msra.mxu0 %v1784
    %1989 = vmatprep.subr.bf16.mxu0 0
    %1990 = vmatpush1.bf16.msra.mxu0 %v1785
    %1991 = vmatprep.subr.bf16.mxu0 0
    %1992 = vmatpush1.bf16.msra.mxu0 %v1786
    %1993 = vmatprep.subr.bf16.mxu0 0
    %1994 = vmatpush1.bf16.msra.mxu0 0
    %1995 = vmatprep.subr.bf16.mxu0 0
    %1996 = vmatpush1.bf16.msra.mxu0 0
    %1997 = vmatprep.subr.bf16.mxu0 0
    %1998 = vmatpush1.bf16.msra.mxu0 0
    %1999 = vmatprep.subr.bf16.mxu0 0
    %2000 = vmatpush1.bf16.msra.mxu0 0
    %2001 = vmatprep.subr.bf16.mxu0 0
    %2002 = vmatpush1.bf16.msra.mxu0 0
    %2003 = vmatprep.subr.bf16.mxu0 0
    %2004 = vmatpush1.bf16.msra.mxu0 0
    %2005 = vmatprep.mubr.bf16.mxu0 %v1971
    %2006 = vmatmul.mubr.bf16.gmra.mrb[0].mxu0 %v1709
    %v2007 = vpop.f32.mrb[0].mxu0
    %v2008 = vadd.f32 0.0, %v2007
    %v2009 = vpop.f32.mrb[0].mxu0
    %v2010 = vpop.f32.mrb[0].mxu0
    %v2011 = vpop.f32.mrb[0].mxu0
    %2012 = vdwg.mxu0
    %v2014 = vsel %vm1797, %v1712, 0
    %2016 = vmatprep.subr.bf16.mxu0 0
    %2017 = vmatpush1.bf16.msra.mxu0 %v1777
    %2018 = vmatprep.subr.bf16.mxu0 0
    %2019 = vmatpush1.bf16.msra.mxu0 %v1778
    %2020 = vmatprep.subr.bf16.mxu0 0
    %2021 = vmatpush1.bf16.msra.mxu0 %v1779
    %2022 = vmatprep.subr.bf16.mxu0 0
    %2023 = vmatpush1.bf16.msra.mxu0 %v1780
    %2024 = vmatprep.subr.bf16.mxu0 0
    %2025 = vmatpush1.bf16.msra.mxu0 %v1781
    %2026 = vmatprep.subr.bf16.mxu0 0
    %2027 = vmatpush1.bf16.msra.mxu0 %v1782
    %2028 = vmatprep.subr.bf16.mxu0 0
    %2029 = vmatpush1.bf16.msra.mxu0 %v1783
    %2030 = vmatprep.subr.bf16.mxu0 0
    %2031 = vmatpush1.bf16.msra.mxu0 %v1784
    %2032 = vmatprep.subr.bf16.mxu0 0
    %2033 = vmatpush1.bf16.msra.mxu0 %v1785
    %2034 = vmatprep.subr.bf16.mxu0 0
    %2035 = vmatpush1.bf16.msra.mxu0 %v1786
    %2036 = vmatprep.subr.bf16.mxu0 0
    %2037 = vmatpush1.bf16.msra.mxu0 0
    %2038 = vmatprep.subr.bf16.mxu0 0
    %2039 = vmatpush1.bf16.msra.mxu0 0
    %2040 = vmatprep.subr.bf16.mxu0 0
    %2041 = vmatpush1.bf16.msra.mxu0 0
    %2042 = vmatprep.subr.bf16.mxu0 0
    %2043 = vmatpush1.bf16.msra.mxu0 0
    %2044 = vmatprep.subr.bf16.mxu0 0
    %2045 = vmatpush1.bf16.msra.mxu0 0
    %2046 = vmatprep.subr.bf16.mxu0 0
    %2047 = vmatpush1.bf16.msra.mxu0 0
    %2048 = vmatprep.mubr.bf16.mxu0 %v2014
    %2049 = vmatmul.mubr.bf16.gmra.mrb[0].mxu0 %v1711
    %v2050 = vpop.f32.mrb[0].mxu0
    %v2051 = vadd.f32 0.0, %v2050
    %v2052 = vpop.f32.mrb[0].mxu0
    %v2053 = vpop.f32.mrb[0].mxu0
    %v2054 = vpop.f32.mrb[0].mxu0
    %2055 = vdwg.mxu0
    %v2057 = vsel %vm1797, %v1714, 0
    %2059 = vmatprep.subr.bf16.mxu0 0
    %2060 = vmatpush1.bf16.msra.mxu0 %v1777
    %2061 = vmatprep.subr.bf16.mxu0 0
    %2062 = vmatpush1.bf16.msra.mxu0 %v1778
    %2063 = vmatprep.subr.bf16.mxu0 0
    %2064 = vmatpush1.bf16.msra.mxu0 %v1779
    %2065 = vmatprep.subr.bf16.mxu0 0
    %2066 = vmatpush1.bf16.msra.mxu0 %v1780
    %2067 = vmatprep.subr.bf16.mxu0 0
    %2068 = vmatpush1.bf16.msra.mxu0 %v1781
    %2069 = vmatprep.subr.bf16.mxu0 0
    %2070 = vmatpush1.bf16.msra.mxu0 %v1782
    %2071 = vmatprep.subr.bf16.mxu0 0
    %2072 = vmatpush1.bf16.msra.mxu0 %v1783
    %2073 = vmatprep.subr.bf16.mxu0 0
    %2074 = vmatpush1.bf16.msra.mxu0 %v1784
    %2075 = vmatprep.subr.bf16.mxu0 0
    %2076 = vmatpush1.bf16.msra.mxu0 %v1785
    %2077 = vmatprep.subr.bf16.mxu0 0
    %2078 = vmatpush1.bf16.msra.mxu0 %v1786
    %2079 = vmatprep.subr.bf16.mxu0 0
    %2080 = vmatpush1.bf16.msra.mxu0 0
    %2081 = vmatprep.subr.bf16.mxu0 0
    %2082 = vmatpush1.bf16.msra.mxu0 0
    %2083 = vmatprep.subr.bf16.mxu0 0
    %2084 = vmatpush1.bf16.msra.mxu0 0
    %2085 = vmatprep.subr.bf16.mxu0 0
    %2086 = vmatpush1.bf16.msra.mxu0 0
    %2087 = vmatprep.subr.bf16.mxu0 0
    %2088 = vmatpush1.bf16.msra.mxu0 0
    %2089 = vmatprep.subr.bf16.mxu0 0
    %2090 = vmatpush1.bf16.msra.mxu0 0
    %2091 = vmatprep.mubr.bf16.mxu0 %v2057
    %2092 = vmatmul.mubr.bf16.gmra.mrb[0].mxu0 %v1713
    %v2093 = vpop.f32.mrb[0].mxu0
    %v2094 = vadd.f32 0.0, %v2093
    %v2095 = vpop.f32.mrb[0].mxu0
    %v2096 = vpop.f32.mrb[0].mxu0
    %v2097 = vpop.f32.mrb[0].mxu0
    %2098 = vdwg.mxu0
    %v2100 = vsel %vm1797, %v1716, 0
    %2102 = vmatprep.subr.bf16.mxu0 0
    %2103 = vmatpush1.bf16.msra.mxu0 %v1777
    %2104 = vmatprep.subr.bf16.mxu0 0
    %2105 = vmatpush1.bf16.msra.mxu0 %v1778
    %2106 = vmatprep.subr.bf16.mxu0 0
    %2107 = vmatpush1.bf16.msra.mxu0 %v1779
    %2108 = vmatprep.subr.bf16.mxu0 0
    %2109 = vmatpush1.bf16.msra.mxu0 %v1780
    %2110 = vmatprep.subr.bf16.mxu0 0
    %2111 = vmatpush1.bf16.msra.mxu0 %v1781
    %2112 = vmatprep.subr.bf16.mxu0 0
    %2113 = vmatpush1.bf16.msra.mxu0 %v1782
    %2114 = vmatprep.subr.bf16.mxu0 0
    %2115 = vmatpush1.bf16.msra.mxu0 %v1783
    %2116 = vmatprep.subr.bf16.mxu0 0
    %2117 = vmatpush1.bf16.msra.mxu0 %v1784
    %2118 = vmatprep.subr.bf16.mxu0 0
    %2119 = vmatpush1.bf16.msra.mxu0 %v1785
    %2120 = vmatprep.subr.bf16.mxu0 0
    %2121 = vmatpush1.bf16.msra.mxu0 %v1786
    %2122 = vmatprep.subr.bf16.mxu0 0
    %2123 = vmatpush1.bf16.msra.mxu0 0
    %2124 = vmatprep.subr.bf16.mxu0 0
    %2125 = vmatpush1.bf16.msra.mxu0 0
    %2126 = vmatprep.subr.bf16.mxu0 0
    %2127 = vmatpush1.bf16.msra.mxu0 0
    %2128 = vmatprep.subr.bf16.mxu0 0
    %2129 = vmatpush1.bf16.msra.mxu0 0
    %2130 = vmatprep.subr.bf16.mxu0 0
    %2131 = vmatpush1.bf16.msra.mxu0 0
    %2132 = vmatprep.subr.bf16.mxu0 0
    %2133 = vmatpush1.bf16.msra.mxu0 0
    %2134 = vmatprep.mubr.bf16.mxu0 %v2100
    %2135 = vmatmul.mubr.bf16.gmra.mrb[0].mxu0 %v1715
    %v2136 = vpop.f32.mrb[0].mxu0
    %v2137 = vadd.f32 0.0, %v2136
    %v2138 = vpop.f32.mrb[0].mxu0
    %v2139 = vpop.f32.mrb[0].mxu0
    %v2140 = vpop.f32.mrb[0].mxu0
    %2141 = vdwg.mxu0
    %v2146 = vunpack.c.l.b16 %v1697
    %v2147 = vunpack.c.l.b16 %v1698
    %v2148 = vunpack.c.l.b16 %v1699
    %v2149 = vunpack.c.l.b16 %v1700
    %v2150 = vpack.c.b16 %v2147, %v2146
    %v2151 = vpack.c.b16 %v2149, %v2148
    %v2155 = vsel %vm1797, %v1689, 0
    %2157 = vmatprep.subr.bf16.mxu0 0
    %2158 = vmatpush1.bf16.msra.mxu0 %v2150
    %2159 = vmatprep.subr.bf16.mxu0 0
    %2160 = vmatpush1.bf16.msra.mxu0 %v2151
    %2161 = vmatprep.subr.bf16.mxu0 0
    %2162 = vmatpush1.bf16.msra.mxu0 0
    %2163 = vmatprep.subr.bf16.mxu0 0
    %2164 = vmatpush1.bf16.msra.mxu0 0
    %2165 = vmatprep.subr.bf16.mxu0 0
    %2166 = vmatpush1.bf16.msra.mxu0 0
    %2167 = vmatprep.subr.bf16.mxu0 0
    %2168 = vmatpush1.bf16.msra.mxu0 0
    %2169 = vmatprep.subr.bf16.mxu0 0
    %2170 = vmatpush1.bf16.msra.mxu0 0
    %2171 = vmatprep.subr.bf16.mxu0 0
    %2172 = vmatpush1.bf16.msra.mxu0 0
    %2173 = vmatprep.subr.bf16.mxu0 0
    %2174 = vmatpush1.bf16.msra.mxu0 0
    %2175 = vmatprep.subr.bf16.mxu0 0
    %2176 = vmatpush1.bf16.msra.mxu0 0
    %2177 = vmatprep.subr.bf16.mxu0 0
    %2178 = vmatpush1.bf16.msra.mxu0 0
    %2179 = vmatprep.subr.bf16.mxu0 0
    %2180 = vmatpush1.bf16.msra.mxu0 0
    %2181 = vmatprep.subr.bf16.mxu0 0
    %2182 = vmatpush1.bf16.msra.mxu0 0
    %2183 = vmatprep.subr.bf16.mxu0 0
    %2184 = vmatpush1.bf16.msra.mxu0 0
    %2185 = vmatprep.subr.bf16.mxu0 0
    %2186 = vmatpush1.bf16.msra.mxu0 0
    %2187 = vmatprep.subr.bf16.mxu0 0
    %2188 = vmatpush1.bf16.msra.mxu0 0
    %2189 = vmatprep.mubr.bf16.mxu0 0
    %2190 = vmatmul.mubr.bf16.gmra.mrb[0].mxu0 %v2155
    %v2191 = vpop.f32.mrb[0].mxu0
    %v2192 = vadd.f32 %v1836, %v2191
    %v2193 = vpop.f32.mrb[0].mxu0
    %v2194 = vpop.f32.mrb[0].mxu0
    %v2195 = vpop.f32.mrb[0].mxu0
    %2196 = vdwg.mxu0
    %v2198 = vsel %vm1797, %v1690, 0
    %2200 = vmatprep.subr.bf16.mxu0 0
    %2201 = vmatpush1.bf16.msra.mxu0 %v2150
    %2202 = vmatprep.subr.bf16.mxu0 0
    %2203 = vmatpush1.bf16.msra.mxu0 %v2151
    %2204 = vmatprep.subr.bf16.mxu0 0
    %2205 = vmatpush1.bf16.msra.mxu0 0
    %2206 = vmatprep.subr.bf16.mxu0 0
    %2207 = vmatpush1.bf16.msra.mxu0 0
    %2208 = vmatprep.subr.bf16.mxu0 0
    %2209 = vmatpush1.bf16.msra.mxu0 0
    %2210 = vmatprep.subr.bf16.mxu0 0
    %2211 = vmatpush1.bf16.msra.mxu0 0
    %2212 = vmatprep.subr.bf16.mxu0 0
    %2213 = vmatpush1.bf16.msra.mxu0 0
    %2214 = vmatprep.subr.bf16.mxu0 0
    %2215 = vmatpush1.bf16.msra.mxu0 0
    %2216 = vmatprep.subr.bf16.mxu0 0
    %2217 = vmatpush1.bf16.msra.mxu0 0
    %2218 = vmatprep.subr.bf16.mxu0 0
    %2219 = vmatpush1.bf16.msra.mxu0 0
    %2220 = vmatprep.subr.bf16.mxu0 0
    %2221 = vmatpush1.bf16.msra.mxu0 0
    %2222 = vmatprep.subr.bf16.mxu0 0
    %2223 = vmatpush1.bf16.msra.mxu0 0
    %2224 = vmatprep.subr.bf16.mxu0 0
    %2225 = vmatpush1.bf16.msra.mxu0 0
    %2226 = vmatprep.subr.bf16.mxu0 0
    %2227 = vmatpush1.bf16.msra.mxu0 0
    %2228 = vmatprep.subr.bf16.mxu0 0
    %2229 = vmatpush1.bf16.msra.mxu0 0
    %2230 = vmatprep.subr.bf16.mxu0 0
    %2231 = vmatpush1.bf16.msra.mxu0 0
    %2232 = vmatprep.mubr.bf16.mxu0 0
    %2233 = vmatmul.mubr.bf16.gmra.mrb[0].mxu0 %v2198
    %v2234 = vpop.f32.mrb[0].mxu0
    %v2235 = vadd.f32 %v1879, %v2234
    %v2236 = vpop.f32.mrb[0].mxu0
    %v2237 = vpop.f32.mrb[0].mxu0
    %v2238 = vpop.f32.mrb[0].mxu0
    %2239 = vdwg.mxu0
    %v2241 = vsel %vm1797, %v1691, 0
    %2243 = vmatprep.subr.bf16.mxu0 0
    %2244 = vmatpush1.bf16.msra.mxu0 %v2150
    %2245 = vmatprep.subr.bf16.mxu0 0
    %2246 = vmatpush1.bf16.msra.mxu0 %v2151
    %2247 = vmatprep.subr.bf16.mxu0 0
    %2248 = vmatpush1.bf16.msra.mxu0 0
    %2249 = vmatprep.subr.bf16.mxu0 0
    %2250 = vmatpush1.bf16.msra.mxu0 0
    %2251 = vmatprep.subr.bf16.mxu0 0
    %2252 = vmatpush1.bf16.msra.mxu0 0
    %2253 = vmatprep.subr.bf16.mxu0 0
    %2254 = vmatpush1.bf16.msra.mxu0 0
    %2255 = vmatprep.subr.bf16.mxu0 0
    %2256 = vmatpush1.bf16.msra.mxu0 0
    %2257 = vmatprep.subr.bf16.mxu0 0
    %2258 = vmatpush1.bf16.msra.mxu0 0
    %2259 = vmatprep.subr.bf16.mxu0 0
    %2260 = vmatpush1.bf16.msra.mxu0 0
    %2261 = vmatprep.subr.bf16.mxu0 0
    %2262 = vmatpush1.bf16.msra.mxu0 0
    %2263 = vmatprep.subr.bf16.mxu0 0
    %2264 = vmatpush1.bf16.msra.mxu0 0
    %2265 = vmatprep.subr.bf16.mxu0 0
    %2266 = vmatpush1.bf16.msra.mxu0 0
    %2267 = vmatprep.subr.bf16.mxu0 0
    %2268 = vmatpush1.bf16.msra.mxu0 0
    %2269 = vmatprep.subr.bf16.mxu0 0
    %2270 = vmatpush1.bf16.msra.mxu0 0
    %2271 = vmatprep.subr.bf16.mxu0 0
    %2272 = vmatpush1.bf16.msra.mxu0 0
    %2273 = vmatprep.subr.bf16.mxu0 0
    %2274 = vmatpush1.bf16.msra.mxu0 0
    %2275 = vmatprep.mubr.bf16.mxu0 0
    %2276 = vmatmul.mubr.bf16.gmra.mrb[0].mxu0 %v2241
    %v2277 = vpop.f32.mrb[0].mxu0
    %v2278 = vadd.f32 %v1922, %v2277
    %v2279 = vpop.f32.mrb[0].mxu0
    %v2280 = vpop.f32.mrb[0].mxu0
    %v2281 = vpop.f32.mrb[0].mxu0
    %2282 = vdwg.mxu0
    %v2284 = vsel %vm1797, %v1692, 0
    %2286 = vmatprep.subr.bf16.mxu0 0
    %2287 = vmatpush1.bf16.msra.mxu0 %v2150
    %2288 = vmatprep.subr.bf16.mxu0 0
    %2289 = vmatpush1.bf16.msra.mxu0 %v2151
    %2290 = vmatprep.subr.bf16.mxu0 0
    %2291 = vmatpush1.bf16.msra.mxu0 0
    %2292 = vmatprep.subr.bf16.mxu0 0
    %2293 = vmatpush1.bf16.msra.mxu0 0
    %2294 = vmatprep.subr.bf16.mxu0 0
    %2295 = vmatpush1.bf16.msra.mxu0 0
    %2296 = vmatprep.subr.bf16.mxu0 0
    %2297 = vmatpush1.bf16.msra.mxu0 0
    %2298 = vmatprep.subr.bf16.mxu0 0
    %2299 = vmatpush1.bf16.msra.mxu0 0
    %2300 = vmatprep.subr.bf16.mxu0 0
    %2301 = vmatpush1.bf16.msra.mxu0 0
    %2302 = vmatprep.subr.bf16.mxu0 0
    %2303 = vmatpush1.bf16.msra.mxu0 0
    %2304 = vmatprep.subr.bf16.mxu0 0
    %2305 = vmatpush1.bf16.msra.mxu0 0
    %2306 = vmatprep.subr.bf16.mxu0 0
    %2307 = vmatpush1.bf16.msra.mxu0 0
    %2308 = vmatprep.subr.bf16.mxu0 0
    %2309 = vmatpush1.bf16.msra.mxu0 0
    %2310 = vmatprep.subr.bf16.mxu0 0
    %2311 = vmatpush1.bf16.msra.mxu0 0
    %2312 = vmatprep.subr.bf16.mxu0 0
    %2313 = vmatpush1.bf16.msra.mxu0 0
    %2314 = vmatprep.subr.bf16.mxu0 0
    %2315 = vmatpush1.bf16.msra.mxu0 0
    %2316 = vmatprep.subr.bf16.mxu0 0
    %2317 = vmatpush1.bf16.msra.mxu0 0
    %2318 = vmatprep.mubr.bf16.mxu0 0
    %2319 = vmatmul.mubr.bf16.gmra.mrb[0].mxu0 %v2284
    %v2320 = vpop.f32.mrb[0].mxu0
    %v2321 = vadd.f32 %v1965, %v2320
    %v2322 = vpop.f32.mrb[0].mxu0
    %v2323 = vpop.f32.mrb[0].mxu0
    %v2324 = vpop.f32.mrb[0].mxu0
    %2325 = vdwg.mxu0
    %v2327 = vsel %vm1797, %v1693, 0
    %2329 = vmatprep.subr.bf16.mxu0 0
    %2330 = vmatpush1.bf16.msra.mxu0 %v2150
    %2331 = vmatprep.subr.bf16.mxu0 0
    %2332 = vmatpush1.bf16.msra.mxu0 %v2151
    %2333 = vmatprep.subr.bf16.mxu0 0
    %2334 = vmatpush1.bf16.msra.mxu0 0
    %2335 = vmatprep.subr.bf16.mxu0 0
    %2336 = vmatpush1.bf16.msra.mxu0 0
    %2337 = vmatprep.subr.bf16.mxu0 0
    %2338 = vmatpush1.bf16.msra.mxu0 0
    %2339 = vmatprep.subr.bf16.mxu0 0
    %2340 = vmatpush1.bf16.msra.mxu0 0
    %2341 = vmatprep.subr.bf16.mxu0 0
    %2342 = vmatpush1.bf16.msra.mxu0 0
    %2343 = vmatprep.subr.bf16.mxu0 0
    %2344 = vmatpush1.bf16.msra.mxu0 0
    %2345 = vmatprep.subr.bf16.mxu0 0
    %2346 = vmatpush1.bf16.msra.mxu0 0
    %2347 = vmatprep.subr.bf16.mxu0 0
    %2348 = vmatpush1.bf16.msra.mxu0 0
    %2349 = vmatprep.subr.bf16.mxu0 0
    %2350 = vmatpush1.bf16.msra.mxu0 0
    %2351 = vmatprep.subr.bf16.mxu0 0
    %2352 = vmatpush1.bf16.msra.mxu0 0
    %2353 = vmatprep.subr.bf16.mxu0 0
    %2354 = vmatpush1.bf16.msra.mxu0 0
    %2355 = vmatprep.subr.bf16.mxu0 0
    %2356 = vmatpush1.bf16.msra.mxu0 0
    %2357 = vmatprep.subr.bf16.mxu0 0
    %2358 = vmatpush1.bf16.msra.mxu0 0
    %2359 = vmatprep.subr.bf16.mxu0 0
    %2360 = vmatpush1.bf16.msra.mxu0 0
    %2361 = vmatprep.mubr.bf16.mxu0 0
    %2362 = vmatmul.mubr.bf16.gmra.mrb[0].mxu0 %v2327
    %v2363 = vpop.f32.mrb[0].mxu0
    %v2364 = vadd.f32 %v2008, %v2363
    %v2365 = vpop.f32.mrb[0].mxu0
    %v2366 = vpop.f32.mrb[0].mxu0
    %v2367 = vpop.f32.mrb[0].mxu0
    %2368 = vdwg.mxu0
    %v2370 = vsel %vm1797, %v1694, 0
    %2372 = vmatprep.subr.bf16.mxu0 0
    %2373 = vmatpush1.bf16.msra.mxu0 %v2150
    %2374 = vmatprep.subr.bf16.mxu0 0
    %2375 = vmatpush1.bf16.msra.mxu0 %v2151
    %2376 = vmatprep.subr.bf16.mxu0 0
    %2377 = vmatpush1.bf16.msra.mxu0 0
    %2378 = vmatprep.subr.bf16.mxu0 0
    %2379 = vmatpush1.bf16.msra.mxu0 0
    %2380 = vmatprep.subr.bf16.mxu0 0
    %2381 = vmatpush1.bf16.msra.mxu0 0
    %2382 = vmatprep.subr.bf16.mxu0 0
    %2383 = vmatpush1.bf16.msra.mxu0 0
    %2384 = vmatprep.subr.bf16.mxu0 0
    %2385 = vmatpush1.bf16.msra.mxu0 0
    %2386 = vmatprep.subr.bf16.mxu0 0
    %2387 = vmatpush1.bf16.msra.mxu0 0
    %2388 = vmatprep.subr.bf16.mxu0 0
    %2389 = vmatpush1.bf16.msra.mxu0 0
    %2390 = vmatprep.subr.bf16.mxu0 0
    %2391 = vmatpush1.bf16.msra.mxu0 0
    %2392 = vmatprep.subr.bf16.mxu0 0
    %2393 = vmatpush1.bf16.msra.mxu0 0
    %2394 = vmatprep.subr.bf16.mxu0 0
    %2395 = vmatpush1.bf16.msra.mxu0 0
    %2396 = vmatprep.subr.bf16.mxu0 0
    %2397 = vmatpush1.bf16.msra.mxu0 0
    %2398 = vmatprep.subr.bf16.mxu0 0
    %2399 = vmatpush1.bf16.msra.mxu0 0
    %2400 = vmatprep.subr.bf16.mxu0 0
    %2401 = vmatpush1.bf16.msra.mxu0 0
    %2402 = vmatprep.subr.bf16.mxu0 0
    %2403 = vmatpush1.bf16.msra.mxu0 0
    %2404 = vmatprep.mubr.bf16.mxu0 0
    %2405 = vmatmul.mubr.bf16.gmra.mrb[0].mxu0 %v2370
    %v2406 = vpop.f32.mrb[0].mxu0
    %v2407 = vadd.f32 %v2051, %v2406
    %v2408 = vpop.f32.mrb[0].mxu0
    %v2409 = vpop.f32.mrb[0].mxu0
    %v2410 = vpop.f32.mrb[0].mxu0
    %2411 = vdwg.mxu0
    %v2413 = vsel %vm1797, %v1695, 0
    %2415 = vmatprep.subr.bf16.mxu0 0
    %2416 = vmatpush1.bf16.msra.mxu0 %v2150
    %2417 = vmatprep.subr.bf16.mxu0 0
    %2418 = vmatpush1.bf16.msra.mxu0 %v2151
    %2419 = vmatprep.subr.bf16.mxu0 0
    %2420 = vmatpush1.bf16.msra.mxu0 0
    %2421 = vmatprep.subr.bf16.mxu0 0
    %2422 = vmatpush1.bf16.msra.mxu0 0
    %2423 = vmatprep.subr.bf16.mxu0 0
    %2424 = vmatpush1.bf16.msra.mxu0 0
    %2425 = vmatprep.subr.bf16.mxu0 0
    %2426 = vmatpush1.bf16.msra.mxu0 0
    %2427 = vmatprep.subr.bf16.mxu0 0
    %2428 = vmatpush1.bf16.msra.mxu0 0
    %2429 = vmatprep.subr.bf16.mxu0 0
    %2430 = vmatpush1.bf16.msra.mxu0 0
    %2431 = vmatprep.subr.bf16.mxu0 0
    %2432 = vmatpush1.bf16.msra.mxu0 0
    %2433 = vmatprep.subr.bf16.mxu0 0
    %2434 = vmatpush1.bf16.msra.mxu0 0
    %2435 = vmatprep.subr.bf16.mxu0 0
    %2436 = vmatpush1.bf16.msra.mxu0 0
    %2437 = vmatprep.subr.bf16.mxu0 0
    %2438 = vmatpush1.bf16.msra.mxu0 0
    %2439 = vmatprep.subr.bf16.mxu0 0
    %2440 = vmatpush1.bf16.msra.mxu0 0
    %2441 = vmatprep.subr.bf16.mxu0 0
    %2442 = vmatpush1.bf16.msra.mxu0 0
    %2443 = vmatprep.subr.bf16.mxu0 0
    %2444 = vmatpush1.bf16.msra.mxu0 0
    %2445 = vmatprep.subr.bf16.mxu0 0
    %2446 = vmatpush1.bf16.msra.mxu0 0
    %2447 = vmatprep.mubr.bf16.mxu0 0
    %2448 = vmatmul.mubr.bf16.gmra.mrb[0].mxu0 %v2413
    %v2449 = vpop.f32.mrb[0].mxu0
    %v2450 = vadd.f32 %v2094, %v2449
    %v2451 = vpop.f32.mrb[0].mxu0
    %v2452 = vpop.f32.mrb[0].mxu0
    %v2453 = vpop.f32.mrb[0].mxu0
    %2454 = vdwg.mxu0
    %v2456 = vsel %vm1797, %v1696, 0
    %2458 = vmatprep.subr.bf16.mxu0 0
    %2459 = vmatpush1.bf16.msra.mxu0 %v2150
    %2460 = vmatprep.subr.bf16.mxu0 0
    %2461 = vmatpush1.bf16.msra.mxu0 %v2151
    %2462 = vmatprep.subr.bf16.mxu0 0
    %2463 = vmatpush1.bf16.msra.mxu0 0
    %2464 = vmatprep.subr.bf16.mxu0 0
    %2465 = vmatpush1.bf16.msra.mxu0 0
    %2466 = vmatprep.subr.bf16.mxu0 0
    %2467 = vmatpush1.bf16.msra.mxu0 0
    %2468 = vmatprep.subr.bf16.mxu0 0
    %2469 = vmatpush1.bf16.msra.mxu0 0
    %2470 = vmatprep.subr.bf16.mxu0 0
    %2471 = vmatpush1.bf16.msra.mxu0 0
    %2472 = vmatprep.subr.bf16.mxu0 0
    %2473 = vmatpush1.bf16.msra.mxu0 0
    %2474 = vmatprep.subr.bf16.mxu0 0
    %2475 = vmatpush1.bf16.msra.mxu0 0
    %2476 = vmatprep.subr.bf16.mxu0 0
    %2477 = vmatpush1.bf16.msra.mxu0 0
    %2478 = vmatprep.subr.bf16.mxu0 0
    %2479 = vmatpush1.bf16.msra.mxu0 0
    %2480 = vmatprep.subr.bf16.mxu0 0
    %2481 = vmatpush1.bf16.msra.mxu0 0
    %2482 = vmatprep.subr.bf16.mxu0 0
    %2483 = vmatpush1.bf16.msra.mxu0 0
    %2484 = vmatprep.subr.bf16.mxu0 0
    %2485 = vmatpush1.bf16.msra.mxu0 0
    %2486 = vmatprep.subr.bf16.mxu0 0
    %2487 = vmatpush1.bf16.msra.mxu0 0
    %2488 = vmatprep.subr.bf16.mxu0 0
    %2489 = vmatpush1.bf16.msra.mxu0 0
    %2490 = vmatprep.mubr.bf16.mxu0 0
    %2491 = vmatmul.mubr.bf16.gmra.mrb[0].mxu0 %v2456
    %v2492 = vpop.f32.mrb[0].mxu0
    %v2493 = vadd.f32 %v2137, %v2492
    %v2494 = vpop.f32.mrb[0].mxu0
    %v2495 = vpop.f32.mrb[0].mxu0
    %v2496 = vpop.f32.mrb[0].mxu0
    %2497 = vdwg.mxu0
    %v2498 = vld [vmem:[%s9] sm:$0x1]
    %v2500 = vlaneseq
    %v2501 = vshrl.u32 %v2500, 7
    %v2502 = vsub.s32 0, %v2501
    %v2503 = vrot.slane %v2498, %v2502
    %v2505 = vadd.f32 %v2192, %v2503
    %v2506 = vadd.f32 %v2235, %v2503
    %v2507 = vadd.f32 %v2278, %v2503
    %v2508 = vadd.f32 %v2321, %v2503
    %v2509 = vadd.f32 %v2364, %v2503
    %v2510 = vadd.f32 %v2407, %v2503
    %v2511 = vadd.f32 %v2450, %v2503
    %v2512 = vadd.f32 %v2493, %v2503
    %v2513 = vmax.f32 %v2505, 0.0
    %v2514 = vmax.f32 %v2506, 0.0
    %v2515 = vmax.f32 %v2507, 0.0
    %v2516 = vmax.f32 %v2508, 0.0
    %v2517 = vmax.f32 %v2509, 0.0
    %v2518 = vmax.f32 %v2510, 0.0
    %v2519 = vmax.f32 %v2511, 0.0
    %v2520 = vmax.f32 %v2512, 0.0
    %v2521 = vpack.c.bf16 %v2513, %v2513
    %v2522 = vpack.c.bf16 %v2514, %v2514
    %v2523 = vpack.c.bf16 %v2515, %v2515
    %v2524 = vpack.c.bf16 %v2516, %v2516
    %v2525 = vpack.c.bf16 %v2517, %v2517
    %v2526 = vpack.c.bf16 %v2518, %v2518
    %v2527 = vpack.c.bf16 %v2519, %v2519
    %v2528 = vpack.c.bf16 %v2520, %v2520
    %v2529 = vld [vmem:[%s10] sm:$0xf]
    %v2530 = vld [vmem:[%s10 + $0x4] sm:$0xf]
    %v2531 = vld [vmem:[%s10 + $0x8] sm:$0xf]
    %v2532 = vld [vmem:[%s10 + $0xc] sm:$0xf]
    %v2533 = vld [vmem:[%s11] sm:$0x1]
    %v2535 = vlaneseq
    %v2536 = vshrl.u32 %v2535, 7
    %v2537 = vsub.s32 0, %v2536
    %v2538 = vrot.slane %v2533, %v2537
    %v2544 = vunpack.c.l.b16 %v2529
    %v2545 = vunpack.c.l.b16 %v2530
    %v2546 = vunpack.c.l.b16 %v2531
    %v2547 = vunpack.c.l.b16 %v2532
    %v2548 = vpack.c.b16 %v2545, %v2544
    %v2549 = vpack.c.b16 %v2547, %v2546
    %v2553 = vsel %vm1797, %v2521, 0
    %2555 = vmatprep.subr.bf16.mxu0 0
    %2556 = vmatpush1.bf16.msra.mxu0 %v2548
    %2557 = vmatprep.subr.bf16.mxu0 0
    %2558 = vmatpush1.bf16.msra.mxu0 %v2549
    %2559 = vmatprep.subr.bf16.mxu0 0
    %2560 = vmatpush1.bf16.msra.mxu0 0
    %2561 = vmatprep.subr.bf16.mxu0 0
    %2562 = vmatpush1.bf16.msra.mxu0 0
    %2563 = vmatprep.subr.bf16.mxu0 0
    %2564 = vmatpush1.bf16.msra.mxu0 0
    %2565 = vmatprep.subr.bf16.mxu0 0
    %2566 = vmatpush1.bf16.msra.mxu0 0
    %2567 = vmatprep.subr.bf16.mxu0 0
    %2568 = vmatpush1.bf16.msra.mxu0 0
    %2569 = vmatprep.subr.bf16.mxu0 0
    %2570 = vmatpush1.bf16.msra.mxu0 0
    %2571 = vmatprep.subr.bf16.mxu0 0
    %2572 = vmatpush1.bf16.msra.mxu0 0
    %2573 = vmatprep.subr.bf16.mxu0 0
    %2574 = vmatpush1.bf16.msra.mxu0 0
    %2575 = vmatprep.subr.bf16.mxu0 0
    %2576 = vmatpush1.bf16.msra.mxu0 0
    %2577 = vmatprep.subr.bf16.mxu0 0
    %2578 = vmatpush1.bf16.msra.mxu0 0
    %2579 = vmatprep.subr.bf16.mxu0 0
    %2580 = vmatpush1.bf16.msra.mxu0 0
    %2581 = vmatprep.subr.bf16.mxu0 0
    %2582 = vmatpush1.bf16.msra.mxu0 0
    %2583 = vmatprep.subr.bf16.mxu0 0
    %2584 = vmatpush1.bf16.msra.mxu0 0
    %2585 = vmatprep.subr.bf16.mxu0 0
    %2586 = vmatpush1.bf16.msra.mxu0 0
    %2587 = vmatprep.mubr.bf16.mxu0 0
    %2588 = vmatmul.mubr.bf16.gmra.mrb[0].mxu0 %v2553
    %v2589 = vpop.f32.mrb[0].mxu0
    %v2590 = vadd.f32 %v2538, %v2589
    %v2591 = vpop.f32.mrb[0].mxu0
    %v2592 = vpop.f32.mrb[0].mxu0
    %v2593 = vpop.f32.mrb[0].mxu0
    %2594 = vdwg.mxu0
    %v2596 = vsel %vm1797, %v2522, 0
    %2598 = vmatprep.subr.bf16.mxu0 0
    %2599 = vmatpush1.bf16.msra.mxu0 %v2548
    %2600 = vmatprep.subr.bf16.mxu0 0
    %2601 = vmatpush1.bf16.msra.mxu0 %v2549
    %2602 = vmatprep.subr.bf16.mxu0 0
    %2603 = vmatpush1.bf16.msra.mxu0 0
    %2604 = vmatprep.subr.bf16.mxu0 0
    %2605 = vmatpush1.bf16.msra.mxu0 0
    %2606 = vmatprep.subr.bf16.mxu0 0
    %2607 = vmatpush1.bf16.msra.mxu0 0
    %2608 = vmatprep.subr.bf16.mxu0 0
    %2609 = vmatpush1.bf16.msra.mxu0 0
    %2610 = vmatprep.subr.bf16.mxu0 0
    %2611 = vmatpush1.bf16.msra.mxu0 0
    %2612 = vmatprep.subr.bf16.mxu0 0
    %2613 = vmatpush1.bf16.msra.mxu0 0
    %2614 = vmatprep.subr.bf16.mxu0 0
    %2615 = vmatpush1.bf16.msra.mxu0 0
    %2616 = vmatprep.subr.bf16.mxu0 0
    %2617 = vmatpush1.bf16.msra.mxu0 0
    %2618 = vmatprep.subr.bf16.mxu0 0
    %2619 = vmatpush1.bf16.msra.mxu0 0
    %2620 = vmatprep.subr.bf16.mxu0 0
    %2621 = vmatpush1.bf16.msra.mxu0 0
    %2622 = vmatprep.subr.bf16.mxu0 0
    %2623 = vmatpush1.bf16.msra.mxu0 0
    %2624 = vmatprep.subr.bf16.mxu0 0
    %2625 = vmatpush1.bf16.msra.mxu0 0
    %2626 = vmatprep.subr.bf16.mxu0 0
    %2627 = vmatpush1.bf16.msra.mxu0 0
    %2628 = vmatprep.subr.bf16.mxu0 0
    %2629 = vmatpush1.bf16.msra.mxu0 0
    %2630 = vmatprep.mubr.bf16.mxu0 0
    %2631 = vmatmul.mubr.bf16.gmra.mrb[0].mxu0 %v2596
    %v2632 = vpop.f32.mrb[0].mxu0
    %v2633 = vadd.f32 %v2538, %v2632
    %v2634 = vpop.f32.mrb[0].mxu0
    %v2635 = vpop.f32.mrb[0].mxu0
    %v2636 = vpop.f32.mrb[0].mxu0
    %2637 = vdwg.mxu0
    %v2639 = vsel %vm1797, %v2523, 0
    %2641 = vmatprep.subr.bf16.mxu0 0
    %2642 = vmatpush1.bf16.msra.mxu0 %v2548
    %2643 = vmatprep.subr.bf16.mxu0 0
    %2644 = vmatpush1.bf16.msra.mxu0 %v2549
    %2645 = vmatprep.subr.bf16.mxu0 0
    %2646 = vmatpush1.bf16.msra.mxu0 0
    %2647 = vmatprep.subr.bf16.mxu0 0
    %2648 = vmatpush1.bf16.msra.mxu0 0
    %2649 = vmatprep.subr.bf16.mxu0 0
    %2650 = vmatpush1.bf16.msra.mxu0 0
    %2651 = vmatprep.subr.bf16.mxu0 0
    %2652 = vmatpush1.bf16.msra.mxu0 0
    %2653 = vmatprep.subr.bf16.mxu0 0
    %2654 = vmatpush1.bf16.msra.mxu0 0
    %2655 = vmatprep.subr.bf16.mxu0 0
    %2656 = vmatpush1.bf16.msra.mxu0 0
    %2657 = vmatprep.subr.bf16.mxu0 0
    %2658 = vmatpush1.bf16.msra.mxu0 0
    %2659 = vmatprep.subr.bf16.mxu0 0
    %2660 = vmatpush1.bf16.msra.mxu0 0
    %2661 = vmatprep.subr.bf16.mxu0 0
    %2662 = vmatpush1.bf16.msra.mxu0 0
    %2663 = vmatprep.subr.bf16.mxu0 0
    %2664 = vmatpush1.bf16.msra.mxu0 0
    %2665 = vmatprep.subr.bf16.mxu0 0
    %2666 = vmatpush1.bf16.msra.mxu0 0
    %2667 = vmatprep.subr.bf16.mxu0 0
    %2668 = vmatpush1.bf16.msra.mxu0 0
    %2669 = vmatprep.subr.bf16.mxu0 0
    %2670 = vmatpush1.bf16.msra.mxu0 0
    %2671 = vmatprep.subr.bf16.mxu0 0
    %2672 = vmatpush1.bf16.msra.mxu0 0
    %2673 = vmatprep.mubr.bf16.mxu0 0
    %2674 = vmatmul.mubr.bf16.gmra.mrb[0].mxu0 %v2639
    %v2675 = vpop.f32.mrb[0].mxu0
    %v2676 = vadd.f32 %v2538, %v2675
    %v2677 = vpop.f32.mrb[0].mxu0
    %v2678 = vpop.f32.mrb[0].mxu0
    %v2679 = vpop.f32.mrb[0].mxu0
    %2680 = vdwg.mxu0
    %v2682 = vsel %vm1797, %v2524, 0
    %2684 = vmatprep.subr.bf16.mxu0 0
    %2685 = vmatpush1.bf16.msra.mxu0 %v2548
    %2686 = vmatprep.subr.bf16.mxu0 0
    %2687 = vmatpush1.bf16.msra.mxu0 %v2549
    %2688 = vmatprep.subr.bf16.mxu0 0
    %2689 = vmatpush1.bf16.msra.mxu0 0
    %2690 = vmatprep.subr.bf16.mxu0 0
    %2691 = vmatpush1.bf16.msra.mxu0 0
    %2692 = vmatprep.subr.bf16.mxu0 0
    %2693 = vmatpush1.bf16.msra.mxu0 0
    %2694 = vmatprep.subr.bf16.mxu0 0
    %2695 = vmatpush1.bf16.msra.mxu0 0
    %2696 = vmatprep.subr.bf16.mxu0 0
    %2697 = vmatpush1.bf16.msra.mxu0 0
    %2698 = vmatprep.subr.bf16.mxu0 0
    %2699 = vmatpush1.bf16.msra.mxu0 0
    %2700 = vmatprep.subr.bf16.mxu0 0
    %2701 = vmatpush1.bf16.msra.mxu0 0
    %2702 = vmatprep.subr.bf16.mxu0 0
    %2703 = vmatpush1.bf16.msra.mxu0 0
    %2704 = vmatprep.subr.bf16.mxu0 0
    %2705 = vmatpush1.bf16.msra.mxu0 0
    %2706 = vmatprep.subr.bf16.mxu0 0
    %2707 = vmatpush1.bf16.msra.mxu0 0
    %2708 = vmatprep.subr.bf16.mxu0 0
    %2709 = vmatpush1.bf16.msra.mxu0 0
    %2710 = vmatprep.subr.bf16.mxu0 0
    %2711 = vmatpush1.bf16.msra.mxu0 0
    %2712 = vmatprep.subr.bf16.mxu0 0
    %2713 = vmatpush1.bf16.msra.mxu0 0
    %2714 = vmatprep.subr.bf16.mxu0 0
    %2715 = vmatpush1.bf16.msra.mxu0 0
    %2716 = vmatprep.mubr.bf16.mxu0 0
    %2717 = vmatmul.mubr.bf16.gmra.mrb[0].mxu0 %v2682
    %v2718 = vpop.f32.mrb[0].mxu0
    %v2719 = vadd.f32 %v2538, %v2718
    %v2720 = vpop.f32.mrb[0].mxu0
    %v2721 = vpop.f32.mrb[0].mxu0
    %v2722 = vpop.f32.mrb[0].mxu0
    %2723 = vdwg.mxu0
    %v2725 = vsel %vm1797, %v2525, 0
    %2727 = vmatprep.subr.bf16.mxu0 0
    %2728 = vmatpush1.bf16.msra.mxu0 %v2548
    %2729 = vmatprep.subr.bf16.mxu0 0
    %2730 = vmatpush1.bf16.msra.mxu0 %v2549
    %2731 = vmatprep.subr.bf16.mxu0 0
    %2732 = vmatpush1.bf16.msra.mxu0 0
    %2733 = vmatprep.subr.bf16.mxu0 0
    %2734 = vmatpush1.bf16.msra.mxu0 0
    %2735 = vmatprep.subr.bf16.mxu0 0
    %2736 = vmatpush1.bf16.msra.mxu0 0
    %2737 = vmatprep.subr.bf16.mxu0 0
    %2738 = vmatpush1.bf16.msra.mxu0 0
    %2739 = vmatprep.subr.bf16.mxu0 0
    %2740 = vmatpush1.bf16.msra.mxu0 0
    %2741 = vmatprep.subr.bf16.mxu0 0
    %2742 = vmatpush1.bf16.msra.mxu0 0
    %2743 = vmatprep.subr.bf16.mxu0 0
    %2744 = vmatpush1.bf16.msra.mxu0 0
    %2745 = vmatprep.subr.bf16.mxu0 0
    %2746 = vmatpush1.bf16.msra.mxu0 0
    %2747 = vmatprep.subr.bf16.mxu0 0
    %2748 = vmatpush1.bf16.msra.mxu0 0
    %2749 = vmatprep.subr.bf16.mxu0 0
    %2750 = vmatpush1.bf16.msra.mxu0 0
    %2751 = vmatprep.subr.bf16.mxu0 0
    %2752 = vmatpush1.bf16.msra.mxu0 0
    %2753 = vmatprep.subr.bf16.mxu0 0
    %2754 = vmatpush1.bf16.msra.mxu0 0
    %2755 = vmatprep.subr.bf16.mxu0 0
    %2756 = vmatpush1.bf16.msra.mxu0 0
    %2757 = vmatprep.subr.bf16.mxu0 0
    %2758 = vmatpush1.bf16.msra.mxu0 0
    %2759 = vmatprep.mubr.bf16.mxu0 0
    %2760 = vmatmul.mubr.bf16.gmra.mrb[0].mxu0 %v2725
    %v2761 = vpop.f32.mrb[0].mxu0
    %v2762 = vadd.f32 %v2538, %v2761
    %v2763 = vpop.f32.mrb[0].mxu0
    %v2764 = vpop.f32.mrb[0].mxu0
    %v2765 = vpop.f32.mrb[0].mxu0
    %2766 = vdwg.mxu0
    %v2768 = vsel %vm1797, %v2526, 0
    %2770 = vmatprep.subr.bf16.mxu0 0
    %2771 = vmatpush1.bf16.msra.mxu0 %v2548
    %2772 = vmatprep.subr.bf16.mxu0 0
    %2773 = vmatpush1.bf16.msra.mxu0 %v2549
    %2774 = vmatprep.subr.bf16.mxu0 0
    %2775 = vmatpush1.bf16.msra.mxu0 0
    %2776 = vmatprep.subr.bf16.mxu0 0
    %2777 = vmatpush1.bf16.msra.mxu0 0
    %2778 = vmatprep.subr.bf16.mxu0 0
    %2779 = vmatpush1.bf16.msra.mxu0 0
    %2780 = vmatprep.subr.bf16.mxu0 0
    %2781 = vmatpush1.bf16.msra.mxu0 0
    %2782 = vmatprep.subr.bf16.mxu0 0
    %2783 = vmatpush1.bf16.msra.mxu0 0
    %2784 = vmatprep.subr.bf16.mxu0 0
    %2785 = vmatpush1.bf16.msra.mxu0 0
    %2786 = vmatprep.subr.bf16.mxu0 0
    %2787 = vmatpush1.bf16.msra.mxu0 0
    %2788 = vmatprep.subr.bf16.mxu0 0
    %2789 = vmatpush1.bf16.msra.mxu0 0
    %2790 = vmatprep.subr.bf16.mxu0 0
    %2791 = vmatpush1.bf16.msra.mxu0 0
    %2792 = vmatprep.subr.bf16.mxu0 0
    %2793 = vmatpush1.bf16.msra.mxu0 0
    %2794 = vmatprep.subr.bf16.mxu0 0
    %2795 = vmatpush1.bf16.msra.mxu0 0
    %2796 = vmatprep.subr.bf16.mxu0 0
    %2797 = vmatpush1.bf16.msra.mxu0 0
    %2798 = vmatprep.subr.bf16.mxu0 0
    %2799 = vmatpush1.bf16.msra.mxu0 0
    %2800 = vmatprep.subr.bf16.mxu0 0
    %2801 = vmatpush1.bf16.msra.mxu0 0
    %2802 = vmatprep.mubr.bf16.mxu0 0
    %2803 = vmatmul.mubr.bf16.gmra.mrb[0].mxu0 %v2768
    %v2804 = vpop.f32.mrb[0].mxu0
    %v2805 = vadd.f32 %v2538, %v2804
    %v2806 = vpop.f32.mrb[0].mxu0
    %v2807 = vpop.f32.mrb[0].mxu0
    %v2808 = vpop.f32.mrb[0].mxu0
    %2809 = vdwg.mxu0
    %v2811 = vsel %vm1797, %v2527, 0
    %2813 = vmatprep.subr.bf16.mxu0 0
    %2814 = vmatpush1.bf16.msra.mxu0 %v2548
    %2815 = vmatprep.subr.bf16.mxu0 0
    %2816 = vmatpush1.bf16.msra.mxu0 %v2549
    %2817 = vmatprep.subr.bf16.mxu0 0
    %2818 = vmatpush1.bf16.msra.mxu0 0
    %2819 = vmatprep.subr.bf16.mxu0 0
    %2820 = vmatpush1.bf16.msra.mxu0 0
    %2821 = vmatprep.subr.bf16.mxu0 0
    %2822 = vmatpush1.bf16.msra.mxu0 0
    %2823 = vmatprep.subr.bf16.mxu0 0
    %2824 = vmatpush1.bf16.msra.mxu0 0
    %2825 = vmatprep.subr.bf16.mxu0 0
    %2826 = vmatpush1.bf16.msra.mxu0 0
    %2827 = vmatprep.subr.bf16.mxu0 0
    %2828 = vmatpush1.bf16.msra.mxu0 0
    %2829 = vmatprep.subr.bf16.mxu0 0
    %2830 = vmatpush1.bf16.msra.mxu0 0
    %2831 = vmatprep.subr.bf16.mxu0 0
    %2832 = vmatpush1.bf16.msra.mxu0 0
    %2833 = vmatprep.subr.bf16.mxu0 0
    %2834 = vmatpush1.bf16.msra.mxu0 0
    %2835 = vmatprep.subr.bf16.mxu0 0
    %2836 = vmatpush1.bf16.msra.mxu0 0
    %2837 = vmatprep.subr.bf16.mxu0 0
    %2838 = vmatpush1.bf16.msra.mxu0 0
    %2839 = vmatprep.subr.bf16.mxu0 0
    %2840 = vmatpush1.bf16.msra.mxu0 0
    %2841 = vmatprep.subr.bf16.mxu0 0
    %2842 = vmatpush1.bf16.msra.mxu0 0
    %2843 = vmatprep.subr.bf16.mxu0 0
    %2844 = vmatpush1.bf16.msra.mxu0 0
    %2845 = vmatprep.mubr.bf16.mxu0 0
    %2846 = vmatmul.mubr.bf16.gmra.mrb[0].mxu0 %v2811
    %v2847 = vpop.f32.mrb[0].mxu0
    %v2848 = vadd.f32 %v2538, %v2847
    %v2849 = vpop.f32.mrb[0].mxu0
    %v2850 = vpop.f32.mrb[0].mxu0
    %v2851 = vpop.f32.mrb[0].mxu0
    %2852 = vdwg.mxu0
    %v2854 = vsel %vm1797, %v2528, 0
    %2856 = vmatprep.subr.bf16.mxu0 0
    %2857 = vmatpush1.bf16.msra.mxu0 %v2548
    %2858 = vmatprep.subr.bf16.mxu0 0
    %2859 = vmatpush1.bf16.msra.mxu0 %v2549
    %2860 = vmatprep.subr.bf16.mxu0 0
    %2861 = vmatpush1.bf16.msra.mxu0 0
    %2862 = vmatprep.subr.bf16.mxu0 0
    %2863 = vmatpush1.bf16.msra.mxu0 0
    %2864 = vmatprep.subr.bf16.mxu0 0
    %2865 = vmatpush1.bf16.msra.mxu0 0
    %2866 = vmatprep.subr.bf16.mxu0 0
    %2867 = vmatpush1.bf16.msra.mxu0 0
    %2868 = vmatprep.subr.bf16.mxu0 0
    %2869 = vmatpush1.bf16.msra.mxu0 0
    %2870 = vmatprep.subr.bf16.mxu0 0
    %2871 = vmatpush1.bf16.msra.mxu0 0
    %2872 = vmatprep.subr.bf16.mxu0 0
    %2873 = vmatpush1.bf16.msra.mxu0 0
    %2874 = vmatprep.subr.bf16.mxu0 0
    %2875 = vmatpush1.bf16.msra.mxu0 0
    %2876 = vmatprep.subr.bf16.mxu0 0
    %2877 = vmatpush1.bf16.msra.mxu0 0
    %2878 = vmatprep.subr.bf16.mxu0 0
    %2879 = vmatpush1.bf16.msra.mxu0 0
    %2880 = vmatprep.subr.bf16.mxu0 0
    %2881 = vmatpush1.bf16.msra.mxu0 0
    %2882 = vmatprep.subr.bf16.mxu0 0
    %2883 = vmatpush1.bf16.msra.mxu0 0
    %2884 = vmatprep.subr.bf16.mxu0 0
    %2885 = vmatpush1.bf16.msra.mxu0 0
    %2886 = vmatprep.subr.bf16.mxu0 0
    %2887 = vmatpush1.bf16.msra.mxu0 0
    %2888 = vmatprep.mubr.bf16.mxu0 0
    %2889 = vmatmul.mubr.bf16.gmra.mrb[0].mxu0 %v2854
    %v2890 = vpop.f32.mrb[0].mxu0
    %v2891 = vadd.f32 %v2538, %v2890
    %v2892 = vpop.f32.mrb[0].mxu0
    %v2893 = vpop.f32.mrb[0].mxu0
    %v2894 = vpop.f32.mrb[0].mxu0
    %2895 = vdwg.mxu0
    %v2896 = vmax.f32 %v2590, 0.0
    %v2897 = vmax.f32 %v2633, 0.0
    %v2898 = vmax.f32 %v2676, 0.0
    %v2899 = vmax.f32 %v2719, 0.0
    %v2900 = vmax.f32 %v2762, 0.0
    %v2901 = vmax.f32 %v2805, 0.0
    %v2902 = vmax.f32 %v2848, 0.0
    %v2903 = vmax.f32 %v2891, 0.0
    %v2904 = vld [vmem:[%s12] sm:$0x1]
    %v2906 = vlaneseq
    %v2907 = vshrl.u32 %v2906, 7
    %v2908 = vsub.s32 0, %v2907
    %v2909 = vrot.slane %v2904, %v2908
    %v2911 = vmul.f32 %v2896, %v2909
    %v2912 = vmul.f32 %v2897, %v2909
    %v2913 = vmul.f32 %v2898, %v2909
    %v2914 = vmul.f32 %v2899, %v2909
    %v2915 = vmul.f32 %v2900, %v2909
    %v2916 = vmul.f32 %v2901, %v2909
    %v2917 = vmul.f32 %v2902, %v2909
    %v2918 = vmul.f32 %v2903, %v2909
    %vm2919 = vcmask 254976
    %v2920 = vsel %vm2919, %v2911, 0.0
    %2921 = vadd.xlane.f32.xlu0 %v2920
    %v2922 = vpop.xlane.xlu0 %2921
    %v2923 = vsel %vm2919, %v2912, 0.0
    %2924 = vadd.xlane.f32.xlu0 %v2923
    %v2925 = vpop.xlane.xlu0 %2924
    %v2926 = vsel %vm2919, %v2913, 0.0
    %2927 = vadd.xlane.f32.xlu0 %v2926
    %v2928 = vpop.xlane.xlu0 %2927
    %v2929 = vsel %vm2919, %v2914, 0.0
    %2930 = vadd.xlane.f32.xlu0 %v2929
    %v2931 = vpop.xlane.xlu0 %2930
    %v2932 = vsel %vm2919, %v2915, 0.0
    %2933 = vadd.xlane.f32.xlu0 %v2932
    %v2934 = vpop.xlane.xlu0 %2933
    %v2935 = vsel %vm2919, %v2916, 0.0
    %2936 = vadd.xlane.f32.xlu0 %v2935
    %v2937 = vpop.xlane.xlu0 %2936
    %v2938 = vsel %vm2919, %v2917, 0.0
    %2939 = vadd.xlane.f32.xlu0 %v2938
    %v2940 = vpop.xlane.xlu0 %2939
    %v2941 = vsel %vm2919, %v2918, 0.0
    %2942 = vadd.xlane.f32.xlu0 %v2941
    %v2943 = vpop.xlane.xlu0 %2942
    %v2944 = vld [vmem:[#allocation2] sm:$0x1]
    %v2946 = vlaneseq
    %v2947 = vshrl.u32 %v2946, 7
    %v2948 = vsub.s32 0, %v2947
    %v2949 = vrot.slane %v2944, %v2948
    %v2951 = vadd.f32 %v2922, %v2949
    %v2952 = vadd.f32 %v2925, %v2949
    %v2953 = vadd.f32 %v2928, %v2949
    %v2954 = vadd.f32 %v2931, %v2949
    %v2955 = vadd.f32 %v2934, %v2949
    %v2956 = vadd.f32 %v2937, %v2949
    %v2957 = vadd.f32 %v2940, %v2949
    %v2958 = vadd.f32 %v2943, %v2949
    %2959 = vst.msk [vmem:[#allocation3] sm:$0x3] %vm2919, %v1681
    %2960 = vst.msk [vmem:[#allocation3 + $0x4] sm:$0x3] %vm2919, %v1682
    %2961 = vst.msk [vmem:[#allocation3 + $0x8] sm:$0x3] %vm2919, %v1683
    %2962 = vst.msk [vmem:[#allocation3 + $0xc] sm:$0x3] %vm2919, %v1684
    %2963 = vst.msk [vmem:[#allocation3 + $0x10] sm:$0x3] %vm2919, %v1685
    %2964 = vst.msk [vmem:[#allocation3 + $0x14] sm:$0x3] %vm2919, %v1686
    %2965 = vst.msk [vmem:[#allocation3 + $0x18] sm:$0x3] %vm2919, %v1687
    %2966 = vst.msk [vmem:[#allocation3 + $0x1c] sm:$0x3] %vm2919, %v1688
    %v2983 = vcombine.low %v960, %v962
    %v2985 = vunpack.c.l.s4 1983009808
    %v2986 = vunpack.c.0.s8 %v2985
    %v2987 = vlaneseq
    %v2988 = vshrl.u32 %v2987, 7
    %v2989 = vsub.s32 %v2986, %v2988
    %v2990 = vrot.slane %v2983, %v2989
    %v2991 = vcombine.low %v1010, %v1012
    %v2993 = vunpack.c.l.s4 1983009808
    %v2994 = vunpack.c.0.s8 %v2993
    %v2995 = vlaneseq
    %v2996 = vshrl.u32 %v2995, 7
    %v2997 = vsub.s32 %v2994, %v2996
    %v2998 = vrot.slane %v2991, %v2997
    %v2999 = vcombine.low %v1060, %v1062
    %v3001 = vunpack.c.l.s4 1983009808
    %v3002 = vunpack.c.0.s8 %v3001
    %v3003 = vlaneseq
    %v3004 = vshrl.u32 %v3003, 7
    %v3005 = vsub.s32 %v3002, %v3004
    %v3006 = vrot.slane %v2999, %v3005
    %v3007 = vcombine.low %v1110, %v1112
    %v3009 = vunpack.c.l.s4 1983009808
    %v3010 = vunpack.c.0.s8 %v3009
    %v3011 = vlaneseq
    %v3012 = vshrl.u32 %v3011, 7
    %v3013 = vsub.s32 %v3010, %v3012
    %v3014 = vrot.slane %v3007, %v3013
    %v3015 = vcombine.low %v1160, %v1162
    %v3017 = vunpack.c.l.s4 1983009808
    %v3018 = vunpack.c.0.s8 %v3017
    %v3019 = vlaneseq
    %v3020 = vshrl.u32 %v3019, 7
    %v3021 = vsub.s32 %v3018, %v3020
    %v3022 = vrot.slane %v3015, %v3021
    %v3023 = vcombine.low %v1210, %v1212
    %v3025 = vunpack.c.l.s4 1983009808
    %v3026 = vunpack.c.0.s8 %v3025
    %v3027 = vlaneseq
    %v3028 = vshrl.u32 %v3027, 7
    %v3029 = vsub.s32 %v3026, %v3028
    %v3030 = vrot.slane %v3023, %v3029
    %v3031 = vcombine.low %v1260, %v1262
    %v3033 = vunpack.c.l.s4 1983009808
    %v3034 = vunpack.c.0.s8 %v3033
    %v3035 = vlaneseq
    %v3036 = vshrl.u32 %v3035, 7
    %v3037 = vsub.s32 %v3034, %v3036
    %v3038 = vrot.slane %v3031, %v3037
    %v3039 = vcombine.low %v1310, %v1312
    %v3041 = vunpack.c.l.s4 1983009808
    %v3042 = vunpack.c.0.s8 %v3041
    %v3043 = vlaneseq
    %v3044 = vshrl.u32 %v3043, 7
    %v3045 = vsub.s32 %v3042, %v3044
    %v3046 = vrot.slane %v3039, %v3045
    %3047 = vrot.lane.b32.xlu0 %v2990, 32
    %v3048 = vpop.permute.xlu0 %3047
    %3049 = vrot.lane.b32.xlu0 %v2998, 32
    %v3050 = vpop.permute.xlu0 %3049
    %3051 = vrot.lane.b32.xlu0 %v3006, 32
    %v3052 = vpop.permute.xlu0 %3051
    %3053 = vrot.lane.b32.xlu0 %v3014, 32
    %v3054 = vpop.permute.xlu0 %3053
    %3055 = vrot.lane.b32.xlu0 %v3022, 32
    %v3056 = vpop.permute.xlu0 %3055
    %3057 = vrot.lane.b32.xlu0 %v3030, 32
    %v3058 = vpop.permute.xlu0 %3057
    %3059 = vrot.lane.b32.xlu0 %v3038, 32
    %v3060 = vpop.permute.xlu0 %3059
    %3061 = vrot.lane.b32.xlu0 %v3046, 32
    %v3062 = vpop.permute.xlu0 %3061
    %v3063 = vrot.slane %v3048, 6
    %v3064 = vrot.slane %v3050, 6
    %v3065 = vrot.slane %v3052, 6
    %v3066 = vrot.slane %v3054, 6
    %v3067 = vrot.slane %v3056, 6
    %v3068 = vrot.slane %v3058, 6
    %v3069 = vrot.slane %v3060, 6
    %v3070 = vrot.slane %v3062, 6
    %v3071 = vsel %vm1797, %v3063, %v3048
    %v3072 = vsel %vm1797, %v3064, %v3050
    %v3073 = vsel %vm1797, %v3065, %v3052
    %v3074 = vsel %vm1797, %v3066, %v3054
    %v3075 = vsel %vm1797, %v3067, %v3056
    %v3076 = vsel %vm1797, %v3068, %v3058
    %v3077 = vsel %vm1797, %v3069, %v3060
    %v3078 = vsel %vm1797, %v3070, %v3062
    %vm3087 = vcmask 1041664
    %vm3088 = vcmask 519170
    %vm3089 = vmor %vm3088, %vm3087
    %3090 = vst.msk [vmem:[#allocation3] sm:$0xf] %vm3089, %v3071
    %3091 = vst.msk [vmem:[#allocation3 + $0x4] sm:$0xf] %vm3089, %v3072
    %3092 = vst.msk [vmem:[#allocation3 + $0x8] sm:$0xf] %vm3089, %v3073
    %3093 = vst.msk [vmem:[#allocation3 + $0xc] sm:$0xf] %vm3089, %v3074
    %3094 = vst.msk [vmem:[#allocation3 + $0x10] sm:$0xf] %vm3089, %v3075
    %3095 = vst.msk [vmem:[#allocation3 + $0x14] sm:$0xf] %vm3089, %v3076
    %3096 = vst.msk [vmem:[#allocation3 + $0x18] sm:$0xf] %vm3089, %v3077
    %3097 = vst.msk [vmem:[#allocation3 + $0x1c] sm:$0xf] %vm3089, %v3078
    %3099 = vset.pattern.permute.xlu0 0
    %3100 = vperm.xlu0 %3099, %v2951
    %v3101 = vpop.permute.xlu0 %3100
    %3104 = vset.pattern.permute.xlu0 0
    %3105 = vperm.xlu0 %3104, %v2952
    %v3106 = vpop.permute.xlu0 %3105
    %3109 = vset.pattern.permute.xlu0 0
    %3110 = vperm.xlu0 %3109, %v2953
    %v3111 = vpop.permute.xlu0 %3110
    %3114 = vset.pattern.permute.xlu0 0
    %3115 = vperm.xlu0 %3114, %v2954
    %v3116 = vpop.permute.xlu0 %3115
    %3119 = vset.pattern.permute.xlu0 0
    %3120 = vperm.xlu0 %3119, %v2955
    %v3121 = vpop.permute.xlu0 %3120
    %3124 = vset.pattern.permute.xlu0 0
    %3125 = vperm.xlu0 %3124, %v2956
    %v3126 = vpop.permute.xlu0 %3125
    %3129 = vset.pattern.permute.xlu0 0
    %3130 = vperm.xlu0 %3129, %v2957
    %v3131 = vpop.permute.xlu0 %3130
    %3134 = vset.pattern.permute.xlu0 0
    %3135 = vperm.xlu0 %3134, %v2958
    %v3136 = vpop.permute.xlu0 %3135
    %vm3138 = vcmask 1041920
    %3139 = vst.msk [vmem:[#allocation3 + $0x2] sm:$0x3] %vm3138, %v3101
    %3140 = vst.msk [vmem:[#allocation3 + $0x6] sm:$0x3] %vm3138, %v3106
    %3141 = vst.msk [vmem:[#allocation3 + $0xa] sm:$0x3] %vm3138, %v3111
    %3142 = vst.msk [vmem:[#allocation3 + $0xe] sm:$0x3] %vm3138, %v3116
    %3143 = vst.msk [vmem:[#allocation3 + $0x12] sm:$0x3] %vm3138, %v3121
    %3144 = vst.msk [vmem:[#allocation3 + $0x16] sm:$0x3] %vm3138, %v3126
    %3145 = vst.msk [vmem:[#allocation3 + $0x1a] sm:$0x3] %vm3138, %v3131
    %3146 = vst.msk [vmem:[#allocation3 + $0x1e] sm:$0x3] %vm3138, %v3136
    // Predicated region
    $region58: #{tpu_custom_call.1} parent=1 // pred_check
      _
    $region59: #{tpu_custom_call.1} parent=1 // pred_check_branch
      %3148 = sbr.rel (0) target = $region61
    $region60: #{tpu_custom_call.1} parent=1 // pred_region
      %s3150 = ssub.s32 512, 512
      %3151 = vsyncadd [#allocation4], %s3150
      %s3152 = sshll.u32 [#allocation3], 4
      %s3153 = int_to_ptr.vmem [resolvable:$true] %s3152
      %3158 = dma.vmem_to_hbm [thread:$0]  %s3153, 512, %s14, [#allocation4], 64, 64, 4
    $region61: #{tpu_custom_call.1} parent=1 // pred_fallthru
      _
    // Predicated region
    $region62: #{tpu_custom_call.1} parent=1 // pred_check
      _
    $region63: #{tpu_custom_call.1} parent=1 // pred_check_branch
      %3160 = sbr.rel (0) target = $region65
    $region64: #{tpu_custom_call.1} parent=1 // pred_region
      %3161 = dma.done [#allocation4], 512
    $region65: #{tpu_custom_call.1} parent=1 // pred_fallthru
      _
    %3162 = vsyncpa [#allocation4], 1

</llo_original>
